<compile_context>
chip_gen: v5e
topology: v5e:2x2
jax: 0.10.0
libtpu: 0.0.40
codegen_flags: <defaults>
</compile_context>

<pallas_src>
import jax
import jax.numpy as jnp
from jax.experimental import pallas as pl
from jax.experimental.pallas import tpu as pltpu


def _make_kernel(bB, C, Ci):
    R_h = 2 * Ci + C + 1 + 3 * C      # [wq; whk; Wz_h@whv; ones-row; wmhi; wmhg; wmho]
    R_m = Ci + C + 1                  # [wmk; Wz_m@wmv; ones-row]
    bf16 = jnp.bfloat16
    f32 = jnp.float32

    def kernel(w_ref, ht_ref, mt_ref, ht_out_ref, mt_out_ref):
        dot = lambda a, b: jnp.dot(a, b, preferred_element_type=f32)

        Wall = w_ref[...]                                     # (R_h + R_m + 3C, C+1)
        Wh, bh = Wall[:R_h, :C], Wall[:R_h, C:]               # (R_h, C), (R_h, 1)
        Wm, bm = Wall[R_h:R_h + R_m, :C], Wall[R_h:R_h + R_m, C:]
        Wgz = Wall[R_h + R_m:, :C]                            # (3C, C): [Wmzi; Wmzg; Wmzo]

        for b in range(bB):                                   # static, tiny batch block
            xh = ht_ref[b]                                    # (C, N)
            xm = mt_ref[b]                                    # (C, N)

            # One stacked 1x1-conv matmul per input; biases ride a broadcast column.
            Hall = dot(Wh, xh) + bh                           # (R_h, N)
            Mall = dot(Wm, xm) + bm                           # (R_m, N)

            Q   = Hall[0:Ci, :]                               # (Ci, N)
            Kh  = Hall[Ci:2 * Ci, :]                          # (Ci, N)
            VhA = Hall[2 * Ci:2 * Ci + C + 1, :]              # (C+1, N): Wz_h-folded V + ones
            Gh  = Hall[2 * Ci + C + 1:, :]                    # (3C, N): gate-h, biases folded

            Km  = Mall[0:Ci, :]                               # (Ci, N)
            VmA = Mall[Ci:, :]                                # (C+1, N)

            def attend(K, VA):
                # St[q, p] = sum_c K[c, q] * Q[c, p]; softmax over q == axis 0.
                St = dot(K.T, Q)                              # (N, N) f32
                mx = jnp.max(St, axis=0, keepdims=True)       # (1, N)
                P = jnp.exp(St - mx).astype(bf16)             # unnormalized weights, bf16
                # The ones row of VA yields the column sums from the SAME MXU matmul
                # (f32 accumulation), so no separate sublane reduction is needed.
                ZA = dot(VA.astype(bf16), P)                  # (C+1, N)
                rs = ZA[C:C + 1, :]                           # (1, N) softmax denominators
                return ZA[:C, :] * pl.reciprocal(rs, approx=True)

            # Wz already folded into VhA/VmA -> this IS Wz@[Zh;Zm] (bz lives in Gh).
            Z = attend(Kh, VhA) + attend(Km, VmA)             # (C, N)

            pre = dot(Wgz, Z) + Gh                            # (3C, N) gate pre-activations
            it = jax.nn.sigmoid(pre[0:C, :])
            gt = jnp.tanh(pre[C:2 * C, :])
            ot = jax.nn.sigmoid(pre[2 * C:, :])
            Mt = (1.0 - it) * xm + it * gt
            Ht = ot * Mt

            ht_out_ref[b] = Ht.astype(ht_out_ref.dtype)
            mt_out_ref[b] = Mt.astype(mt_out_ref.dtype)

    return kernel


def prepare_params(params):
    """Fold/stack all SelfAttentionMemory weights ONCE into a single packed array.

    Row layout of the returned (3*Ci + 8*C + 2, C+1) array (last column = bias):
      [wq; whk; Wz_h@whv; 0|1; wmhi; wmhg; wmho | gate biases folded]    (R_h rows)
      [wmk; Wz_m@wmv; 0|1]                                               (R_m rows)
      [wmzi; wmzg; wmzo | 0]                                             (3C rows)
    Reuse the result across all timesteps of a ConvLSTM sequence.
    """
    C = params['whv'].shape[0]
    dt = params['whv'].dtype
    wz_h, wz_m, bz = params['wz'][:, :C], params['wz'][:, C:], params['bz']

    row = lambda w, b: jnp.concatenate([w, b[:, None]], axis=1)            # (r, C+1)
    ones_row = jnp.concatenate([jnp.zeros((1, C), dt), jnp.ones((1, 1), dt)], axis=1)
    gbias = lambda wmz, bmz, bmh: wmz @ bz + bmz + bmh                     # Wmz@bz+bmz+bmh

    packed = jnp.concatenate([
        row(params['wq'],  params['bq']),
        row(params['whk'], params['bhk']),
        row(wz_h @ params['whv'], wz_h @ params['bhv']),                   # Wz_h folded
        ones_row,                                                          # -> ones row of VhA
        row(params['wmhi'], gbias(params['wmzi'], params['bmzi'], params['bmhi'])),
        row(params['wmhg'], gbias(params['wmzg'], params['bmzg'], params['bmhg'])),
        row(params['wmho'], gbias(params['wmzo'], params['bmzo'], params['bmho'])),
        row(params['wmk'], params['bmk']),
        row(wz_m @ params['wmv'], wz_m @ params['bmv']),                   # Wz_m folded
        ones_row,                                                          # -> ones row of VmA
        row(params['wmzi'], jnp.zeros((C,), dt)),
        row(params['wmzg'], jnp.zeros((C,), dt)),
        row(params['wmzo'], jnp.zeros((C,), dt)),
    ], axis=0)
    return packed


def self_attention_memory_step(ht3, mt3, w_packed, *, block_batch=None):
    """One SA-memory step on (B, C, N) slabs (free reshapes of NCHW).

    block_batch=None (=B) -> grid=(1,): best on single-TC v5e/v6e.
    block_batch=1          -> grid=(B,) "parallel": feeds both v7x TensorCores.
    """
    B, C, N = ht3.shape
    RT, Ca = w_packed.shape
    assert Ca == C + 1, "packed weights do not match channel count"
    Ci = (RT - 8 * C - 2) // 3
    assert 3 * Ci + 8 * C + 2 == RT, "packed weight shape inconsistent"
    bB = B if block_batch is None else block_batch
    assert B % bB == 0

    bspec = pl.BlockSpec((bB, C, N), lambda i: (i, 0, 0))
    return pl.pallas_call(
        _make_kernel(bB, C, Ci),
        out_shape=(jax.ShapeDtypeStruct((B, C, N), ht3.dtype),
                   jax.ShapeDtypeStruct((B, C, N), ht3.dtype)),
        grid=(B // bB,),
        in_specs=[pl.BlockSpec((RT, C + 1), lambda i: (0, 0)), bspec, bspec],
        out_specs=(bspec, bspec),
        compiler_params=pltpu.CompilerParams(
            dimension_semantics=("parallel",)),
    )(w_packed, ht3, mt3)


def self_attention_memory(ht, mt, w_packed, *, block_batch=None):
    """NCHW convenience wrapper; the reshapes are free (no data movement)."""
    B, C, H, W = ht.shape
    Ht3, Mt3 = self_attention_memory_step(ht.reshape(B, C, H * W),
                                          mt.reshape(B, C, H * W),
                                          w_packed, block_batch=block_batch)
    return Ht3.reshape(B, C, H, W), Mt3.reshape(B, C, H, W)


def ref_forward(ht, mt, p):
    """Pure-JAX f32 reference replicating the PyTorch forward exactly."""
    B, C, H, W = ht.shape
    N = H * W
    htf, mtf = ht.reshape(B, C, N), mt.reshape(B, C, N)
    conv = lambda w, b, x: jnp.einsum('oc,bcn->bon', w, x) + b[None, :, None]

    Q  = conv(p['wq'],  p['bq'],  htf)
    Kh = conv(p['whk'], p['bhk'], htf)
    Vh = conv(p['whv'], p['bhv'], htf)
    Km = conv(p['wmk'], p['bmk'], mtf)
    Vm = conv(p['wmv'], p['bmv'], mtf)
    Ah = jax.nn.softmax(jnp.einsum('bcp,bcq->bpq', Q, Kh), axis=-1)
    Am = jax.nn.softmax(jnp.einsum('bcp,bcq->bpq', Q, Km), axis=-1)
    Zh = jnp.einsum('bcq,bpq->bcp', Vh, Ah)
    Zm = jnp.einsum('bcq,bpq->bcp', Vm, Am)
    Z = (jnp.einsum('oc,bcn->bon', p['wz'][:, :C], Zh)
         + jnp.einsum('oc,bcn->bon', p['wz'][:, C:], Zm)
         + p['bz'][None, :, None])
    it = jax.nn.sigmoid(conv(p['wmzi'], p['bmzi'], Z) + conv(p['wmhi'], p['bmhi'], htf))
    gt = jnp.tanh(conv(p['wmzg'], p['bmzg'], Z) + conv(p['wmhg'], p['bmhg'], htf))
    Mt = (1.0 - it) * mtf + it * gt
    ot = jax.nn.sigmoid(conv(p['wmzo'], p['bmzo'], Z) + conv(p['wmho'], p['bmho'], htf))
    Ht = ot * Mt
    return Ht.reshape(B, C, H, W), Mt.reshape(B, C, H, W)


if __name__ == "__main__":
    B, C, H, W = 2, 4, 16, 16     # input_channels=4
    Ci = 2                        # inter_channels=2

    key = jax.random.PRNGKey(0)
    ks = iter(jax.random.split(key, 32))
    nrm = lambda shape, s: s * jax.random.normal(next(ks), shape, jnp.float32)

    ht = nrm((B, C, H, W), 1.0)
    mt = nrm((B, C, H, W), 1.0)

    params = {
        'wq':  nrm((Ci, C), 0.3), 'bq':  nrm((Ci,), 0.1),
        'whk': nrm((Ci, C), 0.3), 'bhk': nrm((Ci,), 0.1),
        'wmk': nrm((Ci, C), 0.3), 'bmk': nrm((Ci,), 0.1),
        'whv': nrm((C, C), 0.3),  'bhv': nrm((C,), 0.1),
        'wmv': nrm((C, C), 0.3),  'bmv': nrm((C,), 0.1),
        'wz':  nrm((C, 2 * C), 0.3), 'bz': nrm((C,), 0.1),
        'wmzi': nrm((C, C), 0.3), 'bmzi': nrm((C,), 0.1),
        'wmhi': nrm((C, C), 0.3), 'bmhi': nrm((C,), 0.1),
        'wmzg': nrm((C, C), 0.3), 'bmzg': nrm((C,), 0.1),
        'wmhg': nrm((C, C), 0.3), 'bmhg': nrm((C,), 0.1),
        'wmzo': nrm((C, C), 0.3), 'bmzo': nrm((C,), 0.1),
        'wmho': nrm((C, C), 0.3), 'bmho': nrm((C,), 0.1),
    }

    # Weight folding/stacking is hoisted: done once, reused for every timestep.
    w_packed = prepare_params(params)

    fwd = jax.jit(self_attention_memory)
    Ht, Mt = fwd(ht, mt, w_packed)
    jax.block_until_ready((Ht, Mt))

    Ht_r, Mt_r = ref_forward(ht, mt, params)
    # bf16 attention weights/V in the MXU + approx-reciprocal softmax denominator give a
    # small numeric drift (f32 accumulation and max-subtraction retained), so compare
    # with a loose tolerance.
    assert jnp.allclose(Ht, Ht_r, atol=3e-2, rtol=3e-2), float(jnp.max(jnp.abs(Ht - Ht_r)))
    assert jnp.allclose(Mt, Mt_r, atol=3e-2, rtol=3e-2), float(jnp.max(jnp.abs(Mt - Mt_r)))
    print("KERNEL_OK")
</pallas_src>

<mosaic_0001>
module attributes {stable_mosaic.version = 11 : i64} {
  func.func @kernel(%arg0: i32, %arg1: memref<40x5xf32, #tpu.memory_space<vmem>>, %arg2: memref<2x4x256xf32, #tpu.memory_space<vmem>>, %arg3: memref<2x4x256xf32, #tpu.memory_space<vmem>>, %arg4: memref<2x4x256xf32, #tpu.memory_space<vmem>>, %arg5: memref<2x4x256xf32, #tpu.memory_space<vmem>>) attributes {dimension_semantics = [#tpu.dimension_semantics<parallel>], iteration_bounds = array<i64: 1>, scalar_prefetch = 0 : i64, scratch_operands = 0 : i64, tpu.core_type = #tpu.core_type<tc>, window_params = [{pipeline_mode = #tpu.pipeline_mode<synchronous>, transform_indices = @transform_0, window_bounds = array<i64: 40, 5>}, {transform_indices = @transform_1, window_bounds = array<i64: 2, 4, 256>}, {transform_indices = @transform_2, window_bounds = array<i64: 2, 4, 256>}, {transform_indices = @transform_3, window_bounds = array<i64: 2, 4, 256>}, {transform_indices = @transform_4, window_bounds = array<i64: 2, 4, 256>}]} {
    %c0 = arith.constant 0 : index
    %c0_0 = arith.constant 0 : index
    %0 = vector.load %arg1[%c0, %c0_0] : memref<40x5xf32, #tpu.memory_space<vmem>>, vector<40x5xf32>
    %1 = vector.extract_strided_slice %0 {offsets = [0, 0], sizes = [21, 4], strides = [1, 1]} : vector<40x5xf32> to vector<21x4xf32>
    %2 = vector.extract_strided_slice %0 {offsets = [0, 4], sizes = [21, 1], strides = [1, 1]} : vector<40x5xf32> to vector<21x1xf32>
    %3 = vector.extract_strided_slice %0 {offsets = [21, 0], sizes = [7, 4], strides = [1, 1]} : vector<40x5xf32> to vector<7x4xf32>
    %4 = vector.extract_strided_slice %0 {offsets = [21, 4], sizes = [7, 1], strides = [1, 1]} : vector<40x5xf32> to vector<7x1xf32>
    %5 = vector.extract_strided_slice %0 {offsets = [28, 0], sizes = [12, 4], strides = [1, 1]} : vector<40x5xf32> to vector<12x4xf32>
    %c0_1 = arith.constant 0 : index
    %c0_2 = arith.constant 0 : index
    %c0_3 = arith.constant 0 : index
    %6 = vector.load %arg2[%c0_1, %c0_2, %c0_3] : memref<2x4x256xf32, #tpu.memory_space<vmem>>, vector<1x4x256xf32>
    %7 = vector.shape_cast %6 : vector<1x4x256xf32> to vector<4x256xf32>
    %c0_4 = arith.constant 0 : index
    %c0_5 = arith.constant 0 : index
    %c0_6 = arith.constant 0 : index
    %8 = vector.load %arg3[%c0_4, %c0_5, %c0_6] : memref<2x4x256xf32, #tpu.memory_space<vmem>>, vector<1x4x256xf32>
    %9 = vector.shape_cast %8 : vector<1x4x256xf32> to vector<4x256xf32>
    %cst = arith.constant dense<0.000000e+00> : vector<21x256xf32>
    %10 = tpu.matmul %1, %7, %cst {dimension_numbers = #tpu.dot_dimension_numbers<[1], [0], [0], [1], [0, 0, 1, 1], [], []>} : vector<21x4xf32>, vector<4x256xf32>, vector<21x256xf32> -> vector<21x256xf32>
    %11 = vector.broadcast %2 : vector<21x1xf32> to vector<21x256xf32>
    %12 = arith.addf %10, %11 : vector<21x256xf32>
    %cst_7 = arith.constant dense<0.000000e+00> : vector<7x256xf32>
    %13 = tpu.matmul %3, %9, %cst_7 {dimension_numbers = #tpu.dot_dimension_numbers<[1], [0], [0], [1], [0, 0, 1, 1], [], []>} : vector<7x4xf32>, vector<4x256xf32>, vector<7x256xf32> -> vector<7x256xf32>
    %14 = vector.broadcast %4 : vector<7x1xf32> to vector<7x256xf32>
    %15 = arith.addf %13, %14 : vector<7x256xf32>
    %16 = vector.extract_strided_slice %12 {offsets = [0, 0], sizes = [2, 256], strides = [1, 1]} : vector<21x256xf32> to vector<2x256xf32>
    %17 = vector.extract_strided_slice %12 {offsets = [2, 0], sizes = [2, 256], strides = [1, 1]} : vector<21x256xf32> to vector<2x256xf32>
    %18 = vector.extract_strided_slice %12 {offsets = [4, 0], sizes = [5, 256], strides = [1, 1]} : vector<21x256xf32> to vector<5x256xf32>
    %19 = vector.extract_strided_slice %12 {offsets = [9, 0], sizes = [12, 256], strides = [1, 1]} : vector<21x256xf32> to vector<12x256xf32>
    %20 = vector.extract_strided_slice %15 {offsets = [0, 0], sizes = [2, 256], strides = [1, 1]} : vector<7x256xf32> to vector<2x256xf32>
    %21 = vector.extract_strided_slice %15 {offsets = [2, 0], sizes = [5, 256], strides = [1, 1]} : vector<7x256xf32> to vector<5x256xf32>
    %22 = tpu.transpose %17, [1, 0] : vector<2x256xf32> -> vector<256x2xf32>
    %cst_8 = arith.constant dense<0.000000e+00> : vector<256x256xf32>
    %23 = tpu.matmul %22, %16, %cst_8 {dimension_numbers = #tpu.dot_dimension_numbers<[1], [0], [0], [1], [0, 0, 1, 1], [], []>} : vector<256x2xf32>, vector<2x256xf32>, vector<256x256xf32> -> vector<256x256xf32>
    %cst_9 = arith.constant dense<0xFF800000> : vector<256xf32>
    %24 = vector.multi_reduction <maximumf>, %23, %cst_9 [0] : vector<256x256xf32> to vector<256xf32>
    %25 = vector.shape_cast %24 : vector<256xf32> to vector<1x256xf32>
    %26 = vector.broadcast %25 : vector<1x256xf32> to vector<256x256xf32>
    %27 = arith.subf %23, %26 : vector<256x256xf32>
    %28 = math.exp %27 : vector<256x256xf32>
    %29 = arith.truncf %28 : vector<256x256xf32> to vector<256x256xbf16>
    %30 = arith.truncf %18 : vector<5x256xf32> to vector<5x256xbf16>
    %cst_10 = arith.constant dense<0.000000e+00> : vector<5x256xf32>
    %31 = tpu.matmul %30, %29, %cst_10 {dimension_numbers = #tpu.dot_dimension_numbers<[1], [0], [0], [1], [0, 0, 1, 1], [], []>} : vector<5x256xbf16>, vector<256x256xbf16>, vector<5x256xf32> -> vector<5x256xf32>
    %32 = vector.extract_strided_slice %31 {offsets = [4, 0], sizes = [1, 256], strides = [1, 1]} : vector<5x256xf32> to vector<1x256xf32>
    %33 = vector.extract_strided_slice %31 {offsets = [0, 0], sizes = [4, 256], strides = [1, 1]} : vector<5x256xf32> to vector<4x256xf32>
    %34 = tpu.reciprocal %32 {approx = true} : vector<1x256xf32> -> vector<1x256xf32>
    %35 = vector.broadcast %34 : vector<1x256xf32> to vector<4x256xf32>
    %36 = arith.mulf %33, %35 : vector<4x256xf32>
    %37 = tpu.transpose %20, [1, 0] : vector<2x256xf32> -> vector<256x2xf32>
    %cst_11 = arith.constant dense<0.000000e+00> : vector<256x256xf32>
    %38 = tpu.matmul %37, %16, %cst_11 {dimension_numbers = #tpu.dot_dimension_numbers<[1], [0], [0], [1], [0, 0, 1, 1], [], []>} : vector<256x2xf32>, vector<2x256xf32>, vector<256x256xf32> -> vector<256x256xf32>
    %cst_12 = arith.constant dense<0xFF800000> : vector<256xf32>
    %39 = vector.multi_reduction <maximumf>, %38, %cst_12 [0] : vector<256x256xf32> to vector<256xf32>
    %40 = vector.shape_cast %39 : vector<256xf32> to vector<1x256xf32>
    %41 = vector.broadcast %40 : vector<1x256xf32> to vector<256x256xf32>
    %42 = arith.subf %38, %41 : vector<256x256xf32>
    %43 = math.exp %42 : vector<256x256xf32>
    %44 = arith.truncf %43 : vector<256x256xf32> to vector<256x256xbf16>
    %45 = arith.truncf %21 : vector<5x256xf32> to vector<5x256xbf16>
    %cst_13 = arith.constant dense<0.000000e+00> : vector<5x256xf32>
    %46 = tpu.matmul %45, %44, %cst_13 {dimension_numbers = #tpu.dot_dimension_numbers<[1], [0], [0], [1], [0, 0, 1, 1], [], []>} : vector<5x256xbf16>, vector<256x256xbf16>, vector<5x256xf32> -> vector<5x256xf32>
    %47 = vector.extract_strided_slice %46 {offsets = [4, 0], sizes = [1, 256], strides = [1, 1]} : vector<5x256xf32> to vector<1x256xf32>
    %48 = vector.extract_strided_slice %46 {offsets = [0, 0], sizes = [4, 256], strides = [1, 1]} : vector<5x256xf32> to vector<4x256xf32>
    %49 = tpu.reciprocal %47 {approx = true} : vector<1x256xf32> -> vector<1x256xf32>
    %50 = vector.broadcast %49 : vector<1x256xf32> to vector<4x256xf32>
    %51 = arith.mulf %48, %50 : vector<4x256xf32>
    %52 = arith.addf %36, %51 : vector<4x256xf32>
    %cst_14 = arith.constant dense<0.000000e+00> : vector<12x256xf32>
    %53 = tpu.matmul %5, %52, %cst_14 {dimension_numbers = #tpu.dot_dimension_numbers<[1], [0], [0], [1], [0, 0, 1, 1], [], []>} : vector<12x4xf32>, vector<4x256xf32>, vector<12x256xf32> -> vector<12x256xf32>
    %54 = arith.addf %53, %19 : vector<12x256xf32>
    %55 = vector.extract_strided_slice %54 {offsets = [0, 0], sizes = [4, 256], strides = [1, 1]} : vector<12x256xf32> to vector<4x256xf32>
    %56 = arith.negf %55 : vector<4x256xf32>
    %57 = math.exp %56 : vector<4x256xf32>
    %cst_15 = arith.constant 1.000000e+00 : f32
    %58 = vector.broadcast %cst_15 : f32 to vector<4x256xf32>
    %59 = arith.addf %58, %57 : vector<4x256xf32>
    %60 = arith.divf %58, %59 : vector<4x256xf32>
    %61 = vector.extract_strided_slice %54 {offsets = [4, 0], sizes = [4, 256], strides = [1, 1]} : vector<12x256xf32> to vector<4x256xf32>
    %62 = math.tanh %61 : vector<4x256xf32>
    %63 = vector.extract_strided_slice %54 {offsets = [8, 0], sizes = [4, 256], strides = [1, 1]} : vector<12x256xf32> to vector<4x256xf32>
    %64 = arith.negf %63 : vector<4x256xf32>
    %65 = math.exp %64 : vector<4x256xf32>
    %cst_16 = arith.constant 1.000000e+00 : f32
    %66 = vector.broadcast %cst_16 : f32 to vector<4x256xf32>
    %67 = arith.addf %66, %65 : vector<4x256xf32>
    %68 = arith.divf %66, %67 : vector<4x256xf32>
    %cst_17 = arith.constant 1.000000e+00 : f32
    %69 = vector.broadcast %cst_17 : f32 to vector<4x256xf32>
    %70 = arith.subf %69, %60 : vector<4x256xf32>
    %71 = arith.mulf %70, %9 : vector<4x256xf32>
    %72 = arith.mulf %60, %62 : vector<4x256xf32>
    %73 = arith.addf %71, %72 : vector<4x256xf32>
    %74 = arith.mulf %68, %73 : vector<4x256xf32>
    %c0_18 = arith.constant 0 : index
    %c0_19 = arith.constant 0 : index
    %c0_20 = arith.constant 0 : index
    %75 = vector.load %arg4[%c0_18, %c0_19, %c0_20] : memref<2x4x256xf32, #tpu.memory_space<vmem>>, vector<1x4x256xf32>
    %76 = vector.shape_cast %75 : vector<1x4x256xf32> to vector<4x256xf32>
    %77 = vector.shape_cast %74 : vector<4x256xf32> to vector<1x4x256xf32>
    tpu.vector_store %arg4[%c0_18, %c0_19, %c0_20], %77 {strides = array<i32>} : memref<2x4x256xf32, #tpu.memory_space<vmem>>, vector<1x4x256xf32>,
    %c0_21 = arith.constant 0 : index
    %c0_22 = arith.constant 0 : index
    %c0_23 = arith.constant 0 : index
    %78 = vector.load %arg5[%c0_21, %c0_22, %c0_23] : memref<2x4x256xf32, #tpu.memory_space<vmem>>, vector<1x4x256xf32>
    %79 = vector.shape_cast %78 : vector<1x4x256xf32> to vector<4x256xf32>
    %80 = vector.shape_cast %73 : vector<4x256xf32> to vector<1x4x256xf32>
    tpu.vector_store %arg5[%c0_21, %c0_22, %c0_23], %80 {strides = array<i32>} : memref<2x4x256xf32, #tpu.memory_space<vmem>>, vector<1x4x256xf32>,
    %c1 = arith.constant 1 : index
    %c0_24 = arith.constant 0 : index
    %c0_25 = arith.constant 0 : index
    %81 = vector.load %arg2[%c1, %c0_24, %c0_25] : memref<2x4x256xf32, #tpu.memory_space<vmem>>, vector<1x4x256xf32>
    %82 = vector.shape_cast %81 : vector<1x4x256xf32> to vector<4x256xf32>
    %c1_26 = arith.constant 1 : index
    %c0_27 = arith.constant 0 : index
    %c0_28 = arith.constant 0 : index
    %83 = vector.load %arg3[%c1_26, %c0_27, %c0_28] : memref<2x4x256xf32, #tpu.memory_space<vmem>>, vector<1x4x256xf32>
    %84 = vector.shape_cast %83 : vector<1x4x256xf32> to vector<4x256xf32>
    %cst_29 = arith.constant dense<0.000000e+00> : vector<21x256xf32>
    %85 = tpu.matmul %1, %82, %cst_29 {dimension_numbers = #tpu.dot_dimension_numbers<[1], [0], [0], [1], [0, 0, 1, 1], [], []>} : vector<21x4xf32>, vector<4x256xf32>, vector<21x256xf32> -> vector<21x256xf32>
    %86 = vector.broadcast %2 : vector<21x1xf32> to vector<21x256xf32>
    %87 = arith.addf %85, %86 : vector<21x256xf32>
    %cst_30 = arith.constant dense<0.000000e+00> : vector<7x256xf32>
    %88 = tpu.matmul %3, %84, %cst_30 {dimension_numbers = #tpu.dot_dimension_numbers<[1], [0], [0], [1], [0, 0, 1, 1], [], []>} : vector<7x4xf32>, vector<4x256xf32>, vector<7x256xf32> -> vector<7x256xf32>
    %89 = vector.broadcast %4 : vector<7x1xf32> to vector<7x256xf32>
    %90 = arith.addf %88, %89 : vector<7x256xf32>
    %91 = vector.extract_strided_slice %87 {offsets = [0, 0], sizes = [2, 256], strides = [1, 1]} : vector<21x256xf32> to vector<2x256xf32>
    %92 = vector.extract_strided_slice %87 {offsets = [2, 0], sizes = [2, 256], strides = [1, 1]} : vector<21x256xf32> to vector<2x256xf32>
    %93 = vector.extract_strided_slice %87 {offsets = [4, 0], sizes = [5, 256], strides = [1, 1]} : vector<21x256xf32> to vector<5x256xf32>
    %94 = vector.extract_strided_slice %87 {offsets = [9, 0], sizes = [12, 256], strides = [1, 1]} : vector<21x256xf32> to vector<12x256xf32>
    %95 = vector.extract_strided_slice %90 {offsets = [0, 0], sizes = [2, 256], strides = [1, 1]} : vector<7x256xf32> to vector<2x256xf32>
    %96 = vector.extract_strided_slice %90 {offsets = [2, 0], sizes = [5, 256], strides = [1, 1]} : vector<7x256xf32> to vector<5x256xf32>
    %97 = tpu.transpose %92, [1, 0] : vector<2x256xf32> -> vector<256x2xf32>
    %cst_31 = arith.constant dense<0.000000e+00> : vector<256x256xf32>
    %98 = tpu.matmul %97, %91, %cst_31 {dimension_numbers = #tpu.dot_dimension_numbers<[1], [0], [0], [1], [0, 0, 1, 1], [], []>} : vector<256x2xf32>, vector<2x256xf32>, vector<256x256xf32> -> vector<256x256xf32>
    %cst_32 = arith.constant dense<0xFF800000> : vector<256xf32>
    %99 = vector.multi_reduction <maximumf>, %98, %cst_32 [0] : vector<256x256xf32> to vector<256xf32>
    %100 = vector.shape_cast %99 : vector<256xf32> to vector<1x256xf32>
    %101 = vector.broadcast %100 : vector<1x256xf32> to vector<256x256xf32>
    %102 = arith.subf %98, %101 : vector<256x256xf32>
    %103 = math.exp %102 : vector<256x256xf32>
    %104 = arith.truncf %103 : vector<256x256xf32> to vector<256x256xbf16>
    %105 = arith.truncf %93 : vector<5x256xf32> to vector<5x256xbf16>
    %cst_33 = arith.constant dense<0.000000e+00> : vector<5x256xf32>
    %106 = tpu.matmul %105, %104, %cst_33 {dimension_numbers = #tpu.dot_dimension_numbers<[1], [0], [0], [1], [0, 0, 1, 1], [], []>} : vector<5x256xbf16>, vector<256x256xbf16>, vector<5x256xf32> -> vector<5x256xf32>
    %107 = vector.extract_strided_slice %106 {offsets = [4, 0], sizes = [1, 256], strides = [1, 1]} : vector<5x256xf32> to vector<1x256xf32>
    %108 = vector.extract_strided_slice %106 {offsets = [0, 0], sizes = [4, 256], strides = [1, 1]} : vector<5x256xf32> to vector<4x256xf32>
    %109 = tpu.reciprocal %107 {approx = true} : vector<1x256xf32> -> vector<1x256xf32>
    %110 = vector.broadcast %109 : vector<1x256xf32> to vector<4x256xf32>
    %111 = arith.mulf %108, %110 : vector<4x256xf32>
    %112 = tpu.transpose %95, [1, 0] : vector<2x256xf32> -> vector<256x2xf32>
    %cst_34 = arith.constant dense<0.000000e+00> : vector<256x256xf32>
    %113 = tpu.matmul %112, %91, %cst_34 {dimension_numbers = #tpu.dot_dimension_numbers<[1], [0], [0], [1], [0, 0, 1, 1], [], []>} : vector<256x2xf32>, vector<2x256xf32>, vector<256x256xf32> -> vector<256x256xf32>
    %cst_35 = arith.constant dense<0xFF800000> : vector<256xf32>
    %114 = vector.multi_reduction <maximumf>, %113, %cst_35 [0] : vector<256x256xf32> to vector<256xf32>
    %115 = vector.shape_cast %114 : vector<256xf32> to vector<1x256xf32>
    %116 = vector.broadcast %115 : vector<1x256xf32> to vector<256x256xf32>
    %117 = arith.subf %113, %116 : vector<256x256xf32>
    %118 = math.exp %117 : vector<256x256xf32>
    %119 = arith.truncf %118 : vector<256x256xf32> to vector<256x256xbf16>
    %120 = arith.truncf %96 : vector<5x256xf32> to vector<5x256xbf16>
    %cst_36 = arith.constant dense<0.000000e+00> : vector<5x256xf32>
    %121 = tpu.matmul %120, %119, %cst_36 {dimension_numbers = #tpu.dot_dimension_numbers<[1], [0], [0], [1], [0, 0, 1, 1], [], []>} : vector<5x256xbf16>, vector<256x256xbf16>, vector<5x256xf32> -> vector<5x256xf32>
    %122 = vector.extract_strided_slice %121 {offsets = [4, 0], sizes = [1, 256], strides = [1, 1]} : vector<5x256xf32> to vector<1x256xf32>
    %123 = vector.extract_strided_slice %121 {offsets = [0, 0], sizes = [4, 256], strides = [1, 1]} : vector<5x256xf32> to vector<4x256xf32>
    %124 = tpu.reciprocal %122 {approx = true} : vector<1x256xf32> -> vector<1x256xf32>
    %125 = vector.broadcast %124 : vector<1x256xf32> to vector<4x256xf32>
    %126 = arith.mulf %123, %125 : vector<4x256xf32>
    %127 = arith.addf %111, %126 : vector<4x256xf32>
    %cst_37 = arith.constant dense<0.000000e+00> : vector<12x256xf32>
    %128 = tpu.matmul %5, %127, %cst_37 {dimension_numbers = #tpu.dot_dimension_numbers<[1], [0], [0], [1], [0, 0, 1, 1], [], []>} : vector<12x4xf32>, vector<4x256xf32>, vector<12x256xf32> -> vector<12x256xf32>
    %129 = arith.addf %128, %94 : vector<12x256xf32>
    %130 = vector.extract_strided_slice %129 {offsets = [0, 0], sizes = [4, 256], strides = [1, 1]} : vector<12x256xf32> to vector<4x256xf32>
    %131 = arith.negf %130 : vector<4x256xf32>
    %132 = math.exp %131 : vector<4x256xf32>
    %cst_38 = arith.constant 1.000000e+00 : f32
    %133 = vector.broadcast %cst_38 : f32 to vector<4x256xf32>
    %134 = arith.addf %133, %132 : vector<4x256xf32>
    %135 = arith.divf %133, %134 : vector<4x256xf32>
    %136 = vector.extract_strided_slice %129 {offsets = [4, 0], sizes = [4, 256], strides = [1, 1]} : vector<12x256xf32> to vector<4x256xf32>
    %137 = math.tanh %136 : vector<4x256xf32>
    %138 = vector.extract_strided_slice %129 {offsets = [8, 0], sizes = [4, 256], strides = [1, 1]} : vector<12x256xf32> to vector<4x256xf32>
    %139 = arith.negf %138 : vector<4x256xf32>
    %140 = math.exp %139 : vector<4x256xf32>
    %cst_39 = arith.constant 1.000000e+00 : f32
    %141 = vector.broadcast %cst_39 : f32 to vector<4x256xf32>
    %142 = arith.addf %141, %140 : vector<4x256xf32>
    %143 = arith.divf %141, %142 : vector<4x256xf32>
    %cst_40 = arith.constant 1.000000e+00 : f32
    %144 = vector.broadcast %cst_40 : f32 to vector<4x256xf32>
    %145 = arith.subf %144, %135 : vector<4x256xf32>
    %146 = arith.mulf %145, %84 : vector<4x256xf32>
    %147 = arith.mulf %135, %137 : vector<4x256xf32>
    %148 = arith.addf %146, %147 : vector<4x256xf32>
    %149 = arith.mulf %143, %148 : vector<4x256xf32>
    %c1_41 = arith.constant 1 : index
    %c0_42 = arith.constant 0 : index
    %c0_43 = arith.constant 0 : index
    %150 = vector.load %arg4[%c1_41, %c0_42, %c0_43] : memref<2x4x256xf32, #tpu.memory_space<vmem>>, vector<1x4x256xf32>
    %151 = vector.shape_cast %150 : vector<1x4x256xf32> to vector<4x256xf32>
    %152 = vector.shape_cast %149 : vector<4x256xf32> to vector<1x4x256xf32>
    tpu.vector_store %arg4[%c1_41, %c0_42, %c0_43], %152 {strides = array<i32>} : memref<2x4x256xf32, #tpu.memory_space<vmem>>, vector<1x4x256xf32>,
    %c1_44 = arith.constant 1 : index
    %c0_45 = arith.constant 0 : index
    %c0_46 = arith.constant 0 : index
    %153 = vector.load %arg5[%c1_44, %c0_45, %c0_46] : memref<2x4x256xf32, #tpu.memory_space<vmem>>, vector<1x4x256xf32>
    %154 = vector.shape_cast %153 : vector<1x4x256xf32> to vector<4x256xf32>
    %155 = vector.shape_cast %148 : vector<4x256xf32> to vector<1x4x256xf32>
    tpu.vector_store %arg5[%c1_44, %c0_45, %c0_46], %155 {strides = array<i32>} : memref<2x4x256xf32, #tpu.memory_space<vmem>>, vector<1x4x256xf32>,
    return
  }
  func.func @transform_0(%arg0: i32) -> (i32, i32) {
    %c0_i32 = arith.constant 0 : i32
    %c0_i32_0 = arith.constant 0 : i32
    %c0_i32_1 = arith.constant 0 : i32
    return %c0_i32, %c0_i32_0 : i32, i32
  }
  func.func @transform_1(%arg0: i32) -> (i32, i32, i32) {
    %c0_i32 = arith.constant 0 : i32
    %c0_i32_0 = arith.constant 0 : i32
    %c0_i32_1 = arith.constant 0 : i32
    return %arg0, %c0_i32, %c0_i32_0 : i32, i32, i32
  }
  func.func @transform_2(%arg0: i32) -> (i32, i32, i32) {
    %c0_i32 = arith.constant 0 : i32
    %c0_i32_0 = arith.constant 0 : i32
    %c0_i32_1 = arith.constant 0 : i32
    return %arg0, %c0_i32, %c0_i32_0 : i32, i32, i32
  }
  func.func @transform_3(%arg0: i32) -> (i32, i32, i32) {
    %c0_i32 = arith.constant 0 : i32
    %c0_i32_0 = arith.constant 0 : i32
    %c0_i32_1 = arith.constant 0 : i32
    return %arg0, %c0_i32, %c0_i32_0 : i32, i32, i32
  }
  func.func @transform_4(%arg0: i32) -> (i32, i32, i32) {
    %c0_i32 = arith.constant 0 : i32
    %c0_i32_0 = arith.constant 0 : i32
    %c0_i32_1 = arith.constant 0 : i32
    return %arg0, %c0_i32, %c0_i32_0 : i32, i32, i32
  }
}

</mosaic_0001>

<llo_original>
// kernel: self_attention_memory.1
$region0: #{self_attention_memory.1}
  #allocation0 [shape = 'u32[]', space=smem, size = 0x4, offset = 0x4, fixed_abs, tag = 'smem constant byte address 0x4 - core index']
  #allocation1 [shape = 'u32[72,128]{1,0:T(1,128)}', space=vmem, size = 0x9000, scoped, tag = 'internal scratch']
  %s0 = inlined_call_operand.vmem [shape: f32[40,5], index: 0, kind: input, shape index: {}]
  %s1 = inlined_call_operand.vmem [shape: f32[2,4,256], index: 1, kind: input, shape index: {}]
  %s2 = inlined_call_operand.vmem [shape: f32[2,4,256], index: 2, kind: input, shape index: {}]
  %s3 = inlined_call_operand.vmem [shape: f32[2,4,256], index: 3, kind: output, shape index: {0}]
  %s4 = inlined_call_operand.vmem [shape: f32[2,4,256], index: 4, kind: output, shape index: {1}]
  %5 = xla_tuple %s3, %s4
  %s6 = sld [smem:[#allocation0]]
  $region30: #{self_attention_memory.1} parent=0
    _
  %s8 = ssub.s32 1, %s6
  %s9 = scalar_select 0, %s8, %s6
  // Predicated region
  $region2: #{self_attention_memory.1} parent=0 // pred_check
    _
  $region3: #{self_attention_memory.1} parent=0 // pred_check_branch
    %11 = sbr.rel (0) target = $region5
  $region4: #{self_attention_memory.1} parent=0 // pred_region
    _
  $region5: #{self_attention_memory.1} parent=0 // pred_fallthru
    _
  // Predicated region
  $region6: #{self_attention_memory.1} parent=0 // pred_check
    _
  $region7: #{self_attention_memory.1} parent=0 // pred_check_branch
    %13 = sbr.rel (0) target = $region9
  $region8: #{self_attention_memory.1} parent=0 // pred_region
    _
  $region9: #{self_attention_memory.1} parent=0 // pred_fallthru
    _
  // Predicated region
  $region10: #{self_attention_memory.1} parent=0 // pred_check
    _
  $region11: #{self_attention_memory.1} parent=0 // pred_check_branch
    %15 = sbr.rel (0) target = $region13
  $region12: #{self_attention_memory.1} parent=0 // pred_region
    _
  $region13: #{self_attention_memory.1} parent=0 // pred_fallthru
    _
  %v16 = vld [vmem:[%s0] sm:$0xff]
  %v17 = vld [vmem:[%s0 + $0x8] sm:$0xff]
  %v18 = vld [vmem:[%s0 + $0x10] sm:$0xff]
  %v19 = vld [vmem:[%s0 + $0x18] sm:$0xff]
  %v20 = vld [vmem:[%s0 + $0x20] sm:$0xff]
  %v21 = vld [vmem:[%s1] sm:$0xff]
  %v22 = vld [vmem:[%s2] sm:$0xff]
  %24 = vset.pattern.permute.xlu0 4
  %25 = vperm.xlu0 %24, %v16
  %v26 = vpop.permute.xlu0 %25
  %29 = vset.pattern.permute.xlu0 4
  %30 = vperm.xlu0 %29, %v17
  %v31 = vpop.permute.xlu0 %30
  %34 = vset.pattern.permute.xlu0 4
  %35 = vperm.xlu0 %34, %v18
  %v36 = vpop.permute.xlu0 %35
  %39 = vst [vmem:[#allocation1] ss:$2 sm:$0xff] %v21
  %v40 = vld.sshfl [vmem:[#allocation1] sm:$0xff pattern:$0x75316420]
  %v41 = vld.sshfl [vmem:[#allocation1 + $0x8] sm:$0xff pattern:$0x75316420]
  %vm42 = vcmask 31744
  %v43 = vsel %vm42, %v16, 0
  %v45 = vsel %vm42, %v17, 0
  %v47 = vsel %vm42, %v18, 0
  %vm49 = vcmask 1043456
  %v50 = vsel %vm49, %v40, 0
  %v52 = vsel %vm49, %v41, 0
  %54 = vmatpush.msra.mxu0 0.0
  %55 = vmatpush.msra.mxu0 0.0
  %56 = vmatpush.msra.mxu0 0.0
  %57 = vmatpush.msra.mxu0 0.0
  %58 = vmatpush.msra.mxu0 0.0
  %59 = vmatpush.msra.mxu0 0.0
  %60 = vmatpush.msra.mxu0 0.0
  %61 = vmatpush.msra.mxu0 0.0
  %62 = vmatpush.msra.mxu0 0.0
  %63 = vmatpush.msra.mxu0 0.0
  %64 = vmatpush.msra.mxu0 0.0
  %65 = vmatpush.msra.mxu0 0.0
  %66 = vmatpush.msra.mxu0 0.0
  %67 = vmatpush.msra.mxu0 0.0
  %68 = vmatpush.msra.mxu0 0.0
  %69 = vmatpush.msra.mxu0 %v50
  %70 = vmatmul.f32.gmra.mxu0 %v43
  %v71 = vpop.f32.mrf.mxu0
  %v72 = vadd.f32 %v26, %v71
  %73 = vmatmul.f32.gmra.mxu0 %v45
  %v74 = vpop.f32.mrf.mxu0
  %v75 = vadd.f32 %v31, %v74
  %76 = vmatmul.f32.gmra.mxu0 %v47
  %v77 = vpop.f32.mrf.mxu0
  %v78 = vadd.f32 %v36, %v77
  %79 = vdwg.mxu0
  %80 = vmatpush.msra.mxu0 0.0
  %81 = vmatpush.msra.mxu0 0.0
  %82 = vmatpush.msra.mxu0 0.0
  %83 = vmatpush.msra.mxu0 0.0
  %84 = vmatpush.msra.mxu0 0.0
  %85 = vmatpush.msra.mxu0 0.0
  %86 = vmatpush.msra.mxu0 0.0
  %87 = vmatpush.msra.mxu0 0.0
  %88 = vmatpush.msra.mxu0 0.0
  %89 = vmatpush.msra.mxu0 0.0
  %90 = vmatpush.msra.mxu0 0.0
  %91 = vmatpush.msra.mxu0 0.0
  %92 = vmatpush.msra.mxu0 0.0
  %93 = vmatpush.msra.mxu0 0.0
  %94 = vmatpush.msra.mxu0 0.0
  %95 = vmatpush.msra.mxu0 %v52
  %96 = vmatmul.f32.gmra.mxu0 %v43
  %v97 = vpop.f32.mrf.mxu0
  %v98 = vadd.f32 %v26, %v97
  %99 = vmatmul.f32.gmra.mxu0 %v45
  %v100 = vpop.f32.mrf.mxu0
  %v101 = vadd.f32 %v31, %v100
  %102 = vmatmul.f32.gmra.mxu0 %v47
  %v103 = vpop.f32.mrf.mxu0
  %v104 = vadd.f32 %v36, %v103
  %105 = vdwg.mxu0
  %107 = vset.pattern.permute.xlu0 4
  %108 = vperm.xlu0 %107, %v19
  %v109 = vpop.permute.xlu0 %108
  %vm110 = vcmask 1042432
  %v111 = vrot.slane %v18, 5
  %v112 = vrot.slane %v19, 5
  %v113 = vsel %vm110, %v111, %v112
  %115 = vst [vmem:[#allocation1] ss:$2 sm:$0xff] %v22
  %v116 = vld.sshfl [vmem:[#allocation1] sm:$0xff pattern:$0x75316420]
  %v117 = vld.sshfl [vmem:[#allocation1 + $0x8] sm:$0xff pattern:$0x75316420]
  %v118 = vrot.slane %v36, 5
  %v119 = vrot.slane %v109, 5
  %v120 = vsel %vm110, %v118, %v119
  %v122 = vsel %vm42, %v113, 0
  %v124 = vsel %vm49, %v116, 0
  %v126 = vsel %vm49, %v117, 0
  %128 = vmatpush.msra.mxu0 0.0
  %129 = vmatpush.msra.mxu0 0.0
  %130 = vmatpush.msra.mxu0 0.0
  %131 = vmatpush.msra.mxu0 0.0
  %132 = vmatpush.msra.mxu0 0.0
  %133 = vmatpush.msra.mxu0 0.0
  %134 = vmatpush.msra.mxu0 0.0
  %135 = vmatpush.msra.mxu0 0.0
  %136 = vmatpush.msra.mxu0 0.0
  %137 = vmatpush.msra.mxu0 0.0
  %138 = vmatpush.msra.mxu0 0.0
  %139 = vmatpush.msra.mxu0 0.0
  %140 = vmatpush.msra.mxu0 0.0
  %141 = vmatpush.msra.mxu0 0.0
  %142 = vmatpush.msra.mxu0 0.0
  %143 = vmatpush.msra.mxu0 %v124
  %144 = vmatmul.f32.gmra.mxu0 %v122
  %v145 = vpop.f32.mrf.mxu0
  %v146 = vadd.f32 %v120, %v145
  %147 = vdwg.mxu0
  %148 = vmatpush.msra.mxu0 0.0
  %149 = vmatpush.msra.mxu0 0.0
  %150 = vmatpush.msra.mxu0 0.0
  %151 = vmatpush.msra.mxu0 0.0
  %152 = vmatpush.msra.mxu0 0.0
  %153 = vmatpush.msra.mxu0 0.0
  %154 = vmatpush.msra.mxu0 0.0
  %155 = vmatpush.msra.mxu0 0.0
  %156 = vmatpush.msra.mxu0 0.0
  %157 = vmatpush.msra.mxu0 0.0
  %158 = vmatpush.msra.mxu0 0.0
  %159 = vmatpush.msra.mxu0 0.0
  %160 = vmatpush.msra.mxu0 0.0
  %161 = vmatpush.msra.mxu0 0.0
  %162 = vmatpush.msra.mxu0 0.0
  %163 = vmatpush.msra.mxu0 %v126
  %164 = vmatmul.f32.gmra.mxu0 %v122
  %v165 = vpop.f32.mrf.mxu0
  %v166 = vadd.f32 %v120, %v165
  %167 = vdwg.mxu0
  %v170 = vrot.slane %v72, 2
  %v171 = vrot.slane %v98, 2
  %174 = vxpose.xlu0.b32.start [1/16] %v170, 128
  %175 = vxpose.xlu0.b32.cont [2/16] 0.0, 128
  %176 = vxpose.xlu0.b32.cont [3/16] 0.0, 128
  %177 = vxpose.xlu0.b32.cont [4/16] 0.0, 128
  %178 = vxpose.xlu0.b32.cont [5/16] 0.0, 128
  %179 = vxpose.xlu0.b32.cont [6/16] 0.0, 128
  %180 = vxpose.xlu0.b32.cont [7/16] 0.0, 128
  %181 = vxpose.xlu0.b32.cont [8/16] 0.0, 128
  %182 = vxpose.xlu0.b32.cont [9/16] 0.0, 128
  %183 = vxpose.xlu0.b32.cont [10/16] 0.0, 128
  %184 = vxpose.xlu0.b32.cont [11/16] 0.0, 128
  %185 = vxpose.xlu0.b32.cont [12/16] 0.0, 128
  %186 = vxpose.xlu0.b32.cont [13/16] 0.0, 128
  %187 = vxpose.xlu0.b32.cont [14/16] 0.0, 128
  %188 = vxpose.xlu0.b32.cont [15/16] 0.0, 128
  %189 = vxpose.xlu0.b32.end [16/16] 0.0, 128
  %v190 = vpop.trf.xlu0
  %v191 = vpop.trf.xlu0
  %v192 = vpop.trf.xlu0
  %v193 = vpop.trf.xlu0
  %v194 = vpop.trf.xlu0
  %v195 = vpop.trf.xlu0
  %v196 = vpop.trf.xlu0
  %v197 = vpop.trf.xlu0
  %v198 = vpop.trf.xlu0
  %v199 = vpop.trf.xlu0
  %v200 = vpop.trf.xlu0
  %v201 = vpop.trf.xlu0
  %v202 = vpop.trf.xlu0
  %v203 = vpop.trf.xlu0
  %v204 = vpop.trf.xlu0
  %v205 = vpop.trf.xlu0
  %206 = vxpose.xlu0.b32.start [1/16] %v171, 128
  %207 = vxpose.xlu0.b32.cont [2/16] 0.0, 128
  %208 = vxpose.xlu0.b32.cont [3/16] 0.0, 128
  %209 = vxpose.xlu0.b32.cont [4/16] 0.0, 128
  %210 = vxpose.xlu0.b32.cont [5/16] 0.0, 128
  %211 = vxpose.xlu0.b32.cont [6/16] 0.0, 128
  %212 = vxpose.xlu0.b32.cont [7/16] 0.0, 128
  %213 = vxpose.xlu0.b32.cont [8/16] 0.0, 128
  %214 = vxpose.xlu0.b32.cont [9/16] 0.0, 128
  %215 = vxpose.xlu0.b32.cont [10/16] 0.0, 128
  %216 = vxpose.xlu0.b32.cont [11/16] 0.0, 128
  %217 = vxpose.xlu0.b32.cont [12/16] 0.0, 128
  %218 = vxpose.xlu0.b32.cont [13/16] 0.0, 128
  %219 = vxpose.xlu0.b32.cont [14/16] 0.0, 128
  %220 = vxpose.xlu0.b32.cont [15/16] 0.0, 128
  %221 = vxpose.xlu0.b32.end [16/16] 0.0, 128
  %v222 = vpop.trf.xlu0
  %v223 = vpop.trf.xlu0
  %v224 = vpop.trf.xlu0
  %v225 = vpop.trf.xlu0
  %v226 = vpop.trf.xlu0
  %v227 = vpop.trf.xlu0
  %v228 = vpop.trf.xlu0
  %v229 = vpop.trf.xlu0
  %v230 = vpop.trf.xlu0
  %v231 = vpop.trf.xlu0
  %v232 = vpop.trf.xlu0
  %v233 = vpop.trf.xlu0
  %v234 = vpop.trf.xlu0
  %v235 = vpop.trf.xlu0
  %v236 = vpop.trf.xlu0
  %v237 = vpop.trf.xlu0
  %vm238 = vcmask 15360
  %v240 = vsel %vm238, %v190, 0
  %v243 = vsel %vm238, %v191, 0
  %v246 = vsel %vm238, %v192, 0
  %v249 = vsel %vm238, %v193, 0
  %v252 = vsel %vm238, %v194, 0
  %v255 = vsel %vm238, %v195, 0
  %v258 = vsel %vm238, %v196, 0
  %v261 = vsel %vm238, %v197, 0
  %v264 = vsel %vm238, %v198, 0
  %v267 = vsel %vm238, %v199, 0
  %v270 = vsel %vm238, %v200, 0
  %v273 = vsel %vm238, %v201, 0
  %v276 = vsel %vm238, %v202, 0
  %v279 = vsel %vm238, %v203, 0
  %v282 = vsel %vm238, %v204, 0
  %v285 = vsel %vm238, %v205, 0
  %v288 = vsel %vm238, %v222, 0
  %v291 = vsel %vm238, %v223, 0
  %v294 = vsel %vm238, %v224, 0
  %v297 = vsel %vm238, %v225, 0
  %v300 = vsel %vm238, %v226, 0
  %v303 = vsel %vm238, %v227, 0
  %v306 = vsel %vm238, %v228, 0
  %v309 = vsel %vm238, %v229, 0
  %v312 = vsel %vm238, %v230, 0
  %v315 = vsel %vm238, %v231, 0
  %v318 = vsel %vm238, %v232, 0
  %v321 = vsel %vm238, %v233, 0
  %v324 = vsel %vm238, %v234, 0
  %v327 = vsel %vm238, %v235, 0
  %v330 = vsel %vm238, %v236, 0
  %v333 = vsel %vm238, %v237, 0
  %vm335 = vcmask 1041408
  %v336 = vsel %vm335, %v72, 0
  %v338 = vsel %vm335, %v98, 0
  %340 = vmatpush.msra.mxu0 0.0
  %341 = vmatpush.msra.mxu0 0.0
  %342 = vmatpush.msra.mxu0 0.0
  %343 = vmatpush.msra.mxu0 0.0
  %344 = vmatpush.msra.mxu0 0.0
  %345 = vmatpush.msra.mxu0 0.0
  %346 = vmatpush.msra.mxu0 0.0
  %347 = vmatpush.msra.mxu0 0.0
  %348 = vmatpush.msra.mxu0 0.0
  %349 = vmatpush.msra.mxu0 0.0
  %350 = vmatpush.msra.mxu0 0.0
  %351 = vmatpush.msra.mxu0 0.0
  %352 = vmatpush.msra.mxu0 0.0
  %353 = vmatpush.msra.mxu0 0.0
  %354 = vmatpush.msra.mxu0 0.0
  %355 = vmatpush.msra.mxu0 %v336
  %356 = vmatmul.f32.gmra.mxu0 %v240
  %v357 = vpop.f32.mrf.mxu0
  %v358 = vadd.f32 0.0, %v357
  %359 = vmatmul.f32.gmra.mxu0 %v243
  %v360 = vpop.f32.mrf.mxu0
  %v361 = vadd.f32 0.0, %v360
  %362 = vmatmul.f32.gmra.mxu0 %v246
  %v363 = vpop.f32.mrf.mxu0
  %v364 = vadd.f32 0.0, %v363
  %365 = vmatmul.f32.gmra.mxu0 %v249
  %v366 = vpop.f32.mrf.mxu0
  %v367 = vadd.f32 0.0, %v366
  %368 = vmatmul.f32.gmra.mxu0 %v252
  %v369 = vpop.f32.mrf.mxu0
  %v370 = vadd.f32 0.0, %v369
  %371 = vmatmul.f32.gmra.mxu0 %v255
  %v372 = vpop.f32.mrf.mxu0
  %v373 = vadd.f32 0.0, %v372
  %374 = vmatmul.f32.gmra.mxu0 %v258
  %v375 = vpop.f32.mrf.mxu0
  %v376 = vadd.f32 0.0, %v375
  %377 = vmatmul.f32.gmra.mxu0 %v261
  %v378 = vpop.f32.mrf.mxu0
  %v379 = vadd.f32 0.0, %v378
  %380 = vmatmul.f32.gmra.mxu0 %v264
  %v381 = vpop.f32.mrf.mxu0
  %v382 = vadd.f32 0.0, %v381
  %383 = vmatmul.f32.gmra.mxu0 %v267
  %v384 = vpop.f32.mrf.mxu0
  %v385 = vadd.f32 0.0, %v384
  %386 = vmatmul.f32.gmra.mxu0 %v270
  %v387 = vpop.f32.mrf.mxu0
  %v388 = vadd.f32 0.0, %v387
  %389 = vmatmul.f32.gmra.mxu0 %v273
  %v390 = vpop.f32.mrf.mxu0
  %v391 = vadd.f32 0.0, %v390
  %392 = vmatmul.f32.gmra.mxu0 %v276
  %v393 = vpop.f32.mrf.mxu0
  %v394 = vadd.f32 0.0, %v393
  %395 = vmatmul.f32.gmra.mxu0 %v279
  %v396 = vpop.f32.mrf.mxu0
  %v397 = vadd.f32 0.0, %v396
  %398 = vmatmul.f32.gmra.mxu0 %v282
  %v399 = vpop.f32.mrf.mxu0
  %v400 = vadd.f32 0.0, %v399
  %401 = vmatmul.f32.gmra.mxu0 %v285
  %v402 = vpop.f32.mrf.mxu0
  %v403 = vadd.f32 0.0, %v402
  %404 = vmatmul.f32.gmra.mxu0 %v288
  %v405 = vpop.f32.mrf.mxu0
  %v406 = vadd.f32 0.0, %v405
  %407 = vmatmul.f32.gmra.mxu0 %v291
  %v408 = vpop.f32.mrf.mxu0
  %v409 = vadd.f32 0.0, %v408
  %410 = vmatmul.f32.gmra.mxu0 %v294
  %v411 = vpop.f32.mrf.mxu0
  %v412 = vadd.f32 0.0, %v411
  %413 = vmatmul.f32.gmra.mxu0 %v297
  %v414 = vpop.f32.mrf.mxu0
  %v415 = vadd.f32 0.0, %v414
  %416 = vmatmul.f32.gmra.mxu0 %v300
  %v417 = vpop.f32.mrf.mxu0
  %v418 = vadd.f32 0.0, %v417
  %419 = vmatmul.f32.gmra.mxu0 %v303
  %v420 = vpop.f32.mrf.mxu0
  %v421 = vadd.f32 0.0, %v420
  %422 = vmatmul.f32.gmra.mxu0 %v306
  %v423 = vpop.f32.mrf.mxu0
  %v424 = vadd.f32 0.0, %v423
  %425 = vmatmul.f32.gmra.mxu0 %v309
  %v426 = vpop.f32.mrf.mxu0
  %v427 = vadd.f32 0.0, %v426
  %428 = vmatmul.f32.gmra.mxu0 %v312
  %v429 = vpop.f32.mrf.mxu0
  %v430 = vadd.f32 0.0, %v429
  %431 = vmatmul.f32.gmra.mxu0 %v315
  %v432 = vpop.f32.mrf.mxu0
  %v433 = vadd.f32 0.0, %v432
  %434 = vmatmul.f32.gmra.mxu0 %v318
  %v435 = vpop.f32.mrf.mxu0
  %v436 = vadd.f32 0.0, %v435
  %437 = vmatmul.f32.gmra.mxu0 %v321
  %v438 = vpop.f32.mrf.mxu0
  %v439 = vadd.f32 0.0, %v438
  %440 = vmatmul.f32.gmra.mxu0 %v324
  %v441 = vpop.f32.mrf.mxu0
  %v442 = vadd.f32 0.0, %v441
  %443 = vmatmul.f32.gmra.mxu0 %v327
  %v444 = vpop.f32.mrf.mxu0
  %v445 = vadd.f32 0.0, %v444
  %446 = vmatmul.f32.gmra.mxu0 %v330
  %v447 = vpop.f32.mrf.mxu0
  %v448 = vadd.f32 0.0, %v447
  %449 = vmatmul.f32.gmra.mxu0 %v333
  %v450 = vpop.f32.mrf.mxu0
  %v451 = vadd.f32 0.0, %v450
  %452 = vdwg.mxu0
  %453 = vmatpush.msra.mxu0 0.0
  %454 = vmatpush.msra.mxu0 0.0
  %455 = vmatpush.msra.mxu0 0.0
  %456 = vmatpush.msra.mxu0 0.0
  %457 = vmatpush.msra.mxu0 0.0
  %458 = vmatpush.msra.mxu0 0.0
  %459 = vmatpush.msra.mxu0 0.0
  %460 = vmatpush.msra.mxu0 0.0
  %461 = vmatpush.msra.mxu0 0.0
  %462 = vmatpush.msra.mxu0 0.0
  %463 = vmatpush.msra.mxu0 0.0
  %464 = vmatpush.msra.mxu0 0.0
  %465 = vmatpush.msra.mxu0 0.0
  %466 = vmatpush.msra.mxu0 0.0
  %467 = vmatpush.msra.mxu0 0.0
  %468 = vmatpush.msra.mxu0 %v338
  %469 = vmatmul.f32.gmra.mxu0 %v240
  %v470 = vpop.f32.mrf.mxu0
  %v471 = vadd.f32 0.0, %v470
  %472 = vmatmul.f32.gmra.mxu0 %v243
  %v473 = vpop.f32.mrf.mxu0
  %v474 = vadd.f32 0.0, %v473
  %475 = vmatmul.f32.gmra.mxu0 %v246
  %v476 = vpop.f32.mrf.mxu0
  %v477 = vadd.f32 0.0, %v476
  %478 = vmatmul.f32.gmra.mxu0 %v249
  %v479 = vpop.f32.mrf.mxu0
  %v480 = vadd.f32 0.0, %v479
  %481 = vmatmul.f32.gmra.mxu0 %v252
  %v482 = vpop.f32.mrf.mxu0
  %v483 = vadd.f32 0.0, %v482
  %484 = vmatmul.f32.gmra.mxu0 %v255
  %v485 = vpop.f32.mrf.mxu0
  %v486 = vadd.f32 0.0, %v485
  %487 = vmatmul.f32.gmra.mxu0 %v258
  %v488 = vpop.f32.mrf.mxu0
  %v489 = vadd.f32 0.0, %v488
  %490 = vmatmul.f32.gmra.mxu0 %v261
  %v491 = vpop.f32.mrf.mxu0
  %v492 = vadd.f32 0.0, %v491
  %493 = vmatmul.f32.gmra.mxu0 %v264
  %v494 = vpop.f32.mrf.mxu0
  %v495 = vadd.f32 0.0, %v494
  %496 = vmatmul.f32.gmra.mxu0 %v267
  %v497 = vpop.f32.mrf.mxu0
  %v498 = vadd.f32 0.0, %v497
  %499 = vmatmul.f32.gmra.mxu0 %v270
  %v500 = vpop.f32.mrf.mxu0
  %v501 = vadd.f32 0.0, %v500
  %502 = vmatmul.f32.gmra.mxu0 %v273
  %v503 = vpop.f32.mrf.mxu0
  %v504 = vadd.f32 0.0, %v503
  %505 = vmatmul.f32.gmra.mxu0 %v276
  %v506 = vpop.f32.mrf.mxu0
  %v507 = vadd.f32 0.0, %v506
  %508 = vmatmul.f32.gmra.mxu0 %v279
  %v509 = vpop.f32.mrf.mxu0
  %v510 = vadd.f32 0.0, %v509
  %511 = vmatmul.f32.gmra.mxu0 %v282
  %v512 = vpop.f32.mrf.mxu0
  %v513 = vadd.f32 0.0, %v512
  %514 = vmatmul.f32.gmra.mxu0 %v285
  %v515 = vpop.f32.mrf.mxu0
  %v516 = vadd.f32 0.0, %v515
  %517 = vmatmul.f32.gmra.mxu0 %v288
  %v518 = vpop.f32.mrf.mxu0
  %v519 = vadd.f32 0.0, %v518
  %520 = vmatmul.f32.gmra.mxu0 %v291
  %v521 = vpop.f32.mrf.mxu0
  %v522 = vadd.f32 0.0, %v521
  %523 = vmatmul.f32.gmra.mxu0 %v294
  %v524 = vpop.f32.mrf.mxu0
  %v525 = vadd.f32 0.0, %v524
  %526 = vmatmul.f32.gmra.mxu0 %v297
  %v527 = vpop.f32.mrf.mxu0
  %v528 = vadd.f32 0.0, %v527
  %529 = vmatmul.f32.gmra.mxu0 %v300
  %v530 = vpop.f32.mrf.mxu0
  %v531 = vadd.f32 0.0, %v530
  %532 = vmatmul.f32.gmra.mxu0 %v303
  %v533 = vpop.f32.mrf.mxu0
  %v534 = vadd.f32 0.0, %v533
  %535 = vmatmul.f32.gmra.mxu0 %v306
  %v536 = vpop.f32.mrf.mxu0
  %v537 = vadd.f32 0.0, %v536
  %538 = vmatmul.f32.gmra.mxu0 %v309
  %v539 = vpop.f32.mrf.mxu0
  %v540 = vadd.f32 0.0, %v539
  %541 = vmatmul.f32.gmra.mxu0 %v312
  %v542 = vpop.f32.mrf.mxu0
  %v543 = vadd.f32 0.0, %v542
  %544 = vmatmul.f32.gmra.mxu0 %v315
  %v545 = vpop.f32.mrf.mxu0
  %v546 = vadd.f32 0.0, %v545
  %547 = vmatmul.f32.gmra.mxu0 %v318
  %v548 = vpop.f32.mrf.mxu0
  %v549 = vadd.f32 0.0, %v548
  %550 = vmatmul.f32.gmra.mxu0 %v321
  %v551 = vpop.f32.mrf.mxu0
  %v552 = vadd.f32 0.0, %v551
  %553 = vmatmul.f32.gmra.mxu0 %v324
  %v554 = vpop.f32.mrf.mxu0
  %v555 = vadd.f32 0.0, %v554
  %556 = vmatmul.f32.gmra.mxu0 %v327
  %v557 = vpop.f32.mrf.mxu0
  %v558 = vadd.f32 0.0, %v557
  %559 = vmatmul.f32.gmra.mxu0 %v330
  %v560 = vpop.f32.mrf.mxu0
  %v561 = vadd.f32 0.0, %v560
  %562 = vmatmul.f32.gmra.mxu0 %v333
  %v563 = vpop.f32.mrf.mxu0
  %v564 = vadd.f32 0.0, %v563
  %565 = vdwg.mxu0
  %v566 = vmax.f32 %v358, %v364
  %v567 = vmax.f32 %v361, %v367
  %v568 = vmax.f32 %v566, %v370
  %v569 = vmax.f32 %v567, %v373
  %v570 = vmax.f32 %v568, %v376
  %v571 = vmax.f32 %v569, %v379
  %v572 = vmax.f32 %v570, %v382
  %v573 = vmax.f32 %v571, %v385
  %v574 = vmax.f32 %v572, %v388
  %v575 = vmax.f32 %v573, %v391
  %v576 = vmax.f32 %v574, %v394
  %v577 = vmax.f32 %v575, %v397
  %v578 = vmax.f32 %v576, %v400
  %v579 = vmax.f32 %v577, %v403
  %v580 = vmax.f32 %v578, %v406
  %v581 = vmax.f32 %v579, %v409
  %v582 = vmax.f32 %v580, %v412
  %v583 = vmax.f32 %v581, %v415
  %v584 = vmax.f32 %v582, %v418
  %v585 = vmax.f32 %v583, %v421
  %v586 = vmax.f32 %v584, %v424
  %v587 = vmax.f32 %v585, %v427
  %v588 = vmax.f32 %v586, %v430
  %v589 = vmax.f32 %v587, %v433
  %v590 = vmax.f32 %v588, %v436
  %v591 = vmax.f32 %v589, %v439
  %v592 = vmax.f32 %v590, %v442
  %v593 = vmax.f32 %v591, %v445
  %v594 = vmax.f32 %v592, %v448
  %v595 = vmax.f32 %v593, %v451
  %v596 = vmax.f32 %v594, %v595
  %v597 = vrot.slane %v596, 4
  %v598 = vmax.f32 %v596, %v597
  %v599 = vrot.slane %v598, 2
  %v600 = vmax.f32 %v598, %v599
  %v601 = vrot.slane %v600, 1
  %v602 = vmax.f32 %v600, %v601
  %v603 = vmax.f32 %v471, %v477
  %v604 = vmax.f32 %v474, %v480
  %v605 = vmax.f32 %v603, %v483
  %v606 = vmax.f32 %v604, %v486
  %v607 = vmax.f32 %v605, %v489
  %v608 = vmax.f32 %v606, %v492
  %v609 = vmax.f32 %v607, %v495
  %v610 = vmax.f32 %v608, %v498
  %v611 = vmax.f32 %v609, %v501
  %v612 = vmax.f32 %v610, %v504
  %v613 = vmax.f32 %v611, %v507
  %v614 = vmax.f32 %v612, %v510
  %v615 = vmax.f32 %v613, %v513
  %v616 = vmax.f32 %v614, %v516
  %v617 = vmax.f32 %v615, %v519
  %v618 = vmax.f32 %v616, %v522
  %v619 = vmax.f32 %v617, %v525
  %v620 = vmax.f32 %v618, %v528
  %v621 = vmax.f32 %v619, %v531
  %v622 = vmax.f32 %v620, %v534
  %v623 = vmax.f32 %v621, %v537
  %v624 = vmax.f32 %v622, %v540
  %v625 = vmax.f32 %v623, %v543
  %v626 = vmax.f32 %v624, %v546
  %v627 = vmax.f32 %v625, %v549
  %v628 = vmax.f32 %v626, %v552
  %v629 = vmax.f32 %v627, %v555
  %v630 = vmax.f32 %v628, %v558
  %v631 = vmax.f32 %v629, %v561
  %v632 = vmax.f32 %v630, %v564
  %v633 = vmax.f32 %v631, %v632
  %v634 = vrot.slane %v633, 4
  %v635 = vmax.f32 %v633, %v634
  %v636 = vrot.slane %v635, 2
  %v637 = vmax.f32 %v635, %v636
  %v638 = vrot.slane %v637, 1
  %v639 = vmax.f32 %v637, %v638
  %v640 = vsub.f32 %v358, %v602
  %v641 = vsub.f32 %v471, %v639
  %v642 = vsub.f32 %v361, %v602
  %v643 = vsub.f32 %v474, %v639
  %v644 = vsub.f32 %v364, %v602
  %v645 = vsub.f32 %v477, %v639
  %v646 = vsub.f32 %v367, %v602
  %v647 = vsub.f32 %v480, %v639
  %v648 = vsub.f32 %v370, %v602
  %v649 = vsub.f32 %v483, %v639
  %v650 = vsub.f32 %v373, %v602
  %v651 = vsub.f32 %v486, %v639
  %v652 = vsub.f32 %v376, %v602
  %v653 = vsub.f32 %v489, %v639
  %v654 = vsub.f32 %v379, %v602
  %v655 = vsub.f32 %v492, %v639
  %v656 = vsub.f32 %v382, %v602
  %v657 = vsub.f32 %v495, %v639
  %v658 = vsub.f32 %v385, %v602
  %v659 = vsub.f32 %v498, %v639
  %v660 = vsub.f32 %v388, %v602
  %v661 = vsub.f32 %v501, %v639
  %v662 = vsub.f32 %v391, %v602
  %v663 = vsub.f32 %v504, %v639
  %v664 = vsub.f32 %v394, %v602
  %v665 = vsub.f32 %v507, %v639
  %v666 = vsub.f32 %v397, %v602
  %v667 = vsub.f32 %v510, %v639
  %v668 = vsub.f32 %v400, %v602
  %v669 = vsub.f32 %v513, %v639
  %v670 = vsub.f32 %v403, %v602
  %v671 = vsub.f32 %v516, %v639
  %v672 = vsub.f32 %v406, %v602
  %v673 = vsub.f32 %v519, %v639
  %v674 = vsub.f32 %v409, %v602
  %v675 = vsub.f32 %v522, %v639
  %v676 = vsub.f32 %v412, %v602
  %v677 = vsub.f32 %v525, %v639
  %v678 = vsub.f32 %v415, %v602
  %v679 = vsub.f32 %v528, %v639
  %v680 = vsub.f32 %v418, %v602
  %v681 = vsub.f32 %v531, %v639
  %v682 = vsub.f32 %v421, %v602
  %v683 = vsub.f32 %v534, %v639
  %v684 = vsub.f32 %v424, %v602
  %v685 = vsub.f32 %v537, %v639
  %v686 = vsub.f32 %v427, %v602
  %v687 = vsub.f32 %v540, %v639
  %v688 = vsub.f32 %v430, %v602
  %v689 = vsub.f32 %v543, %v639
  %v690 = vsub.f32 %v433, %v602
  %v691 = vsub.f32 %v546, %v639
  %v692 = vsub.f32 %v436, %v602
  %v693 = vsub.f32 %v549, %v639
  %v694 = vsub.f32 %v439, %v602
  %v695 = vsub.f32 %v552, %v639
  %v696 = vsub.f32 %v442, %v602
  %v697 = vsub.f32 %v555, %v639
  %v698 = vsub.f32 %v445, %v602
  %v699 = vsub.f32 %v558, %v639
  %v700 = vsub.f32 %v448, %v602
  %v701 = vsub.f32 %v561, %v639
  %v702 = vsub.f32 %v451, %v602
  %v703 = vsub.f32 %v564, %v639
  %v704 = vmul.f32 %v640, 1.442695
  %v705 = vpow.pop %v704
  %v706 = vmul.f32 %v641, 1.442695
  %v707 = vpow.pop %v706
  %v708 = vmul.f32 %v642, 1.442695
  %v709 = vpow.pop %v708
  %v710 = vmul.f32 %v643, 1.442695
  %v711 = vpow.pop %v710
  %v712 = vmul.f32 %v644, 1.442695
  %v713 = vpow.pop %v712
  %v714 = vmul.f32 %v645, 1.442695
  %v715 = vpow.pop %v714
  %v716 = vmul.f32 %v646, 1.442695
  %v717 = vpow.pop %v716
  %v718 = vmul.f32 %v647, 1.442695
  %v719 = vpow.pop %v718
  %v720 = vmul.f32 %v648, 1.442695
  %v721 = vpow.pop %v720
  %v722 = vmul.f32 %v649, 1.442695
  %v723 = vpow.pop %v722
  %v724 = vmul.f32 %v650, 1.442695
  %v725 = vpow.pop %v724
  %v726 = vmul.f32 %v651, 1.442695
  %v727 = vpow.pop %v726
  %v728 = vmul.f32 %v652, 1.442695
  %v729 = vpow.pop %v728
  %v730 = vmul.f32 %v653, 1.442695
  %v731 = vpow.pop %v730
  %v732 = vmul.f32 %v654, 1.442695
  %v733 = vpow.pop %v732
  %v734 = vmul.f32 %v655, 1.442695
  %v735 = vpow.pop %v734
  %v736 = vmul.f32 %v656, 1.442695
  %v737 = vpow.pop %v736
  %v738 = vmul.f32 %v657, 1.442695
  %v739 = vpow.pop %v738
  %v740 = vmul.f32 %v658, 1.442695
  %v741 = vpow.pop %v740
  %v742 = vmul.f32 %v659, 1.442695
  %v743 = vpow.pop %v742
  %v744 = vmul.f32 %v660, 1.442695
  %v745 = vpow.pop %v744
  %v746 = vmul.f32 %v661, 1.442695
  %v747 = vpow.pop %v746
  %v748 = vmul.f32 %v662, 1.442695
  %v749 = vpow.pop %v748
  %v750 = vmul.f32 %v663, 1.442695
  %v751 = vpow.pop %v750
  %v752 = vmul.f32 %v664, 1.442695
  %v753 = vpow.pop %v752
  %v754 = vmul.f32 %v665, 1.442695
  %v755 = vpow.pop %v754
  %v756 = vmul.f32 %v666, 1.442695
  %v757 = vpow.pop %v756
  %v758 = vmul.f32 %v667, 1.442695
  %v759 = vpow.pop %v758
  %v760 = vmul.f32 %v668, 1.442695
  %v761 = vpow.pop %v760
  %v762 = vmul.f32 %v669, 1.442695
  %v763 = vpow.pop %v762
  %v764 = vmul.f32 %v670, 1.442695
  %v765 = vpow.pop %v764
  %v766 = vmul.f32 %v671, 1.442695
  %v767 = vpow.pop %v766
  %v768 = vmul.f32 %v672, 1.442695
  %v769 = vpow.pop %v768
  %v770 = vmul.f32 %v673, 1.442695
  %v771 = vpow.pop %v770
  %v772 = vmul.f32 %v674, 1.442695
  %v773 = vpow.pop %v772
  %v774 = vmul.f32 %v675, 1.442695
  %v775 = vpow.pop %v774
  %v776 = vmul.f32 %v676, 1.442695
  %v777 = vpow.pop %v776
  %v778 = vmul.f32 %v677, 1.442695
  %v779 = vpow.pop %v778
  %v780 = vmul.f32 %v678, 1.442695
  %v781 = vpow.pop %v780
  %v782 = vmul.f32 %v679, 1.442695
  %v783 = vpow.pop %v782
  %v784 = vmul.f32 %v680, 1.442695
  %v785 = vpow.pop %v784
  %v786 = vmul.f32 %v681, 1.442695
  %v787 = vpow.pop %v786
  %v788 = vmul.f32 %v682, 1.442695
  %v789 = vpow.pop %v788
  %v790 = vmul.f32 %v683, 1.442695
  %v791 = vpow.pop %v790
  %v792 = vmul.f32 %v684, 1.442695
  %v793 = vpow.pop %v792
  %v794 = vmul.f32 %v685, 1.442695
  %v795 = vpow.pop %v794
  %v796 = vmul.f32 %v686, 1.442695
  %v797 = vpow.pop %v796
  %v798 = vmul.f32 %v687, 1.442695
  %v799 = vpow.pop %v798
  %v800 = vmul.f32 %v688, 1.442695
  %v801 = vpow.pop %v800
  %v802 = vmul.f32 %v689, 1.442695
  %v803 = vpow.pop %v802
  %v804 = vmul.f32 %v690, 1.442695
  %v805 = vpow.pop %v804
  %v806 = vmul.f32 %v691, 1.442695
  %v807 = vpow.pop %v806
  %v808 = vmul.f32 %v692, 1.442695
  %v809 = vpow.pop %v808
  %v810 = vmul.f32 %v693, 1.442695
  %v811 = vpow.pop %v810
  %v812 = vmul.f32 %v694, 1.442695
  %v813 = vpow.pop %v812
  %v814 = vmul.f32 %v695, 1.442695
  %v815 = vpow.pop %v814
  %v816 = vmul.f32 %v696, 1.442695
  %v817 = vpow.pop %v816
  %v818 = vmul.f32 %v697, 1.442695
  %v819 = vpow.pop %v818
  %v820 = vmul.f32 %v698, 1.442695
  %v821 = vpow.pop %v820
  %v822 = vmul.f32 %v699, 1.442695
  %v823 = vpow.pop %v822
  %v824 = vmul.f32 %v700, 1.442695
  %v825 = vpow.pop %v824
  %v826 = vmul.f32 %v701, 1.442695
  %v827 = vpow.pop %v826
  %v828 = vmul.f32 %v702, 1.442695
  %v829 = vpow.pop %v828
  %v830 = vmul.f32 %v703, 1.442695
  %v831 = vpow.pop %v830
  %v832 = vpack.c.bf16 %v709, %v705
  %v833 = vpack.c.bf16 %v711, %v707
  %v834 = vpack.c.bf16 %v717, %v713
  %v835 = vpack.c.bf16 %v719, %v715
  %v836 = vpack.c.bf16 %v725, %v721
  %v837 = vpack.c.bf16 %v727, %v723
  %v838 = vpack.c.bf16 %v733, %v729
  %v839 = vpack.c.bf16 %v735, %v731
  %v840 = vpack.c.bf16 %v741, %v737
  %v841 = vpack.c.bf16 %v743, %v739
  %v842 = vpack.c.bf16 %v749, %v745
  %v843 = vpack.c.bf16 %v751, %v747
  %v844 = vpack.c.bf16 %v757, %v753
  %v845 = vpack.c.bf16 %v759, %v755
  %v846 = vpack.c.bf16 %v765, %v761
  %v847 = vpack.c.bf16 %v767, %v763
  %v848 = vpack.c.bf16 %v773, %v769
  %v849 = vpack.c.bf16 %v775, %v771
  %v850 = vpack.c.bf16 %v781, %v777
  %v851 = vpack.c.bf16 %v783, %v779
  %v852 = vpack.c.bf16 %v789, %v785
  %v853 = vpack.c.bf16 %v791, %v787
  %v854 = vpack.c.bf16 %v797, %v793
  %v855 = vpack.c.bf16 %v799, %v795
  %v856 = vpack.c.bf16 %v805, %v801
  %v857 = vpack.c.bf16 %v807, %v803
  %v858 = vpack.c.bf16 %v813, %v809
  %v859 = vpack.c.bf16 %v815, %v811
  %v860 = vpack.c.bf16 %v821, %v817
  %v861 = vpack.c.bf16 %v823, %v819
  %v862 = vpack.c.bf16 %v829, %v825
  %v863 = vpack.c.bf16 %v831, %v827
  %v864 = vpack.c.bf16 %v75, %v72
  %v865 = vpack.c.bf16 %v101, %v98
  %v868 = vrot.slane %v864, 2
  %v869 = vrot.slane %v865, 2
  %872 = vmatpush.bf16.msra.mxu0 %v846
  %873 = vmatpush.bf16.msra.mxu0 %v844
  %874 = vmatpush.bf16.msra.mxu0 %v842
  %875 = vmatpush.bf16.msra.mxu0 %v840
  %876 = vmatpush.bf16.msra.mxu0 %v838
  %877 = vmatpush.bf16.msra.mxu0 %v836
  %878 = vmatpush.bf16.msra.mxu0 %v834
  %879 = vmatpush.bf16.msra.mxu0 %v832
  %880 = vmatmul.bf16.gmra.mxu0 %v868
  %v881 = vpop.f32.mrf.mxu0
  %v882 = vadd.f32 0.0, %v881
  %v883 = vpop.f32.mrf.mxu0
  %884 = vdwg.mxu0
  %885 = vmatpush.bf16.msra.mxu0 %v862
  %886 = vmatpush.bf16.msra.mxu0 %v860
  %887 = vmatpush.bf16.msra.mxu0 %v858
  %888 = vmatpush.bf16.msra.mxu0 %v856
  %889 = vmatpush.bf16.msra.mxu0 %v854
  %890 = vmatpush.bf16.msra.mxu0 %v852
  %891 = vmatpush.bf16.msra.mxu0 %v850
  %892 = vmatpush.bf16.msra.mxu0 %v848
  %893 = vmatmul.bf16.gmra.mxu0 %v869
  %v894 = vpop.f32.mrf.mxu0
  %v895 = vadd.f32 %v882, %v894
  %v896 = vpop.f32.mrf.mxu0
  %897 = vdwg.mxu0
  %898 = vmatpush.bf16.msra.mxu0 %v847
  %899 = vmatpush.bf16.msra.mxu0 %v845
  %900 = vmatpush.bf16.msra.mxu0 %v843
  %901 = vmatpush.bf16.msra.mxu0 %v841
  %902 = vmatpush.bf16.msra.mxu0 %v839
  %903 = vmatpush.bf16.msra.mxu0 %v837
  %904 = vmatpush.bf16.msra.mxu0 %v835
  %905 = vmatpush.bf16.msra.mxu0 %v833
  %906 = vmatmul.bf16.gmra.mxu0 %v868
  %v907 = vpop.f32.mrf.mxu0
  %v908 = vadd.f32 0.0, %v907
  %v909 = vpop.f32.mrf.mxu0
  %910 = vdwg.mxu0
  %911 = vmatpush.bf16.msra.mxu0 %v863
  %912 = vmatpush.bf16.msra.mxu0 %v861
  %913 = vmatpush.bf16.msra.mxu0 %v859
  %914 = vmatpush.bf16.msra.mxu0 %v857
  %915 = vmatpush.bf16.msra.mxu0 %v855
  %916 = vmatpush.bf16.msra.mxu0 %v853
  %917 = vmatpush.bf16.msra.mxu0 %v851
  %918 = vmatpush.bf16.msra.mxu0 %v849
  %919 = vmatmul.bf16.gmra.mxu0 %v869
  %v920 = vpop.f32.mrf.mxu0
  %v921 = vadd.f32 %v908, %v920
  %v922 = vpop.f32.mrf.mxu0
  %923 = vdwg.mxu0
  %v924 = vrcp.pop %v895
  %v925 = vrcp.pop %v921
  %v926 = vperm.slane %v924, 4
  %v927 = vperm.slane %v925, 4
  %v928 = vmul.f32 %v895, %v926
  %v929 = vmul.f32 %v921, %v927
  %930 = vxpose.xlu0.b32.start [1/16] %v146, 128
  %931 = vxpose.xlu0.b32.cont [2/16] 0.0, 128
  %932 = vxpose.xlu0.b32.cont [3/16] 0.0, 128
  %933 = vxpose.xlu0.b32.cont [4/16] 0.0, 128
  %934 = vxpose.xlu0.b32.cont [5/16] 0.0, 128
  %935 = vxpose.xlu0.b32.cont [6/16] 0.0, 128
  %936 = vxpose.xlu0.b32.cont [7/16] 0.0, 128
  %937 = vxpose.xlu0.b32.cont [8/16] 0.0, 128
  %938 = vxpose.xlu0.b32.cont [9/16] 0.0, 128
  %939 = vxpose.xlu0.b32.cont [10/16] 0.0, 128
  %940 = vxpose.xlu0.b32.cont [11/16] 0.0, 128
  %941 = vxpose.xlu0.b32.cont [12/16] 0.0, 128
  %942 = vxpose.xlu0.b32.cont [13/16] 0.0, 128
  %943 = vxpose.xlu0.b32.cont [14/16] 0.0, 128
  %944 = vxpose.xlu0.b32.cont [15/16] 0.0, 128
  %945 = vxpose.xlu0.b32.end [16/16] 0.0, 128
  %v946 = vpop.trf.xlu0
  %v947 = vpop.trf.xlu0
  %v948 = vpop.trf.xlu0
  %v949 = vpop.trf.xlu0
  %v950 = vpop.trf.xlu0
  %v951 = vpop.trf.xlu0
  %v952 = vpop.trf.xlu0
  %v953 = vpop.trf.xlu0
  %v954 = vpop.trf.xlu0
  %v955 = vpop.trf.xlu0
  %v956 = vpop.trf.xlu0
  %v957 = vpop.trf.xlu0
  %v958 = vpop.trf.xlu0
  %v959 = vpop.trf.xlu0
  %v960 = vpop.trf.xlu0
  %v961 = vpop.trf.xlu0
  %962 = vxpose.xlu0.b32.start [1/16] %v166, 128
  %963 = vxpose.xlu0.b32.cont [2/16] 0.0, 128
  %964 = vxpose.xlu0.b32.cont [3/16] 0.0, 128
  %965 = vxpose.xlu0.b32.cont [4/16] 0.0, 128
  %966 = vxpose.xlu0.b32.cont [5/16] 0.0, 128
  %967 = vxpose.xlu0.b32.cont [6/16] 0.0, 128
  %968 = vxpose.xlu0.b32.cont [7/16] 0.0, 128
  %969 = vxpose.xlu0.b32.cont [8/16] 0.0, 128
  %970 = vxpose.xlu0.b32.cont [9/16] 0.0, 128
  %971 = vxpose.xlu0.b32.cont [10/16] 0.0, 128
  %972 = vxpose.xlu0.b32.cont [11/16] 0.0, 128
  %973 = vxpose.xlu0.b32.cont [12/16] 0.0, 128
  %974 = vxpose.xlu0.b32.cont [13/16] 0.0, 128
  %975 = vxpose.xlu0.b32.cont [14/16] 0.0, 128
  %976 = vxpose.xlu0.b32.cont [15/16] 0.0, 128
  %977 = vxpose.xlu0.b32.end [16/16] 0.0, 128
  %v978 = vpop.trf.xlu0
  %v979 = vpop.trf.xlu0
  %v980 = vpop.trf.xlu0
  %v981 = vpop.trf.xlu0
  %v982 = vpop.trf.xlu0
  %v983 = vpop.trf.xlu0
  %v984 = vpop.trf.xlu0
  %v985 = vpop.trf.xlu0
  %v986 = vpop.trf.xlu0
  %v987 = vpop.trf.xlu0
  %v988 = vpop.trf.xlu0
  %v989 = vpop.trf.xlu0
  %v990 = vpop.trf.xlu0
  %v991 = vpop.trf.xlu0
  %v992 = vpop.trf.xlu0
  %v993 = vpop.trf.xlu0
  %v995 = vsel %vm238, %v946, 0
  %v998 = vsel %vm238, %v947, 0
  %v1001 = vsel %vm238, %v948, 0
  %v1004 = vsel %vm238, %v949, 0
  %v1007 = vsel %vm238, %v950, 0
  %v1010 = vsel %vm238, %v951, 0
  %v1013 = vsel %vm238, %v952, 0
  %v1016 = vsel %vm238, %v953, 0
  %v1019 = vsel %vm238, %v954, 0
  %v1022 = vsel %vm238, %v955, 0
  %v1025 = vsel %vm238, %v956, 0
  %v1028 = vsel %vm238, %v957, 0
  %v1031 = vsel %vm238, %v958, 0
  %v1034 = vsel %vm238, %v959, 0
  %v1037 = vsel %vm238, %v960, 0
  %v1040 = vsel %vm238, %v961, 0
  %v1043 = vsel %vm238, %v978, 0
  %v1046 = vsel %vm238, %v979, 0
  %v1049 = vsel %vm238, %v980, 0
  %v1052 = vsel %vm238, %v981, 0
  %v1055 = vsel %vm238, %v982, 0
  %v1058 = vsel %vm238, %v983, 0
  %v1061 = vsel %vm238, %v984, 0
  %v1064 = vsel %vm238, %v985, 0
  %v1067 = vsel %vm238, %v986, 0
  %v1070 = vsel %vm238, %v987, 0
  %v1073 = vsel %vm238, %v988, 0
  %v1076 = vsel %vm238, %v989, 0
  %v1079 = vsel %vm238, %v990, 0
  %v1082 = vsel %vm238, %v991, 0
  %v1085 = vsel %vm238, %v992, 0
  %v1088 = vsel %vm238, %v993, 0
  %1090 = vmatpush.msra.mxu0 0.0
  %1091 = vmatpush.msra.mxu0 0.0
  %1092 = vmatpush.msra.mxu0 0.0
  %1093 = vmatpush.msra.mxu0 0.0
  %1094 = vmatpush.msra.mxu0 0.0
  %1095 = vmatpush.msra.mxu0 0.0
  %1096 = vmatpush.msra.mxu0 0.0
  %1097 = vmatpush.msra.mxu0 0.0
  %1098 = vmatpush.msra.mxu0 0.0
  %1099 = vmatpush.msra.mxu0 0.0
  %1100 = vmatpush.msra.mxu0 0.0
  %1101 = vmatpush.msra.mxu0 0.0
  %1102 = vmatpush.msra.mxu0 0.0
  %1103 = vmatpush.msra.mxu0 0.0
  %1104 = vmatpush.msra.mxu0 0.0
  %1105 = vmatpush.msra.mxu0 %v336
  %1106 = vmatmul.f32.gmra.mxu0 %v995
  %v1107 = vpop.f32.mrf.mxu0
  %v1108 = vadd.f32 0.0, %v1107
  %1109 = vmatmul.f32.gmra.mxu0 %v998
  %v1110 = vpop.f32.mrf.mxu0
  %v1111 = vadd.f32 0.0, %v1110
  %1112 = vmatmul.f32.gmra.mxu0 %v1001
  %v1113 = vpop.f32.mrf.mxu0
  %v1114 = vadd.f32 0.0, %v1113
  %1115 = vmatmul.f32.gmra.mxu0 %v1004
  %v1116 = vpop.f32.mrf.mxu0
  %v1117 = vadd.f32 0.0, %v1116
  %1118 = vmatmul.f32.gmra.mxu0 %v1007
  %v1119 = vpop.f32.mrf.mxu0
  %v1120 = vadd.f32 0.0, %v1119
  %1121 = vmatmul.f32.gmra.mxu0 %v1010
  %v1122 = vpop.f32.mrf.mxu0
  %v1123 = vadd.f32 0.0, %v1122
  %1124 = vmatmul.f32.gmra.mxu0 %v1013
  %v1125 = vpop.f32.mrf.mxu0
  %v1126 = vadd.f32 0.0, %v1125
  %1127 = vmatmul.f32.gmra.mxu0 %v1016
  %v1128 = vpop.f32.mrf.mxu0
  %v1129 = vadd.f32 0.0, %v1128
  %1130 = vmatmul.f32.gmra.mxu0 %v1019
  %v1131 = vpop.f32.mrf.mxu0
  %v1132 = vadd.f32 0.0, %v1131
  %1133 = vmatmul.f32.gmra.mxu0 %v1022
  %v1134 = vpop.f32.mrf.mxu0
  %v1135 = vadd.f32 0.0, %v1134
  %1136 = vmatmul.f32.gmra.mxu0 %v1025
  %v1137 = vpop.f32.mrf.mxu0
  %v1138 = vadd.f32 0.0, %v1137
  %1139 = vmatmul.f32.gmra.mxu0 %v1028
  %v1140 = vpop.f32.mrf.mxu0
  %v1141 = vadd.f32 0.0, %v1140
  %1142 = vmatmul.f32.gmra.mxu0 %v1031
  %v1143 = vpop.f32.mrf.mxu0
  %v1144 = vadd.f32 0.0, %v1143
  %1145 = vmatmul.f32.gmra.mxu0 %v1034
  %v1146 = vpop.f32.mrf.mxu0
  %v1147 = vadd.f32 0.0, %v1146
  %1148 = vmatmul.f32.gmra.mxu0 %v1037
  %v1149 = vpop.f32.mrf.mxu0
  %v1150 = vadd.f32 0.0, %v1149
  %1151 = vmatmul.f32.gmra.mxu0 %v1040
  %v1152 = vpop.f32.mrf.mxu0
  %v1153 = vadd.f32 0.0, %v1152
  %1154 = vmatmul.f32.gmra.mxu0 %v1043
  %v1155 = vpop.f32.mrf.mxu0
  %v1156 = vadd.f32 0.0, %v1155
  %1157 = vmatmul.f32.gmra.mxu0 %v1046
  %v1158 = vpop.f32.mrf.mxu0
  %v1159 = vadd.f32 0.0, %v1158
  %1160 = vmatmul.f32.gmra.mxu0 %v1049
  %v1161 = vpop.f32.mrf.mxu0
  %v1162 = vadd.f32 0.0, %v1161
  %1163 = vmatmul.f32.gmra.mxu0 %v1052
  %v1164 = vpop.f32.mrf.mxu0
  %v1165 = vadd.f32 0.0, %v1164
  %1166 = vmatmul.f32.gmra.mxu0 %v1055
  %v1167 = vpop.f32.mrf.mxu0
  %v1168 = vadd.f32 0.0, %v1167
  %1169 = vmatmul.f32.gmra.mxu0 %v1058
  %v1170 = vpop.f32.mrf.mxu0
  %v1171 = vadd.f32 0.0, %v1170
  %1172 = vmatmul.f32.gmra.mxu0 %v1061
  %v1173 = vpop.f32.mrf.mxu0
  %v1174 = vadd.f32 0.0, %v1173
  %1175 = vmatmul.f32.gmra.mxu0 %v1064
  %v1176 = vpop.f32.mrf.mxu0
  %v1177 = vadd.f32 0.0, %v1176
  %1178 = vmatmul.f32.gmra.mxu0 %v1067
  %v1179 = vpop.f32.mrf.mxu0
  %v1180 = vadd.f32 0.0, %v1179
  %1181 = vmatmul.f32.gmra.mxu0 %v1070
  %v1182 = vpop.f32.mrf.mxu0
  %v1183 = vadd.f32 0.0, %v1182
  %1184 = vmatmul.f32.gmra.mxu0 %v1073
  %v1185 = vpop.f32.mrf.mxu0
  %v1186 = vadd.f32 0.0, %v1185
  %1187 = vmatmul.f32.gmra.mxu0 %v1076
  %v1188 = vpop.f32.mrf.mxu0
  %v1189 = vadd.f32 0.0, %v1188
  %1190 = vmatmul.f32.gmra.mxu0 %v1079
  %v1191 = vpop.f32.mrf.mxu0
  %v1192 = vadd.f32 0.0, %v1191
  %1193 = vmatmul.f32.gmra.mxu0 %v1082
  %v1194 = vpop.f32.mrf.mxu0
  %v1195 = vadd.f32 0.0, %v1194
  %1196 = vmatmul.f32.gmra.mxu0 %v1085
  %v1197 = vpop.f32.mrf.mxu0
  %v1198 = vadd.f32 0.0, %v1197
  %1199 = vmatmul.f32.gmra.mxu0 %v1088
  %v1200 = vpop.f32.mrf.mxu0
  %v1201 = vadd.f32 0.0, %v1200
  %1202 = vdwg.mxu0
  %1203 = vmatpush.msra.mxu0 0.0
  %1204 = vmatpush.msra.mxu0 0.0
  %1205 = vmatpush.msra.mxu0 0.0
  %1206 = vmatpush.msra.mxu0 0.0
  %1207 = vmatpush.msra.mxu0 0.0
  %1208 = vmatpush.msra.mxu0 0.0
  %1209 = vmatpush.msra.mxu0 0.0
  %1210 = vmatpush.msra.mxu0 0.0
  %1211 = vmatpush.msra.mxu0 0.0
  %1212 = vmatpush.msra.mxu0 0.0
  %1213 = vmatpush.msra.mxu0 0.0
  %1214 = vmatpush.msra.mxu0 0.0
  %1215 = vmatpush.msra.mxu0 0.0
  %1216 = vmatpush.msra.mxu0 0.0
  %1217 = vmatpush.msra.mxu0 0.0
  %1218 = vmatpush.msra.mxu0 %v338
  %1219 = vmatmul.f32.gmra.mxu0 %v995
  %v1220 = vpop.f32.mrf.mxu0
  %v1221 = vadd.f32 0.0, %v1220
  %1222 = vmatmul.f32.gmra.mxu0 %v998
  %v1223 = vpop.f32.mrf.mxu0
  %v1224 = vadd.f32 0.0, %v1223
  %1225 = vmatmul.f32.gmra.mxu0 %v1001
  %v1226 = vpop.f32.mrf.mxu0
  %v1227 = vadd.f32 0.0, %v1226
  %1228 = vmatmul.f32.gmra.mxu0 %v1004
  %v1229 = vpop.f32.mrf.mxu0
  %v1230 = vadd.f32 0.0, %v1229
  %1231 = vmatmul.f32.gmra.mxu0 %v1007
  %v1232 = vpop.f32.mrf.mxu0
  %v1233 = vadd.f32 0.0, %v1232
  %1234 = vmatmul.f32.gmra.mxu0 %v1010
  %v1235 = vpop.f32.mrf.mxu0
  %v1236 = vadd.f32 0.0, %v1235
  %1237 = vmatmul.f32.gmra.mxu0 %v1013
  %v1238 = vpop.f32.mrf.mxu0
  %v1239 = vadd.f32 0.0, %v1238
  %1240 = vmatmul.f32.gmra.mxu0 %v1016
  %v1241 = vpop.f32.mrf.mxu0
  %v1242 = vadd.f32 0.0, %v1241
  %1243 = vmatmul.f32.gmra.mxu0 %v1019
  %v1244 = vpop.f32.mrf.mxu0
  %v1245 = vadd.f32 0.0, %v1244
  %1246 = vmatmul.f32.gmra.mxu0 %v1022
  %v1247 = vpop.f32.mrf.mxu0
  %v1248 = vadd.f32 0.0, %v1247
  %1249 = vmatmul.f32.gmra.mxu0 %v1025
  %v1250 = vpop.f32.mrf.mxu0
  %v1251 = vadd.f32 0.0, %v1250
  %1252 = vmatmul.f32.gmra.mxu0 %v1028
  %v1253 = vpop.f32.mrf.mxu0
  %v1254 = vadd.f32 0.0, %v1253
  %1255 = vmatmul.f32.gmra.mxu0 %v1031
  %v1256 = vpop.f32.mrf.mxu0
  %v1257 = vadd.f32 0.0, %v1256
  %1258 = vmatmul.f32.gmra.mxu0 %v1034
  %v1259 = vpop.f32.mrf.mxu0
  %v1260 = vadd.f32 0.0, %v1259
  %1261 = vmatmul.f32.gmra.mxu0 %v1037
  %v1262 = vpop.f32.mrf.mxu0
  %v1263 = vadd.f32 0.0, %v1262
  %1264 = vmatmul.f32.gmra.mxu0 %v1040
  %v1265 = vpop.f32.mrf.mxu0
  %v1266 = vadd.f32 0.0, %v1265
  %1267 = vmatmul.f32.gmra.mxu0 %v1043
  %v1268 = vpop.f32.mrf.mxu0
  %v1269 = vadd.f32 0.0, %v1268
  %1270 = vmatmul.f32.gmra.mxu0 %v1046
  %v1271 = vpop.f32.mrf.mxu0
  %v1272 = vadd.f32 0.0, %v1271
  %1273 = vmatmul.f32.gmra.mxu0 %v1049
  %v1274 = vpop.f32.mrf.mxu0
  %v1275 = vadd.f32 0.0, %v1274
  %1276 = vmatmul.f32.gmra.mxu0 %v1052
  %v1277 = vpop.f32.mrf.mxu0
  %v1278 = vadd.f32 0.0, %v1277
  %1279 = vmatmul.f32.gmra.mxu0 %v1055
  %v1280 = vpop.f32.mrf.mxu0
  %v1281 = vadd.f32 0.0, %v1280
  %1282 = vmatmul.f32.gmra.mxu0 %v1058
  %v1283 = vpop.f32.mrf.mxu0
  %v1284 = vadd.f32 0.0, %v1283
  %1285 = vmatmul.f32.gmra.mxu0 %v1061
  %v1286 = vpop.f32.mrf.mxu0
  %v1287 = vadd.f32 0.0, %v1286
  %1288 = vmatmul.f32.gmra.mxu0 %v1064
  %v1289 = vpop.f32.mrf.mxu0
  %v1290 = vadd.f32 0.0, %v1289
  %1291 = vmatmul.f32.gmra.mxu0 %v1067
  %v1292 = vpop.f32.mrf.mxu0
  %v1293 = vadd.f32 0.0, %v1292
  %1294 = vmatmul.f32.gmra.mxu0 %v1070
  %v1295 = vpop.f32.mrf.mxu0
  %v1296 = vadd.f32 0.0, %v1295
  %1297 = vmatmul.f32.gmra.mxu0 %v1073
  %v1298 = vpop.f32.mrf.mxu0
  %v1299 = vadd.f32 0.0, %v1298
  %1300 = vmatmul.f32.gmra.mxu0 %v1076
  %v1301 = vpop.f32.mrf.mxu0
  %v1302 = vadd.f32 0.0, %v1301
  %1303 = vmatmul.f32.gmra.mxu0 %v1079
  %v1304 = vpop.f32.mrf.mxu0
  %v1305 = vadd.f32 0.0, %v1304
  %1306 = vmatmul.f32.gmra.mxu0 %v1082
  %v1307 = vpop.f32.mrf.mxu0
  %v1308 = vadd.f32 0.0, %v1307
  %1309 = vmatmul.f32.gmra.mxu0 %v1085
  %v1310 = vpop.f32.mrf.mxu0
  %v1311 = vadd.f32 0.0, %v1310
  %1312 = vmatmul.f32.gmra.mxu0 %v1088
  %v1313 = vpop.f32.mrf.mxu0
  %v1314 = vadd.f32 0.0, %v1313
  %1315 = vdwg.mxu0
  %v1316 = vmax.f32 %v1108, %v1114
  %v1317 = vmax.f32 %v1111, %v1117
  %v1318 = vmax.f32 %v1316, %v1120
  %v1319 = vmax.f32 %v1317, %v1123
  %v1320 = vmax.f32 %v1318, %v1126
  %v1321 = vmax.f32 %v1319, %v1129
  %v1322 = vmax.f32 %v1320, %v1132
  %v1323 = vmax.f32 %v1321, %v1135
  %v1324 = vmax.f32 %v1322, %v1138
  %v1325 = vmax.f32 %v1323, %v1141
  %v1326 = vmax.f32 %v1324, %v1144
  %v1327 = vmax.f32 %v1325, %v1147
  %v1328 = vmax.f32 %v1326, %v1150
  %v1329 = vmax.f32 %v1327, %v1153
  %v1330 = vmax.f32 %v1328, %v1156
  %v1331 = vmax.f32 %v1329, %v1159
  %v1332 = vmax.f32 %v1330, %v1162
  %v1333 = vmax.f32 %v1331, %v1165
  %v1334 = vmax.f32 %v1332, %v1168
  %v1335 = vmax.f32 %v1333, %v1171
  %v1336 = vmax.f32 %v1334, %v1174
  %v1337 = vmax.f32 %v1335, %v1177
  %v1338 = vmax.f32 %v1336, %v1180
  %v1339 = vmax.f32 %v1337, %v1183
  %v1340 = vmax.f32 %v1338, %v1186
  %v1341 = vmax.f32 %v1339, %v1189
  %v1342 = vmax.f32 %v1340, %v1192
  %v1343 = vmax.f32 %v1341, %v1195
  %v1344 = vmax.f32 %v1342, %v1198
  %v1345 = vmax.f32 %v1343, %v1201
  %v1346 = vmax.f32 %v1344, %v1345
  %v1347 = vrot.slane %v1346, 4
  %v1348 = vmax.f32 %v1346, %v1347
  %v1349 = vrot.slane %v1348, 2
  %v1350 = vmax.f32 %v1348, %v1349
  %v1351 = vrot.slane %v1350, 1
  %v1352 = vmax.f32 %v1350, %v1351
  %v1353 = vmax.f32 %v1221, %v1227
  %v1354 = vmax.f32 %v1224, %v1230
  %v1355 = vmax.f32 %v1353, %v1233
  %v1356 = vmax.f32 %v1354, %v1236
  %v1357 = vmax.f32 %v1355, %v1239
  %v1358 = vmax.f32 %v1356, %v1242
  %v1359 = vmax.f32 %v1357, %v1245
  %v1360 = vmax.f32 %v1358, %v1248
  %v1361 = vmax.f32 %v1359, %v1251
  %v1362 = vmax.f32 %v1360, %v1254
  %v1363 = vmax.f32 %v1361, %v1257
  %v1364 = vmax.f32 %v1362, %v1260
  %v1365 = vmax.f32 %v1363, %v1263
  %v1366 = vmax.f32 %v1364, %v1266
  %v1367 = vmax.f32 %v1365, %v1269
  %v1368 = vmax.f32 %v1366, %v1272
  %v1369 = vmax.f32 %v1367, %v1275
  %v1370 = vmax.f32 %v1368, %v1278
  %v1371 = vmax.f32 %v1369, %v1281
  %v1372 = vmax.f32 %v1370, %v1284
  %v1373 = vmax.f32 %v1371, %v1287
  %v1374 = vmax.f32 %v1372, %v1290
  %v1375 = vmax.f32 %v1373, %v1293
  %v1376 = vmax.f32 %v1374, %v1296
  %v1377 = vmax.f32 %v1375, %v1299
  %v1378 = vmax.f32 %v1376, %v1302
  %v1379 = vmax.f32 %v1377, %v1305
  %v1380 = vmax.f32 %v1378, %v1308
  %v1381 = vmax.f32 %v1379, %v1311
  %v1382 = vmax.f32 %v1380, %v1314
  %v1383 = vmax.f32 %v1381, %v1382
  %v1384 = vrot.slane %v1383, 4
  %v1385 = vmax.f32 %v1383, %v1384
  %v1386 = vrot.slane %v1385, 2
  %v1387 = vmax.f32 %v1385, %v1386
  %v1388 = vrot.slane %v1387, 1
  %v1389 = vmax.f32 %v1387, %v1388
  %v1390 = vsub.f32 %v1108, %v1352
  %v1391 = vsub.f32 %v1221, %v1389
  %v1392 = vsub.f32 %v1111, %v1352
  %v1393 = vsub.f32 %v1224, %v1389
  %v1394 = vsub.f32 %v1114, %v1352
  %v1395 = vsub.f32 %v1227, %v1389
  %v1396 = vsub.f32 %v1117, %v1352
  %v1397 = vsub.f32 %v1230, %v1389
  %v1398 = vsub.f32 %v1120, %v1352
  %v1399 = vsub.f32 %v1233, %v1389
  %v1400 = vsub.f32 %v1123, %v1352
  %v1401 = vsub.f32 %v1236, %v1389
  %v1402 = vsub.f32 %v1126, %v1352
  %v1403 = vsub.f32 %v1239, %v1389
  %v1404 = vsub.f32 %v1129, %v1352
  %v1405 = vsub.f32 %v1242, %v1389
  %v1406 = vsub.f32 %v1132, %v1352
  %v1407 = vsub.f32 %v1245, %v1389
  %v1408 = vsub.f32 %v1135, %v1352
  %v1409 = vsub.f32 %v1248, %v1389
  %v1410 = vsub.f32 %v1138, %v1352
  %v1411 = vsub.f32 %v1251, %v1389
  %v1412 = vsub.f32 %v1141, %v1352
  %v1413 = vsub.f32 %v1254, %v1389
  %v1414 = vsub.f32 %v1144, %v1352
  %v1415 = vsub.f32 %v1257, %v1389
  %v1416 = vsub.f32 %v1147, %v1352
  %v1417 = vsub.f32 %v1260, %v1389
  %v1418 = vsub.f32 %v1150, %v1352
  %v1419 = vsub.f32 %v1263, %v1389
  %v1420 = vsub.f32 %v1153, %v1352
  %v1421 = vsub.f32 %v1266, %v1389
  %v1422 = vsub.f32 %v1156, %v1352
  %v1423 = vsub.f32 %v1269, %v1389
  %v1424 = vsub.f32 %v1159, %v1352
  %v1425 = vsub.f32 %v1272, %v1389
  %v1426 = vsub.f32 %v1162, %v1352
  %v1427 = vsub.f32 %v1275, %v1389
  %v1428 = vsub.f32 %v1165, %v1352
  %v1429 = vsub.f32 %v1278, %v1389
  %v1430 = vsub.f32 %v1168, %v1352
  %v1431 = vsub.f32 %v1281, %v1389
  %v1432 = vsub.f32 %v1171, %v1352
  %v1433 = vsub.f32 %v1284, %v1389
  %v1434 = vsub.f32 %v1174, %v1352
  %v1435 = vsub.f32 %v1287, %v1389
  %v1436 = vsub.f32 %v1177, %v1352
  %v1437 = vsub.f32 %v1290, %v1389
  %v1438 = vsub.f32 %v1180, %v1352
  %v1439 = vsub.f32 %v1293, %v1389
  %v1440 = vsub.f32 %v1183, %v1352
  %v1441 = vsub.f32 %v1296, %v1389
  %v1442 = vsub.f32 %v1186, %v1352
  %v1443 = vsub.f32 %v1299, %v1389
  %v1444 = vsub.f32 %v1189, %v1352
  %v1445 = vsub.f32 %v1302, %v1389
  %v1446 = vsub.f32 %v1192, %v1352
  %v1447 = vsub.f32 %v1305, %v1389
  %v1448 = vsub.f32 %v1195, %v1352
  %v1449 = vsub.f32 %v1308, %v1389
  %v1450 = vsub.f32 %v1198, %v1352
  %v1451 = vsub.f32 %v1311, %v1389
  %v1452 = vsub.f32 %v1201, %v1352
  %v1453 = vsub.f32 %v1314, %v1389
  %v1454 = vmul.f32 %v1390, 1.442695
  %v1455 = vpow.pop %v1454
  %v1456 = vmul.f32 %v1391, 1.442695
  %v1457 = vpow.pop %v1456
  %v1458 = vmul.f32 %v1392, 1.442695
  %v1459 = vpow.pop %v1458
  %v1460 = vmul.f32 %v1393, 1.442695
  %v1461 = vpow.pop %v1460
  %v1462 = vmul.f32 %v1394, 1.442695
  %v1463 = vpow.pop %v1462
  %v1464 = vmul.f32 %v1395, 1.442695
  %v1465 = vpow.pop %v1464
  %v1466 = vmul.f32 %v1396, 1.442695
  %v1467 = vpow.pop %v1466
  %v1468 = vmul.f32 %v1397, 1.442695
  %v1469 = vpow.pop %v1468
  %v1470 = vmul.f32 %v1398, 1.442695
  %v1471 = vpow.pop %v1470
  %v1472 = vmul.f32 %v1399, 1.442695
  %v1473 = vpow.pop %v1472
  %v1474 = vmul.f32 %v1400, 1.442695
  %v1475 = vpow.pop %v1474
  %v1476 = vmul.f32 %v1401, 1.442695
  %v1477 = vpow.pop %v1476
  %v1478 = vmul.f32 %v1402, 1.442695
  %v1479 = vpow.pop %v1478
  %v1480 = vmul.f32 %v1403, 1.442695
  %v1481 = vpow.pop %v1480
  %v1482 = vmul.f32 %v1404, 1.442695
  %v1483 = vpow.pop %v1482
  %v1484 = vmul.f32 %v1405, 1.442695
  %v1485 = vpow.pop %v1484
  %v1486 = vmul.f32 %v1406, 1.442695
  %v1487 = vpow.pop %v1486
  %v1488 = vmul.f32 %v1407, 1.442695
  %v1489 = vpow.pop %v1488
  %v1490 = vmul.f32 %v1408, 1.442695
  %v1491 = vpow.pop %v1490
  %v1492 = vmul.f32 %v1409, 1.442695
  %v1493 = vpow.pop %v1492
  %v1494 = vmul.f32 %v1410, 1.442695
  %v1495 = vpow.pop %v1494
  %v1496 = vmul.f32 %v1411, 1.442695
  %v1497 = vpow.pop %v1496
  %v1498 = vmul.f32 %v1412, 1.442695
  %v1499 = vpow.pop %v1498
  %v1500 = vmul.f32 %v1413, 1.442695
  %v1501 = vpow.pop %v1500
  %v1502 = vmul.f32 %v1414, 1.442695
  %v1503 = vpow.pop %v1502
  %v1504 = vmul.f32 %v1415, 1.442695
  %v1505 = vpow.pop %v1504
  %v1506 = vmul.f32 %v1416, 1.442695
  %v1507 = vpow.pop %v1506
  %v1508 = vmul.f32 %v1417, 1.442695
  %v1509 = vpow.pop %v1508
  %v1510 = vmul.f32 %v1418, 1.442695
  %v1511 = vpow.pop %v1510
  %v1512 = vmul.f32 %v1419, 1.442695
  %v1513 = vpow.pop %v1512
  %v1514 = vmul.f32 %v1420, 1.442695
  %v1515 = vpow.pop %v1514
  %v1516 = vmul.f32 %v1421, 1.442695
  %v1517 = vpow.pop %v1516
  %v1518 = vmul.f32 %v1422, 1.442695
  %v1519 = vpow.pop %v1518
  %v1520 = vmul.f32 %v1423, 1.442695
  %v1521 = vpow.pop %v1520
  %v1522 = vmul.f32 %v1424, 1.442695
  %v1523 = vpow.pop %v1522
  %v1524 = vmul.f32 %v1425, 1.442695
  %v1525 = vpow.pop %v1524
  %v1526 = vmul.f32 %v1426, 1.442695
  %v1527 = vpow.pop %v1526
  %v1528 = vmul.f32 %v1427, 1.442695
  %v1529 = vpow.pop %v1528
  %v1530 = vmul.f32 %v1428, 1.442695
  %v1531 = vpow.pop %v1530
  %v1532 = vmul.f32 %v1429, 1.442695
  %v1533 = vpow.pop %v1532
  %v1534 = vmul.f32 %v1430, 1.442695
  %v1535 = vpow.pop %v1534
  %v1536 = vmul.f32 %v1431, 1.442695
  %v1537 = vpow.pop %v1536
  %v1538 = vmul.f32 %v1432, 1.442695
  %v1539 = vpow.pop %v1538
  %v1540 = vmul.f32 %v1433, 1.442695
  %v1541 = vpow.pop %v1540
  %v1542 = vmul.f32 %v1434, 1.442695
  %v1543 = vpow.pop %v1542
  %v1544 = vmul.f32 %v1435, 1.442695
  %v1545 = vpow.pop %v1544
  %v1546 = vmul.f32 %v1436, 1.442695
  %v1547 = vpow.pop %v1546
  %v1548 = vmul.f32 %v1437, 1.442695
  %v1549 = vpow.pop %v1548
  %v1550 = vmul.f32 %v1438, 1.442695
  %v1551 = vpow.pop %v1550
  %v1552 = vmul.f32 %v1439, 1.442695
  %v1553 = vpow.pop %v1552
  %v1554 = vmul.f32 %v1440, 1.442695
  %v1555 = vpow.pop %v1554
  %v1556 = vmul.f32 %v1441, 1.442695
  %v1557 = vpow.pop %v1556
  %v1558 = vmul.f32 %v1442, 1.442695
  %v1559 = vpow.pop %v1558
  %v1560 = vmul.f32 %v1443, 1.442695
  %v1561 = vpow.pop %v1560
  %v1562 = vmul.f32 %v1444, 1.442695
  %v1563 = vpow.pop %v1562
  %v1564 = vmul.f32 %v1445, 1.442695
  %v1565 = vpow.pop %v1564
  %v1566 = vmul.f32 %v1446, 1.442695
  %v1567 = vpow.pop %v1566
  %v1568 = vmul.f32 %v1447, 1.442695
  %v1569 = vpow.pop %v1568
  %v1570 = vmul.f32 %v1448, 1.442695
  %v1571 = vpow.pop %v1570
  %v1572 = vmul.f32 %v1449, 1.442695
  %v1573 = vpow.pop %v1572
  %v1574 = vmul.f32 %v1450, 1.442695
  %v1575 = vpow.pop %v1574
  %v1576 = vmul.f32 %v1451, 1.442695
  %v1577 = vpow.pop %v1576
  %v1578 = vmul.f32 %v1452, 1.442695
  %v1579 = vpow.pop %v1578
  %v1580 = vmul.f32 %v1453, 1.442695
  %v1581 = vpow.pop %v1580
  %v1582 = vpack.c.bf16 %v1459, %v1455
  %v1583 = vpack.c.bf16 %v1461, %v1457
  %v1584 = vpack.c.bf16 %v1467, %v1463
  %v1585 = vpack.c.bf16 %v1469, %v1465
  %v1586 = vpack.c.bf16 %v1475, %v1471
  %v1587 = vpack.c.bf16 %v1477, %v1473
  %v1588 = vpack.c.bf16 %v1483, %v1479
  %v1589 = vpack.c.bf16 %v1485, %v1481
  %v1590 = vpack.c.bf16 %v1491, %v1487
  %v1591 = vpack.c.bf16 %v1493, %v1489
  %v1592 = vpack.c.bf16 %v1499, %v1495
  %v1593 = vpack.c.bf16 %v1501, %v1497
  %v1594 = vpack.c.bf16 %v1507, %v1503
  %v1595 = vpack.c.bf16 %v1509, %v1505
  %v1596 = vpack.c.bf16 %v1515, %v1511
  %v1597 = vpack.c.bf16 %v1517, %v1513
  %v1598 = vpack.c.bf16 %v1523, %v1519
  %v1599 = vpack.c.bf16 %v1525, %v1521
  %v1600 = vpack.c.bf16 %v1531, %v1527
  %v1601 = vpack.c.bf16 %v1533, %v1529
  %v1602 = vpack.c.bf16 %v1539, %v1535
  %v1603 = vpack.c.bf16 %v1541, %v1537
  %v1604 = vpack.c.bf16 %v1547, %v1543
  %v1605 = vpack.c.bf16 %v1549, %v1545
  %v1606 = vpack.c.bf16 %v1555, %v1551
  %v1607 = vpack.c.bf16 %v1557, %v1553
  %v1608 = vpack.c.bf16 %v1563, %v1559
  %v1609 = vpack.c.bf16 %v1565, %v1561
  %v1610 = vpack.c.bf16 %v1571, %v1567
  %v1611 = vpack.c.bf16 %v1573, %v1569
  %v1612 = vpack.c.bf16 %v1579, %v1575
  %v1613 = vpack.c.bf16 %v1581, %v1577
  %v1614 = vpack.c.bf16 %v146, %v146
  %v1615 = vpack.c.bf16 %v166, %v166
  %v1618 = vrot.slane %v1614, 1
  %v1619 = vrot.slane %v1615, 1
  %1622 = vmatpush.bf16.msra.mxu0 %v1596
  %1623 = vmatpush.bf16.msra.mxu0 %v1594
  %1624 = vmatpush.bf16.msra.mxu0 %v1592
  %1625 = vmatpush.bf16.msra.mxu0 %v1590
  %1626 = vmatpush.bf16.msra.mxu0 %v1588
  %1627 = vmatpush.bf16.msra.mxu0 %v1586
  %1628 = vmatpush.bf16.msra.mxu0 %v1584
  %1629 = vmatpush.bf16.msra.mxu0 %v1582
  %1630 = vmatmul.bf16.gmra.mxu0 %v1618
  %v1631 = vpop.f32.mrf.mxu0
  %v1632 = vadd.f32 0.0, %v1631
  %v1633 = vpop.f32.mrf.mxu0
  %1634 = vdwg.mxu0
  %1635 = vmatpush.bf16.msra.mxu0 %v1612
  %1636 = vmatpush.bf16.msra.mxu0 %v1610
  %1637 = vmatpush.bf16.msra.mxu0 %v1608
  %1638 = vmatpush.bf16.msra.mxu0 %v1606
  %1639 = vmatpush.bf16.msra.mxu0 %v1604
  %1640 = vmatpush.bf16.msra.mxu0 %v1602
  %1641 = vmatpush.bf16.msra.mxu0 %v1600
  %1642 = vmatpush.bf16.msra.mxu0 %v1598
  %1643 = vmatmul.bf16.gmra.mxu0 %v1619
  %v1644 = vpop.f32.mrf.mxu0
  %v1645 = vadd.f32 %v1632, %v1644
  %v1646 = vpop.f32.mrf.mxu0
  %1647 = vdwg.mxu0
  %1648 = vmatpush.bf16.msra.mxu0 %v1597
  %1649 = vmatpush.bf16.msra.mxu0 %v1595
  %1650 = vmatpush.bf16.msra.mxu0 %v1593
  %1651 = vmatpush.bf16.msra.mxu0 %v1591
  %1652 = vmatpush.bf16.msra.mxu0 %v1589
  %1653 = vmatpush.bf16.msra.mxu0 %v1587
  %1654 = vmatpush.bf16.msra.mxu0 %v1585
  %1655 = vmatpush.bf16.msra.mxu0 %v1583
  %1656 = vmatmul.bf16.gmra.mxu0 %v1618
  %v1657 = vpop.f32.mrf.mxu0
  %v1658 = vadd.f32 0.0, %v1657
  %v1659 = vpop.f32.mrf.mxu0
  %1660 = vdwg.mxu0
  %1661 = vmatpush.bf16.msra.mxu0 %v1613
  %1662 = vmatpush.bf16.msra.mxu0 %v1611
  %1663 = vmatpush.bf16.msra.mxu0 %v1609
  %1664 = vmatpush.bf16.msra.mxu0 %v1607
  %1665 = vmatpush.bf16.msra.mxu0 %v1605
  %1666 = vmatpush.bf16.msra.mxu0 %v1603
  %1667 = vmatpush.bf16.msra.mxu0 %v1601
  %1668 = vmatpush.bf16.msra.mxu0 %v1599
  %1669 = vmatmul.bf16.gmra.mxu0 %v1619
  %v1670 = vpop.f32.mrf.mxu0
  %v1671 = vadd.f32 %v1658, %v1670
  %v1672 = vpop.f32.mrf.mxu0
  %1673 = vdwg.mxu0
  %v1674 = vrcp.pop %v1645
  %v1675 = vrcp.pop %v1671
  %v1676 = vperm.slane %v1674, 4
  %v1677 = vperm.slane %v1675, 4
  %v1678 = vmul.f32 %v1645, %v1676
  %v1679 = vmul.f32 %v1671, %v1677
  %v1680 = vadd.f32 %v928, %v1678
  %v1681 = vadd.f32 %v929, %v1679
  %v1683 = vrot.slane %v19, 4
  %v1684 = vrot.slane %v20, 4
  %v1685 = vsel %vm49, %v1683, %v1684
  %vm1690 = vcmask 1046528
  %v1691 = vrot.slane %v75, 1
  %v1692 = vrot.slane %v78, 1
  %v1693 = vsel %vm1690, %v1691, %v1692
  %v1694 = vrot.slane %v101, 1
  %v1695 = vrot.slane %v104, 1
  %v1696 = vsel %vm1690, %v1694, %v1695
  %v1701 = vsel %vm42, %v1685, 0
  %v1703 = vsel %vm42, %v1684, 0
  %v1706 = vsel %vm49, %v1680, 0
  %v1709 = vsel %vm49, %v1681, 0
  %1711 = vmatpush.msra.mxu0 0.0
  %1712 = vmatpush.msra.mxu0 0.0
  %1713 = vmatpush.msra.mxu0 0.0
  %1714 = vmatpush.msra.mxu0 0.0
  %1715 = vmatpush.msra.mxu0 0.0
  %1716 = vmatpush.msra.mxu0 0.0
  %1717 = vmatpush.msra.mxu0 0.0
  %1718 = vmatpush.msra.mxu0 0.0
  %1719 = vmatpush.msra.mxu0 0.0
  %1720 = vmatpush.msra.mxu0 0.0
  %1721 = vmatpush.msra.mxu0 0.0
  %1722 = vmatpush.msra.mxu0 0.0
  %1723 = vmatpush.msra.mxu0 0.0
  %1724 = vmatpush.msra.mxu0 0.0
  %1725 = vmatpush.msra.mxu0 0.0
  %1726 = vmatpush.msra.mxu0 %v1706
  %1727 = vmatmul.f32.gmra.mxu0 %v1701
  %v1728 = vpop.f32.mrf.mxu0
  %v1729 = vadd.f32 %v1693, %v1728
  %1730 = vmatmul.f32.gmra.mxu0 %v1703
  %v1731 = vpop.f32.mrf.mxu0
  %v1732 = vadd.f32 %v1692, %v1731
  %1733 = vdwg.mxu0
  %1734 = vmatpush.msra.mxu0 0.0
  %1735 = vmatpush.msra.mxu0 0.0
  %1736 = vmatpush.msra.mxu0 0.0
  %1737 = vmatpush.msra.mxu0 0.0
  %1738 = vmatpush.msra.mxu0 0.0
  %1739 = vmatpush.msra.mxu0 0.0
  %1740 = vmatpush.msra.mxu0 0.0
  %1741 = vmatpush.msra.mxu0 0.0
  %1742 = vmatpush.msra.mxu0 0.0
  %1743 = vmatpush.msra.mxu0 0.0
  %1744 = vmatpush.msra.mxu0 0.0
  %1745 = vmatpush.msra.mxu0 0.0
  %1746 = vmatpush.msra.mxu0 0.0
  %1747 = vmatpush.msra.mxu0 0.0
  %1748 = vmatpush.msra.mxu0 0.0
  %1749 = vmatpush.msra.mxu0 %v1709
  %1750 = vmatmul.f32.gmra.mxu0 %v1701
  %v1751 = vpop.f32.mrf.mxu0
  %v1752 = vadd.f32 %v1696, %v1751
  %1753 = vmatmul.f32.gmra.mxu0 %v1703
  %v1754 = vpop.f32.mrf.mxu0
  %v1755 = vadd.f32 %v1695, %v1754
  %1756 = vdwg.mxu0
  %v1757 = vxor.u32 %v1729, 2147483648
  %v1758 = vxor.u32 %v1752, 2147483648
  %v1759 = vmul.f32 %v1757, 1.442695
  %v1760 = vpow.pop %v1759
  %v1761 = vmul.f32 %v1758, 1.442695
  %v1762 = vpow.pop %v1761
  %v1763 = vadd.f32 %v1760, 1.0
  %v1764 = vadd.f32 %v1762, 1.0
  %v1765 = vrcp.pop %v1763
  %v1766 = vmul.f32 %v1763, %v1765
  %v1767 = vsub.f32 1.0, %v1766
  %v1768 = vmul.f32 %v1765, %v1767
  %v1769 = vadd.f32 %v1765, %v1768
  %vm1770 = vweird.f32 %v1763
  %vm1771 = vweird.f32 %v1765
  %vm1772 = vmor %vm1770, %vm1771
  %v1773 = vsel %vm1772, %v1765, %v1769
  %v1774 = vand.u32 2147483647, %v1763
  %vm1775 = vcmp.eq.f32.partialorder %v1774, 8.507059e+37
  %v1776 = vand.u32 %v1763, 2147483648
  %v1777 = vor.u32 1.1754944e-38, %v1776
  %v1778 = vsel %vm1775, %v1777, %v1773
  %v1779 = vmul.f32 1.0, %v1778
  %v1780 = vrcp.pop %v1764
  %v1781 = vmul.f32 %v1764, %v1780
  %v1782 = vsub.f32 1.0, %v1781
  %v1783 = vmul.f32 %v1780, %v1782
  %v1784 = vadd.f32 %v1780, %v1783
  %vm1785 = vweird.f32 %v1764
  %vm1786 = vweird.f32 %v1780
  %vm1787 = vmor %vm1785, %vm1786
  %v1788 = vsel %vm1787, %v1780, %v1784
  %v1789 = vand.u32 2147483647, %v1764
  %vm1790 = vcmp.eq.f32.partialorder %v1789, 8.507059e+37
  %v1791 = vand.u32 %v1764, 2147483648
  %v1792 = vor.u32 1.1754944e-38, %v1791
  %v1793 = vsel %vm1790, %v1792, %v1788
  %v1794 = vmul.f32 1.0, %v1793
  %v1795 = vtanh.pop %v1729
  %v1796 = vtanh.pop %v1752
  %v1797 = vxor.u32 %v1732, 2147483648
  %v1798 = vxor.u32 %v1755, 2147483648
  %v1799 = vmul.f32 %v1797, 1.442695
  %v1800 = vpow.pop %v1799
  %v1801 = vmul.f32 %v1798, 1.442695
  %v1802 = vpow.pop %v1801
  %v1803 = vadd.f32 %v1800, 1.0
  %v1804 = vadd.f32 %v1802, 1.0
  %v1805 = vrcp.pop %v1803
  %v1806 = vmul.f32 %v1803, %v1805
  %v1807 = vsub.f32 1.0, %v1806
  %v1808 = vmul.f32 %v1805, %v1807
  %v1809 = vadd.f32 %v1805, %v1808
  %vm1810 = vweird.f32 %v1803
  %vm1811 = vweird.f32 %v1805
  %vm1812 = vmor %vm1810, %vm1811
  %v1813 = vsel %vm1812, %v1805, %v1809
  %v1814 = vand.u32 2147483647, %v1803
  %vm1815 = vcmp.eq.f32.partialorder %v1814, 8.507059e+37
  %v1816 = vand.u32 %v1803, 2147483648
  %v1817 = vor.u32 1.1754944e-38, %v1816
  %v1818 = vsel %vm1815, %v1817, %v1813
  %v1819 = vmul.f32 1.0, %v1818
  %v1820 = vrcp.pop %v1804
  %v1821 = vmul.f32 %v1804, %v1820
  %v1822 = vsub.f32 1.0, %v1821
  %v1823 = vmul.f32 %v1820, %v1822
  %v1824 = vadd.f32 %v1820, %v1823
  %vm1825 = vweird.f32 %v1804
  %vm1826 = vweird.f32 %v1820
  %vm1827 = vmor %vm1825, %vm1826
  %v1828 = vsel %vm1827, %v1820, %v1824
  %v1829 = vand.u32 2147483647, %v1804
  %vm1830 = vcmp.eq.f32.partialorder %v1829, 8.507059e+37
  %v1831 = vand.u32 %v1804, 2147483648
  %v1832 = vor.u32 1.1754944e-38, %v1831
  %v1833 = vsel %vm1830, %v1832, %v1828
  %v1834 = vmul.f32 1.0, %v1833
  %v1835 = vsub.f32 1.0, %v1779
  %v1836 = vsub.f32 1.0, %v1794
  %1837 = vst [vmem:[#allocation1] ss:$2 sm:$0xff] %v22
  %v1838 = vld.sshfl [vmem:[#allocation1] sm:$0xff pattern:$0x75316420]
  %v1839 = vld.sshfl [vmem:[#allocation1 + $0x8] sm:$0xff pattern:$0x75316420]
  %v1842 = vmul.f32 %v1835, %v1838
  %v1843 = vmul.f32 %v1836, %v1839
  %v1846 = vrot.slane %v1795, 4
  %v1847 = vrot.slane %v1796, 4
  %v1850 = vmul.f32 %v1779, %v1846
  %v1851 = vmul.f32 %v1794, %v1847
  %v1852 = vadd.f32 %v1842, %v1850
  %v1853 = vadd.f32 %v1843, %v1851
  %v1854 = vmul.f32 %v1819, %v1852
  %v1855 = vmul.f32 %v1834, %v1853
  %v1858 = vrot.slane %v1855, 4
  %v1859 = vsel %vm49, %v1854, %v1858
  %1861 = vst [vmem:[%s3] sm:$0xff] %v1859
  %v1864 = vrot.slane %v1853, 4
  %v1865 = vsel %vm49, %v1852, %v1864
  %1867 = vst [vmem:[%s4] sm:$0xff] %v1865
  %s1868 = scalar_lea.vmem %s1, 8
  %v1869 = vld [vmem:[%s1868] sm:$0xff]
  %s1870 = scalar_lea.vmem %s2, 8
  %v1871 = vld [vmem:[%s1870] sm:$0xff]
  %1873 = vst [vmem:[#allocation1] ss:$2 sm:$0xff] %v1869
  %v1874 = vld.sshfl [vmem:[#allocation1] sm:$0xff pattern:$0x75316420]
  %v1875 = vld.sshfl [vmem:[#allocation1 + $0x8] sm:$0xff pattern:$0x75316420]
  %v1876 = vsel %vm49, %v1874, 0
  %v1878 = vsel %vm49, %v1875, 0
  %1880 = vmatpush.msra.mxu0 0.0
  %1881 = vmatpush.msra.mxu0 0.0
  %1882 = vmatpush.msra.mxu0 0.0
  %1883 = vmatpush.msra.mxu0 0.0
  %1884 = vmatpush.msra.mxu0 0.0
  %1885 = vmatpush.msra.mxu0 0.0
  %1886 = vmatpush.msra.mxu0 0.0
  %1887 = vmatpush.msra.mxu0 0.0
  %1888 = vmatpush.msra.mxu0 0.0
  %1889 = vmatpush.msra.mxu0 0.0
  %1890 = vmatpush.msra.mxu0 0.0
  %1891 = vmatpush.msra.mxu0 0.0
  %1892 = vmatpush.msra.mxu0 0.0
  %1893 = vmatpush.msra.mxu0 0.0
  %1894 = vmatpush.msra.mxu0 0.0
  %1895 = vmatpush.msra.mxu0 %v1876
  %1896 = vmatmul.f32.gmra.mxu0 %v43
  %v1897 = vpop.f32.mrf.mxu0
  %v1898 = vadd.f32 %v26, %v1897
  %1899 = vmatmul.f32.gmra.mxu0 %v45
  %v1900 = vpop.f32.mrf.mxu0
  %v1901 = vadd.f32 %v31, %v1900
  %1902 = vmatmul.f32.gmra.mxu0 %v47
  %v1903 = vpop.f32.mrf.mxu0
  %v1904 = vadd.f32 %v36, %v1903
  %1905 = vdwg.mxu0
  %1906 = vmatpush.msra.mxu0 0.0
  %1907 = vmatpush.msra.mxu0 0.0
  %1908 = vmatpush.msra.mxu0 0.0
  %1909 = vmatpush.msra.mxu0 0.0
  %1910 = vmatpush.msra.mxu0 0.0
  %1911 = vmatpush.msra.mxu0 0.0
  %1912 = vmatpush.msra.mxu0 0.0
  %1913 = vmatpush.msra.mxu0 0.0
  %1914 = vmatpush.msra.mxu0 0.0
  %1915 = vmatpush.msra.mxu0 0.0
  %1916 = vmatpush.msra.mxu0 0.0
  %1917 = vmatpush.msra.mxu0 0.0
  %1918 = vmatpush.msra.mxu0 0.0
  %1919 = vmatpush.msra.mxu0 0.0
  %1920 = vmatpush.msra.mxu0 0.0
  %1921 = vmatpush.msra.mxu0 %v1878
  %1922 = vmatmul.f32.gmra.mxu0 %v43
  %v1923 = vpop.f32.mrf.mxu0
  %v1924 = vadd.f32 %v26, %v1923
  %1925 = vmatmul.f32.gmra.mxu0 %v45
  %v1926 = vpop.f32.mrf.mxu0
  %v1927 = vadd.f32 %v31, %v1926
  %1928 = vmatmul.f32.gmra.mxu0 %v47
  %v1929 = vpop.f32.mrf.mxu0
  %v1930 = vadd.f32 %v36, %v1929
  %1931 = vdwg.mxu0
  %1933 = vst [vmem:[#allocation1] ss:$2 sm:$0xff] %v1871
  %v1934 = vld.sshfl [vmem:[#allocation1] sm:$0xff pattern:$0x75316420]
  %v1935 = vld.sshfl [vmem:[#allocation1 + $0x8] sm:$0xff pattern:$0x75316420]
  %v1936 = vsel %vm49, %v1934, 0
  %v1938 = vsel %vm49, %v1935, 0
  %1940 = vmatpush.msra.mxu0 0.0
  %1941 = vmatpush.msra.mxu0 0.0
  %1942 = vmatpush.msra.mxu0 0.0
  %1943 = vmatpush.msra.mxu0 0.0
  %1944 = vmatpush.msra.mxu0 0.0
  %1945 = vmatpush.msra.mxu0 0.0
  %1946 = vmatpush.msra.mxu0 0.0
  %1947 = vmatpush.msra.mxu0 0.0
  %1948 = vmatpush.msra.mxu0 0.0
  %1949 = vmatpush.msra.mxu0 0.0
  %1950 = vmatpush.msra.mxu0 0.0
  %1951 = vmatpush.msra.mxu0 0.0
  %1952 = vmatpush.msra.mxu0 0.0
  %1953 = vmatpush.msra.mxu0 0.0
  %1954 = vmatpush.msra.mxu0 0.0
  %1955 = vmatpush.msra.mxu0 %v1936
  %1956 = vmatmul.f32.gmra.mxu0 %v122
  %v1957 = vpop.f32.mrf.mxu0
  %v1958 = vadd.f32 %v120, %v1957
  %1959 = vdwg.mxu0
  %1960 = vmatpush.msra.mxu0 0.0
  %1961 = vmatpush.msra.mxu0 0.0
  %1962 = vmatpush.msra.mxu0 0.0
  %1963 = vmatpush.msra.mxu0 0.0
  %1964 = vmatpush.msra.mxu0 0.0
  %1965 = vmatpush.msra.mxu0 0.0
  %1966 = vmatpush.msra.mxu0 0.0
  %1967 = vmatpush.msra.mxu0 0.0
  %1968 = vmatpush.msra.mxu0 0.0
  %1969 = vmatpush.msra.mxu0 0.0
  %1970 = vmatpush.msra.mxu0 0.0
  %1971 = vmatpush.msra.mxu0 0.0
  %1972 = vmatpush.msra.mxu0 0.0
  %1973 = vmatpush.msra.mxu0 0.0
  %1974 = vmatpush.msra.mxu0 0.0
  %1975 = vmatpush.msra.mxu0 %v1938
  %1976 = vmatmul.f32.gmra.mxu0 %v122
  %v1977 = vpop.f32.mrf.mxu0
  %v1978 = vadd.f32 %v120, %v1977
  %1979 = vdwg.mxu0
  %v1982 = vrot.slane %v1898, 2
  %v1983 = vrot.slane %v1924, 2
  %1986 = vxpose.xlu0.b32.start [1/16] %v1982, 128
  %1987 = vxpose.xlu0.b32.cont [2/16] 0.0, 128
  %1988 = vxpose.xlu0.b32.cont [3/16] 0.0, 128
  %1989 = vxpose.xlu0.b32.cont [4/16] 0.0, 128
  %1990 = vxpose.xlu0.b32.cont [5/16] 0.0, 128
  %1991 = vxpose.xlu0.b32.cont [6/16] 0.0, 128
  %1992 = vxpose.xlu0.b32.cont [7/16] 0.0, 128
  %1993 = vxpose.xlu0.b32.cont [8/16] 0.0, 128
  %1994 = vxpose.xlu0.b32.cont [9/16] 0.0, 128
  %1995 = vxpose.xlu0.b32.cont [10/16] 0.0, 128
  %1996 = vxpose.xlu0.b32.cont [11/16] 0.0, 128
  %1997 = vxpose.xlu0.b32.cont [12/16] 0.0, 128
  %1998 = vxpose.xlu0.b32.cont [13/16] 0.0, 128
  %1999 = vxpose.xlu0.b32.cont [14/16] 0.0, 128
  %2000 = vxpose.xlu0.b32.cont [15/16] 0.0, 128
  %2001 = vxpose.xlu0.b32.end [16/16] 0.0, 128
  %v2002 = vpop.trf.xlu0
  %v2003 = vpop.trf.xlu0
  %v2004 = vpop.trf.xlu0
  %v2005 = vpop.trf.xlu0
  %v2006 = vpop.trf.xlu0
  %v2007 = vpop.trf.xlu0
  %v2008 = vpop.trf.xlu0
  %v2009 = vpop.trf.xlu0
  %v2010 = vpop.trf.xlu0
  %v2011 = vpop.trf.xlu0
  %v2012 = vpop.trf.xlu0
  %v2013 = vpop.trf.xlu0
  %v2014 = vpop.trf.xlu0
  %v2015 = vpop.trf.xlu0
  %v2016 = vpop.trf.xlu0
  %v2017 = vpop.trf.xlu0
  %2018 = vxpose.xlu0.b32.start [1/16] %v1983, 128
  %2019 = vxpose.xlu0.b32.cont [2/16] 0.0, 128
  %2020 = vxpose.xlu0.b32.cont [3/16] 0.0, 128
  %2021 = vxpose.xlu0.b32.cont [4/16] 0.0, 128
  %2022 = vxpose.xlu0.b32.cont [5/16] 0.0, 128
  %2023 = vxpose.xlu0.b32.cont [6/16] 0.0, 128
  %2024 = vxpose.xlu0.b32.cont [7/16] 0.0, 128
  %2025 = vxpose.xlu0.b32.cont [8/16] 0.0, 128
  %2026 = vxpose.xlu0.b32.cont [9/16] 0.0, 128
  %2027 = vxpose.xlu0.b32.cont [10/16] 0.0, 128
  %2028 = vxpose.xlu0.b32.cont [11/16] 0.0, 128
  %2029 = vxpose.xlu0.b32.cont [12/16] 0.0, 128
  %2030 = vxpose.xlu0.b32.cont [13/16] 0.0, 128
  %2031 = vxpose.xlu0.b32.cont [14/16] 0.0, 128
  %2032 = vxpose.xlu0.b32.cont [15/16] 0.0, 128
  %2033 = vxpose.xlu0.b32.end [16/16] 0.0, 128
  %v2034 = vpop.trf.xlu0
  %v2035 = vpop.trf.xlu0
  %v2036 = vpop.trf.xlu0
  %v2037 = vpop.trf.xlu0
  %v2038 = vpop.trf.xlu0
  %v2039 = vpop.trf.xlu0
  %v2040 = vpop.trf.xlu0
  %v2041 = vpop.trf.xlu0
  %v2042 = vpop.trf.xlu0
  %v2043 = vpop.trf.xlu0
  %v2044 = vpop.trf.xlu0
  %v2045 = vpop.trf.xlu0
  %v2046 = vpop.trf.xlu0
  %v2047 = vpop.trf.xlu0
  %v2048 = vpop.trf.xlu0
  %v2049 = vpop.trf.xlu0
  %v2051 = vsel %vm238, %v2002, 0
  %v2054 = vsel %vm238, %v2003, 0
  %v2057 = vsel %vm238, %v2004, 0
  %v2060 = vsel %vm238, %v2005, 0
  %v2063 = vsel %vm238, %v2006, 0
  %v2066 = vsel %vm238, %v2007, 0
  %v2069 = vsel %vm238, %v2008, 0
  %v2072 = vsel %vm238, %v2009, 0
  %v2075 = vsel %vm238, %v2010, 0
  %v2078 = vsel %vm238, %v2011, 0
  %v2081 = vsel %vm238, %v2012, 0
  %v2084 = vsel %vm238, %v2013, 0
  %v2087 = vsel %vm238, %v2014, 0
  %v2090 = vsel %vm238, %v2015, 0
  %v2093 = vsel %vm238, %v2016, 0
  %v2096 = vsel %vm238, %v2017, 0
  %v2099 = vsel %vm238, %v2034, 0
  %v2102 = vsel %vm238, %v2035, 0
  %v2105 = vsel %vm238, %v2036, 0
  %v2108 = vsel %vm238, %v2037, 0
  %v2111 = vsel %vm238, %v2038, 0
  %v2114 = vsel %vm238, %v2039, 0
  %v2117 = vsel %vm238, %v2040, 0
  %v2120 = vsel %vm238, %v2041, 0
  %v2123 = vsel %vm238, %v2042, 0
  %v2126 = vsel %vm238, %v2043, 0
  %v2129 = vsel %vm238, %v2044, 0
  %v2132 = vsel %vm238, %v2045, 0
  %v2135 = vsel %vm238, %v2046, 0
  %v2138 = vsel %vm238, %v2047, 0
  %v2141 = vsel %vm238, %v2048, 0
  %v2144 = vsel %vm238, %v2049, 0
  %v2146 = vsel %vm335, %v1898, 0
  %v2148 = vsel %vm335, %v1924, 0
  %2150 = vmatpush.msra.mxu0 0.0
  %2151 = vmatpush.msra.mxu0 0.0
  %2152 = vmatpush.msra.mxu0 0.0
  %2153 = vmatpush.msra.mxu0 0.0
  %2154 = vmatpush.msra.mxu0 0.0
  %2155 = vmatpush.msra.mxu0 0.0
  %2156 = vmatpush.msra.mxu0 0.0
  %2157 = vmatpush.msra.mxu0 0.0
  %2158 = vmatpush.msra.mxu0 0.0
  %2159 = vmatpush.msra.mxu0 0.0
  %2160 = vmatpush.msra.mxu0 0.0
  %2161 = vmatpush.msra.mxu0 0.0
  %2162 = vmatpush.msra.mxu0 0.0
  %2163 = vmatpush.msra.mxu0 0.0
  %2164 = vmatpush.msra.mxu0 0.0
  %2165 = vmatpush.msra.mxu0 %v2146
  %2166 = vmatmul.f32.gmra.mxu0 %v2051
  %v2167 = vpop.f32.mrf.mxu0
  %v2168 = vadd.f32 0.0, %v2167
  %2169 = vmatmul.f32.gmra.mxu0 %v2054
  %v2170 = vpop.f32.mrf.mxu0
  %v2171 = vadd.f32 0.0, %v2170
  %2172 = vmatmul.f32.gmra.mxu0 %v2057
  %v2173 = vpop.f32.mrf.mxu0
  %v2174 = vadd.f32 0.0, %v2173
  %2175 = vmatmul.f32.gmra.mxu0 %v2060
  %v2176 = vpop.f32.mrf.mxu0
  %v2177 = vadd.f32 0.0, %v2176
  %2178 = vmatmul.f32.gmra.mxu0 %v2063
  %v2179 = vpop.f32.mrf.mxu0
  %v2180 = vadd.f32 0.0, %v2179
  %2181 = vmatmul.f32.gmra.mxu0 %v2066
  %v2182 = vpop.f32.mrf.mxu0
  %v2183 = vadd.f32 0.0, %v2182
  %2184 = vmatmul.f32.gmra.mxu0 %v2069
  %v2185 = vpop.f32.mrf.mxu0
  %v2186 = vadd.f32 0.0, %v2185
  %2187 = vmatmul.f32.gmra.mxu0 %v2072
  %v2188 = vpop.f32.mrf.mxu0
  %v2189 = vadd.f32 0.0, %v2188
  %2190 = vmatmul.f32.gmra.mxu0 %v2075
  %v2191 = vpop.f32.mrf.mxu0
  %v2192 = vadd.f32 0.0, %v2191
  %2193 = vmatmul.f32.gmra.mxu0 %v2078
  %v2194 = vpop.f32.mrf.mxu0
  %v2195 = vadd.f32 0.0, %v2194
  %2196 = vmatmul.f32.gmra.mxu0 %v2081
  %v2197 = vpop.f32.mrf.mxu0
  %v2198 = vadd.f32 0.0, %v2197
  %2199 = vmatmul.f32.gmra.mxu0 %v2084
  %v2200 = vpop.f32.mrf.mxu0
  %v2201 = vadd.f32 0.0, %v2200
  %2202 = vmatmul.f32.gmra.mxu0 %v2087
  %v2203 = vpop.f32.mrf.mxu0
  %v2204 = vadd.f32 0.0, %v2203
  %2205 = vmatmul.f32.gmra.mxu0 %v2090
  %v2206 = vpop.f32.mrf.mxu0
  %v2207 = vadd.f32 0.0, %v2206
  %2208 = vmatmul.f32.gmra.mxu0 %v2093
  %v2209 = vpop.f32.mrf.mxu0
  %v2210 = vadd.f32 0.0, %v2209
  %2211 = vmatmul.f32.gmra.mxu0 %v2096
  %v2212 = vpop.f32.mrf.mxu0
  %v2213 = vadd.f32 0.0, %v2212
  %2214 = vmatmul.f32.gmra.mxu0 %v2099
  %v2215 = vpop.f32.mrf.mxu0
  %v2216 = vadd.f32 0.0, %v2215
  %2217 = vmatmul.f32.gmra.mxu0 %v2102
  %v2218 = vpop.f32.mrf.mxu0
  %v2219 = vadd.f32 0.0, %v2218
  %2220 = vmatmul.f32.gmra.mxu0 %v2105
  %v2221 = vpop.f32.mrf.mxu0
  %v2222 = vadd.f32 0.0, %v2221
  %2223 = vmatmul.f32.gmra.mxu0 %v2108
  %v2224 = vpop.f32.mrf.mxu0
  %v2225 = vadd.f32 0.0, %v2224
  %2226 = vmatmul.f32.gmra.mxu0 %v2111
  %v2227 = vpop.f32.mrf.mxu0
  %v2228 = vadd.f32 0.0, %v2227
  %2229 = vmatmul.f32.gmra.mxu0 %v2114
  %v2230 = vpop.f32.mrf.mxu0
  %v2231 = vadd.f32 0.0, %v2230
  %2232 = vmatmul.f32.gmra.mxu0 %v2117
  %v2233 = vpop.f32.mrf.mxu0
  %v2234 = vadd.f32 0.0, %v2233
  %2235 = vmatmul.f32.gmra.mxu0 %v2120
  %v2236 = vpop.f32.mrf.mxu0
  %v2237 = vadd.f32 0.0, %v2236
  %2238 = vmatmul.f32.gmra.mxu0 %v2123
  %v2239 = vpop.f32.mrf.mxu0
  %v2240 = vadd.f32 0.0, %v2239
  %2241 = vmatmul.f32.gmra.mxu0 %v2126
  %v2242 = vpop.f32.mrf.mxu0
  %v2243 = vadd.f32 0.0, %v2242
  %2244 = vmatmul.f32.gmra.mxu0 %v2129
  %v2245 = vpop.f32.mrf.mxu0
  %v2246 = vadd.f32 0.0, %v2245
  %2247 = vmatmul.f32.gmra.mxu0 %v2132
  %v2248 = vpop.f32.mrf.mxu0
  %v2249 = vadd.f32 0.0, %v2248
  %2250 = vmatmul.f32.gmra.mxu0 %v2135
  %v2251 = vpop.f32.mrf.mxu0
  %v2252 = vadd.f32 0.0, %v2251
  %2253 = vmatmul.f32.gmra.mxu0 %v2138
  %v2254 = vpop.f32.mrf.mxu0
  %v2255 = vadd.f32 0.0, %v2254
  %2256 = vmatmul.f32.gmra.mxu0 %v2141
  %v2257 = vpop.f32.mrf.mxu0
  %v2258 = vadd.f32 0.0, %v2257
  %2259 = vmatmul.f32.gmra.mxu0 %v2144
  %v2260 = vpop.f32.mrf.mxu0
  %v2261 = vadd.f32 0.0, %v2260
  %2262 = vdwg.mxu0
  %2263 = vmatpush.msra.mxu0 0.0
  %2264 = vmatpush.msra.mxu0 0.0
  %2265 = vmatpush.msra.mxu0 0.0
  %2266 = vmatpush.msra.mxu0 0.0
  %2267 = vmatpush.msra.mxu0 0.0
  %2268 = vmatpush.msra.mxu0 0.0
  %2269 = vmatpush.msra.mxu0 0.0
  %2270 = vmatpush.msra.mxu0 0.0
  %2271 = vmatpush.msra.mxu0 0.0
  %2272 = vmatpush.msra.mxu0 0.0
  %2273 = vmatpush.msra.mxu0 0.0
  %2274 = vmatpush.msra.mxu0 0.0
  %2275 = vmatpush.msra.mxu0 0.0
  %2276 = vmatpush.msra.mxu0 0.0
  %2277 = vmatpush.msra.mxu0 0.0
  %2278 = vmatpush.msra.mxu0 %v2148
  %2279 = vmatmul.f32.gmra.mxu0 %v2051
  %v2280 = vpop.f32.mrf.mxu0
  %v2281 = vadd.f32 0.0, %v2280
  %2282 = vmatmul.f32.gmra.mxu0 %v2054
  %v2283 = vpop.f32.mrf.mxu0
  %v2284 = vadd.f32 0.0, %v2283
  %2285 = vmatmul.f32.gmra.mxu0 %v2057
  %v2286 = vpop.f32.mrf.mxu0
  %v2287 = vadd.f32 0.0, %v2286
  %2288 = vmatmul.f32.gmra.mxu0 %v2060
  %v2289 = vpop.f32.mrf.mxu0
  %v2290 = vadd.f32 0.0, %v2289
  %2291 = vmatmul.f32.gmra.mxu0 %v2063
  %v2292 = vpop.f32.mrf.mxu0
  %v2293 = vadd.f32 0.0, %v2292
  %2294 = vmatmul.f32.gmra.mxu0 %v2066
  %v2295 = vpop.f32.mrf.mxu0
  %v2296 = vadd.f32 0.0, %v2295
  %2297 = vmatmul.f32.gmra.mxu0 %v2069
  %v2298 = vpop.f32.mrf.mxu0
  %v2299 = vadd.f32 0.0, %v2298
  %2300 = vmatmul.f32.gmra.mxu0 %v2072
  %v2301 = vpop.f32.mrf.mxu0
  %v2302 = vadd.f32 0.0, %v2301
  %2303 = vmatmul.f32.gmra.mxu0 %v2075
  %v2304 = vpop.f32.mrf.mxu0
  %v2305 = vadd.f32 0.0, %v2304
  %2306 = vmatmul.f32.gmra.mxu0 %v2078
  %v2307 = vpop.f32.mrf.mxu0
  %v2308 = vadd.f32 0.0, %v2307
  %2309 = vmatmul.f32.gmra.mxu0 %v2081
  %v2310 = vpop.f32.mrf.mxu0
  %v2311 = vadd.f32 0.0, %v2310
  %2312 = vmatmul.f32.gmra.mxu0 %v2084
  %v2313 = vpop.f32.mrf.mxu0
  %v2314 = vadd.f32 0.0, %v2313
  %2315 = vmatmul.f32.gmra.mxu0 %v2087
  %v2316 = vpop.f32.mrf.mxu0
  %v2317 = vadd.f32 0.0, %v2316
  %2318 = vmatmul.f32.gmra.mxu0 %v2090
  %v2319 = vpop.f32.mrf.mxu0
  %v2320 = vadd.f32 0.0, %v2319
  %2321 = vmatmul.f32.gmra.mxu0 %v2093
  %v2322 = vpop.f32.mrf.mxu0
  %v2323 = vadd.f32 0.0, %v2322
  %2324 = vmatmul.f32.gmra.mxu0 %v2096
  %v2325 = vpop.f32.mrf.mxu0
  %v2326 = vadd.f32 0.0, %v2325
  %2327 = vmatmul.f32.gmra.mxu0 %v2099
  %v2328 = vpop.f32.mrf.mxu0
  %v2329 = vadd.f32 0.0, %v2328
  %2330 = vmatmul.f32.gmra.mxu0 %v2102
  %v2331 = vpop.f32.mrf.mxu0
  %v2332 = vadd.f32 0.0, %v2331
  %2333 = vmatmul.f32.gmra.mxu0 %v2105
  %v2334 = vpop.f32.mrf.mxu0
  %v2335 = vadd.f32 0.0, %v2334
  %2336 = vmatmul.f32.gmra.mxu0 %v2108
  %v2337 = vpop.f32.mrf.mxu0
  %v2338 = vadd.f32 0.0, %v2337
  %2339 = vmatmul.f32.gmra.mxu0 %v2111
  %v2340 = vpop.f32.mrf.mxu0
  %v2341 = vadd.f32 0.0, %v2340
  %2342 = vmatmul.f32.gmra.mxu0 %v2114
  %v2343 = vpop.f32.mrf.mxu0
  %v2344 = vadd.f32 0.0, %v2343
  %2345 = vmatmul.f32.gmra.mxu0 %v2117
  %v2346 = vpop.f32.mrf.mxu0
  %v2347 = vadd.f32 0.0, %v2346
  %2348 = vmatmul.f32.gmra.mxu0 %v2120
  %v2349 = vpop.f32.mrf.mxu0
  %v2350 = vadd.f32 0.0, %v2349
  %2351 = vmatmul.f32.gmra.mxu0 %v2123
  %v2352 = vpop.f32.mrf.mxu0
  %v2353 = vadd.f32 0.0, %v2352
  %2354 = vmatmul.f32.gmra.mxu0 %v2126
  %v2355 = vpop.f32.mrf.mxu0
  %v2356 = vadd.f32 0.0, %v2355
  %2357 = vmatmul.f32.gmra.mxu0 %v2129
  %v2358 = vpop.f32.mrf.mxu0
  %v2359 = vadd.f32 0.0, %v2358
  %2360 = vmatmul.f32.gmra.mxu0 %v2132
  %v2361 = vpop.f32.mrf.mxu0
  %v2362 = vadd.f32 0.0, %v2361
  %2363 = vmatmul.f32.gmra.mxu0 %v2135
  %v2364 = vpop.f32.mrf.mxu0
  %v2365 = vadd.f32 0.0, %v2364
  %2366 = vmatmul.f32.gmra.mxu0 %v2138
  %v2367 = vpop.f32.mrf.mxu0
  %v2368 = vadd.f32 0.0, %v2367
  %2369 = vmatmul.f32.gmra.mxu0 %v2141
  %v2370 = vpop.f32.mrf.mxu0
  %v2371 = vadd.f32 0.0, %v2370
  %2372 = vmatmul.f32.gmra.mxu0 %v2144
  %v2373 = vpop.f32.mrf.mxu0
  %v2374 = vadd.f32 0.0, %v2373
  %2375 = vdwg.mxu0
  %v2376 = vmax.f32 %v2168, %v2174
  %v2377 = vmax.f32 %v2171, %v2177
  %v2378 = vmax.f32 %v2376, %v2180
  %v2379 = vmax.f32 %v2377, %v2183
  %v2380 = vmax.f32 %v2378, %v2186
  %v2381 = vmax.f32 %v2379, %v2189
  %v2382 = vmax.f32 %v2380, %v2192
  %v2383 = vmax.f32 %v2381, %v2195
  %v2384 = vmax.f32 %v2382, %v2198
  %v2385 = vmax.f32 %v2383, %v2201
  %v2386 = vmax.f32 %v2384, %v2204
  %v2387 = vmax.f32 %v2385, %v2207
  %v2388 = vmax.f32 %v2386, %v2210
  %v2389 = vmax.f32 %v2387, %v2213
  %v2390 = vmax.f32 %v2388, %v2216
  %v2391 = vmax.f32 %v2389, %v2219
  %v2392 = vmax.f32 %v2390, %v2222
  %v2393 = vmax.f32 %v2391, %v2225
  %v2394 = vmax.f32 %v2392, %v2228
  %v2395 = vmax.f32 %v2393, %v2231
  %v2396 = vmax.f32 %v2394, %v2234
  %v2397 = vmax.f32 %v2395, %v2237
  %v2398 = vmax.f32 %v2396, %v2240
  %v2399 = vmax.f32 %v2397, %v2243
  %v2400 = vmax.f32 %v2398, %v2246
  %v2401 = vmax.f32 %v2399, %v2249
  %v2402 = vmax.f32 %v2400, %v2252
  %v2403 = vmax.f32 %v2401, %v2255
  %v2404 = vmax.f32 %v2402, %v2258
  %v2405 = vmax.f32 %v2403, %v2261
  %v2406 = vmax.f32 %v2404, %v2405
  %v2407 = vrot.slane %v2406, 4
  %v2408 = vmax.f32 %v2406, %v2407
  %v2409 = vrot.slane %v2408, 2
  %v2410 = vmax.f32 %v2408, %v2409
  %v2411 = vrot.slane %v2410, 1
  %v2412 = vmax.f32 %v2410, %v2411
  %v2413 = vmax.f32 %v2281, %v2287
  %v2414 = vmax.f32 %v2284, %v2290
  %v2415 = vmax.f32 %v2413, %v2293
  %v2416 = vmax.f32 %v2414, %v2296
  %v2417 = vmax.f32 %v2415, %v2299
  %v2418 = vmax.f32 %v2416, %v2302
  %v2419 = vmax.f32 %v2417, %v2305
  %v2420 = vmax.f32 %v2418, %v2308
  %v2421 = vmax.f32 %v2419, %v2311
  %v2422 = vmax.f32 %v2420, %v2314
  %v2423 = vmax.f32 %v2421, %v2317
  %v2424 = vmax.f32 %v2422, %v2320
  %v2425 = vmax.f32 %v2423, %v2323
  %v2426 = vmax.f32 %v2424, %v2326
  %v2427 = vmax.f32 %v2425, %v2329
  %v2428 = vmax.f32 %v2426, %v2332
  %v2429 = vmax.f32 %v2427, %v2335
  %v2430 = vmax.f32 %v2428, %v2338
  %v2431 = vmax.f32 %v2429, %v2341
  %v2432 = vmax.f32 %v2430, %v2344
  %v2433 = vmax.f32 %v2431, %v2347
  %v2434 = vmax.f32 %v2432, %v2350
  %v2435 = vmax.f32 %v2433, %v2353
  %v2436 = vmax.f32 %v2434, %v2356
  %v2437 = vmax.f32 %v2435, %v2359
  %v2438 = vmax.f32 %v2436, %v2362
  %v2439 = vmax.f32 %v2437, %v2365
  %v2440 = vmax.f32 %v2438, %v2368
  %v2441 = vmax.f32 %v2439, %v2371
  %v2442 = vmax.f32 %v2440, %v2374
  %v2443 = vmax.f32 %v2441, %v2442
  %v2444 = vrot.slane %v2443, 4
  %v2445 = vmax.f32 %v2443, %v2444
  %v2446 = vrot.slane %v2445, 2
  %v2447 = vmax.f32 %v2445, %v2446
  %v2448 = vrot.slane %v2447, 1
  %v2449 = vmax.f32 %v2447, %v2448
  %v2450 = vsub.f32 %v2168, %v2412
  %v2451 = vsub.f32 %v2281, %v2449
  %v2452 = vsub.f32 %v2171, %v2412
  %v2453 = vsub.f32 %v2284, %v2449
  %v2454 = vsub.f32 %v2174, %v2412
  %v2455 = vsub.f32 %v2287, %v2449
  %v2456 = vsub.f32 %v2177, %v2412
  %v2457 = vsub.f32 %v2290, %v2449
  %v2458 = vsub.f32 %v2180, %v2412
  %v2459 = vsub.f32 %v2293, %v2449
  %v2460 = vsub.f32 %v2183, %v2412
  %v2461 = vsub.f32 %v2296, %v2449
  %v2462 = vsub.f32 %v2186, %v2412
  %v2463 = vsub.f32 %v2299, %v2449
  %v2464 = vsub.f32 %v2189, %v2412
  %v2465 = vsub.f32 %v2302, %v2449
  %v2466 = vsub.f32 %v2192, %v2412
  %v2467 = vsub.f32 %v2305, %v2449
  %v2468 = vsub.f32 %v2195, %v2412
  %v2469 = vsub.f32 %v2308, %v2449
  %v2470 = vsub.f32 %v2198, %v2412
  %v2471 = vsub.f32 %v2311, %v2449
  %v2472 = vsub.f32 %v2201, %v2412
  %v2473 = vsub.f32 %v2314, %v2449
  %v2474 = vsub.f32 %v2204, %v2412
  %v2475 = vsub.f32 %v2317, %v2449
  %v2476 = vsub.f32 %v2207, %v2412
  %v2477 = vsub.f32 %v2320, %v2449
  %v2478 = vsub.f32 %v2210, %v2412
  %v2479 = vsub.f32 %v2323, %v2449
  %v2480 = vsub.f32 %v2213, %v2412
  %v2481 = vsub.f32 %v2326, %v2449
  %v2482 = vsub.f32 %v2216, %v2412
  %v2483 = vsub.f32 %v2329, %v2449
  %v2484 = vsub.f32 %v2219, %v2412
  %v2485 = vsub.f32 %v2332, %v2449
  %v2486 = vsub.f32 %v2222, %v2412
  %v2487 = vsub.f32 %v2335, %v2449
  %v2488 = vsub.f32 %v2225, %v2412
  %v2489 = vsub.f32 %v2338, %v2449
  %v2490 = vsub.f32 %v2228, %v2412
  %v2491 = vsub.f32 %v2341, %v2449
  %v2492 = vsub.f32 %v2231, %v2412
  %v2493 = vsub.f32 %v2344, %v2449
  %v2494 = vsub.f32 %v2234, %v2412
  %v2495 = vsub.f32 %v2347, %v2449
  %v2496 = vsub.f32 %v2237, %v2412
  %v2497 = vsub.f32 %v2350, %v2449
  %v2498 = vsub.f32 %v2240, %v2412
  %v2499 = vsub.f32 %v2353, %v2449
  %v2500 = vsub.f32 %v2243, %v2412
  %v2501 = vsub.f32 %v2356, %v2449
  %v2502 = vsub.f32 %v2246, %v2412
  %v2503 = vsub.f32 %v2359, %v2449
  %v2504 = vsub.f32 %v2249, %v2412
  %v2505 = vsub.f32 %v2362, %v2449
  %v2506 = vsub.f32 %v2252, %v2412
  %v2507 = vsub.f32 %v2365, %v2449
  %v2508 = vsub.f32 %v2255, %v2412
  %v2509 = vsub.f32 %v2368, %v2449
  %v2510 = vsub.f32 %v2258, %v2412
  %v2511 = vsub.f32 %v2371, %v2449
  %v2512 = vsub.f32 %v2261, %v2412
  %v2513 = vsub.f32 %v2374, %v2449
  %v2514 = vmul.f32 %v2450, 1.442695
  %v2515 = vpow.pop %v2514
  %v2516 = vmul.f32 %v2451, 1.442695
  %v2517 = vpow.pop %v2516
  %v2518 = vmul.f32 %v2452, 1.442695
  %v2519 = vpow.pop %v2518
  %v2520 = vmul.f32 %v2453, 1.442695
  %v2521 = vpow.pop %v2520
  %v2522 = vmul.f32 %v2454, 1.442695
  %v2523 = vpow.pop %v2522
  %v2524 = vmul.f32 %v2455, 1.442695
  %v2525 = vpow.pop %v2524
  %v2526 = vmul.f32 %v2456, 1.442695
  %v2527 = vpow.pop %v2526
  %v2528 = vmul.f32 %v2457, 1.442695
  %v2529 = vpow.pop %v2528
  %v2530 = vmul.f32 %v2458, 1.442695
  %v2531 = vpow.pop %v2530
  %v2532 = vmul.f32 %v2459, 1.442695
  %v2533 = vpow.pop %v2532
  %v2534 = vmul.f32 %v2460, 1.442695
  %v2535 = vpow.pop %v2534
  %v2536 = vmul.f32 %v2461, 1.442695
  %v2537 = vpow.pop %v2536
  %v2538 = vmul.f32 %v2462, 1.442695
  %v2539 = vpow.pop %v2538
  %v2540 = vmul.f32 %v2463, 1.442695
  %v2541 = vpow.pop %v2540
  %v2542 = vmul.f32 %v2464, 1.442695
  %v2543 = vpow.pop %v2542
  %v2544 = vmul.f32 %v2465, 1.442695
  %v2545 = vpow.pop %v2544
  %v2546 = vmul.f32 %v2466, 1.442695
  %v2547 = vpow.pop %v2546
  %v2548 = vmul.f32 %v2467, 1.442695
  %v2549 = vpow.pop %v2548
  %v2550 = vmul.f32 %v2468, 1.442695
  %v2551 = vpow.pop %v2550
  %v2552 = vmul.f32 %v2469, 1.442695
  %v2553 = vpow.pop %v2552
  %v2554 = vmul.f32 %v2470, 1.442695
  %v2555 = vpow.pop %v2554
  %v2556 = vmul.f32 %v2471, 1.442695
  %v2557 = vpow.pop %v2556
  %v2558 = vmul.f32 %v2472, 1.442695
  %v2559 = vpow.pop %v2558
  %v2560 = vmul.f32 %v2473, 1.442695
  %v2561 = vpow.pop %v2560
  %v2562 = vmul.f32 %v2474, 1.442695
  %v2563 = vpow.pop %v2562
  %v2564 = vmul.f32 %v2475, 1.442695
  %v2565 = vpow.pop %v2564
  %v2566 = vmul.f32 %v2476, 1.442695
  %v2567 = vpow.pop %v2566
  %v2568 = vmul.f32 %v2477, 1.442695
  %v2569 = vpow.pop %v2568
  %v2570 = vmul.f32 %v2478, 1.442695
  %v2571 = vpow.pop %v2570
  %v2572 = vmul.f32 %v2479, 1.442695
  %v2573 = vpow.pop %v2572
  %v2574 = vmul.f32 %v2480, 1.442695
  %v2575 = vpow.pop %v2574
  %v2576 = vmul.f32 %v2481, 1.442695
  %v2577 = vpow.pop %v2576
  %v2578 = vmul.f32 %v2482, 1.442695
  %v2579 = vpow.pop %v2578
  %v2580 = vmul.f32 %v2483, 1.442695
  %v2581 = vpow.pop %v2580
  %v2582 = vmul.f32 %v2484, 1.442695
  %v2583 = vpow.pop %v2582
  %v2584 = vmul.f32 %v2485, 1.442695
  %v2585 = vpow.pop %v2584
  %v2586 = vmul.f32 %v2486, 1.442695
  %v2587 = vpow.pop %v2586
  %v2588 = vmul.f32 %v2487, 1.442695
  %v2589 = vpow.pop %v2588
  %v2590 = vmul.f32 %v2488, 1.442695
  %v2591 = vpow.pop %v2590
  %v2592 = vmul.f32 %v2489, 1.442695
  %v2593 = vpow.pop %v2592
  %v2594 = vmul.f32 %v2490, 1.442695
  %v2595 = vpow.pop %v2594
  %v2596 = vmul.f32 %v2491, 1.442695
  %v2597 = vpow.pop %v2596
  %v2598 = vmul.f32 %v2492, 1.442695
  %v2599 = vpow.pop %v2598
  %v2600 = vmul.f32 %v2493, 1.442695
  %v2601 = vpow.pop %v2600
  %v2602 = vmul.f32 %v2494, 1.442695
  %v2603 = vpow.pop %v2602
  %v2604 = vmul.f32 %v2495, 1.442695
  %v2605 = vpow.pop %v2604
  %v2606 = vmul.f32 %v2496, 1.442695
  %v2607 = vpow.pop %v2606
  %v2608 = vmul.f32 %v2497, 1.442695
  %v2609 = vpow.pop %v2608
  %v2610 = vmul.f32 %v2498, 1.442695
  %v2611 = vpow.pop %v2610
  %v2612 = vmul.f32 %v2499, 1.442695
  %v2613 = vpow.pop %v2612
  %v2614 = vmul.f32 %v2500, 1.442695
  %v2615 = vpow.pop %v2614
  %v2616 = vmul.f32 %v2501, 1.442695
  %v2617 = vpow.pop %v2616
  %v2618 = vmul.f32 %v2502, 1.442695
  %v2619 = vpow.pop %v2618
  %v2620 = vmul.f32 %v2503, 1.442695
  %v2621 = vpow.pop %v2620
  %v2622 = vmul.f32 %v2504, 1.442695
  %v2623 = vpow.pop %v2622
  %v2624 = vmul.f32 %v2505, 1.442695
  %v2625 = vpow.pop %v2624
  %v2626 = vmul.f32 %v2506, 1.442695
  %v2627 = vpow.pop %v2626
  %v2628 = vmul.f32 %v2507, 1.442695
  %v2629 = vpow.pop %v2628
  %v2630 = vmul.f32 %v2508, 1.442695
  %v2631 = vpow.pop %v2630
  %v2632 = vmul.f32 %v2509, 1.442695
  %v2633 = vpow.pop %v2632
  %v2634 = vmul.f32 %v2510, 1.442695
  %v2635 = vpow.pop %v2634
  %v2636 = vmul.f32 %v2511, 1.442695
  %v2637 = vpow.pop %v2636
  %v2638 = vmul.f32 %v2512, 1.442695
  %v2639 = vpow.pop %v2638
  %v2640 = vmul.f32 %v2513, 1.442695
  %v2641 = vpow.pop %v2640
  %v2642 = vpack.c.bf16 %v2519, %v2515
  %v2643 = vpack.c.bf16 %v2521, %v2517
  %v2644 = vpack.c.bf16 %v2527, %v2523
  %v2645 = vpack.c.bf16 %v2529, %v2525
  %v2646 = vpack.c.bf16 %v2535, %v2531
  %v2647 = vpack.c.bf16 %v2537, %v2533
  %v2648 = vpack.c.bf16 %v2543, %v2539
  %v2649 = vpack.c.bf16 %v2545, %v2541
  %v2650 = vpack.c.bf16 %v2551, %v2547
  %v2651 = vpack.c.bf16 %v2553, %v2549
  %v2652 = vpack.c.bf16 %v2559, %v2555
  %v2653 = vpack.c.bf16 %v2561, %v2557
  %v2654 = vpack.c.bf16 %v2567, %v2563
  %v2655 = vpack.c.bf16 %v2569, %v2565
  %v2656 = vpack.c.bf16 %v2575, %v2571
  %v2657 = vpack.c.bf16 %v2577, %v2573
  %v2658 = vpack.c.bf16 %v2583, %v2579
  %v2659 = vpack.c.bf16 %v2585, %v2581
  %v2660 = vpack.c.bf16 %v2591, %v2587
  %v2661 = vpack.c.bf16 %v2593, %v2589
  %v2662 = vpack.c.bf16 %v2599, %v2595
  %v2663 = vpack.c.bf16 %v2601, %v2597
  %v2664 = vpack.c.bf16 %v2607, %v2603
  %v2665 = vpack.c.bf16 %v2609, %v2605
  %v2666 = vpack.c.bf16 %v2615, %v2611
  %v2667 = vpack.c.bf16 %v2617, %v2613
  %v2668 = vpack.c.bf16 %v2623, %v2619
  %v2669 = vpack.c.bf16 %v2625, %v2621
  %v2670 = vpack.c.bf16 %v2631, %v2627
  %v2671 = vpack.c.bf16 %v2633, %v2629
  %v2672 = vpack.c.bf16 %v2639, %v2635
  %v2673 = vpack.c.bf16 %v2641, %v2637
  %v2674 = vpack.c.bf16 %v1901, %v1898
  %v2675 = vpack.c.bf16 %v1927, %v1924
  %v2678 = vrot.slane %v2674, 2
  %v2679 = vrot.slane %v2675, 2
  %2682 = vmatpush.bf16.msra.mxu0 %v2656
  %2683 = vmatpush.bf16.msra.mxu0 %v2654
  %2684 = vmatpush.bf16.msra.mxu0 %v2652
  %2685 = vmatpush.bf16.msra.mxu0 %v2650
  %2686 = vmatpush.bf16.msra.mxu0 %v2648
  %2687 = vmatpush.bf16.msra.mxu0 %v2646
  %2688 = vmatpush.bf16.msra.mxu0 %v2644
  %2689 = vmatpush.bf16.msra.mxu0 %v2642
  %2690 = vmatmul.bf16.gmra.mxu0 %v2678
  %v2691 = vpop.f32.mrf.mxu0
  %v2692 = vadd.f32 0.0, %v2691
  %v2693 = vpop.f32.mrf.mxu0
  %2694 = vdwg.mxu0
  %2695 = vmatpush.bf16.msra.mxu0 %v2672
  %2696 = vmatpush.bf16.msra.mxu0 %v2670
  %2697 = vmatpush.bf16.msra.mxu0 %v2668
  %2698 = vmatpush.bf16.msra.mxu0 %v2666
  %2699 = vmatpush.bf16.msra.mxu0 %v2664
  %2700 = vmatpush.bf16.msra.mxu0 %v2662
  %2701 = vmatpush.bf16.msra.mxu0 %v2660
  %2702 = vmatpush.bf16.msra.mxu0 %v2658
  %2703 = vmatmul.bf16.gmra.mxu0 %v2679
  %v2704 = vpop.f32.mrf.mxu0
  %v2705 = vadd.f32 %v2692, %v2704
  %v2706 = vpop.f32.mrf.mxu0
  %2707 = vdwg.mxu0
  %2708 = vmatpush.bf16.msra.mxu0 %v2657
  %2709 = vmatpush.bf16.msra.mxu0 %v2655
  %2710 = vmatpush.bf16.msra.mxu0 %v2653
  %2711 = vmatpush.bf16.msra.mxu0 %v2651
  %2712 = vmatpush.bf16.msra.mxu0 %v2649
  %2713 = vmatpush.bf16.msra.mxu0 %v2647
  %2714 = vmatpush.bf16.msra.mxu0 %v2645
  %2715 = vmatpush.bf16.msra.mxu0 %v2643
  %2716 = vmatmul.bf16.gmra.mxu0 %v2678
  %v2717 = vpop.f32.mrf.mxu0
  %v2718 = vadd.f32 0.0, %v2717
  %v2719 = vpop.f32.mrf.mxu0
  %2720 = vdwg.mxu0
  %2721 = vmatpush.bf16.msra.mxu0 %v2673
  %2722 = vmatpush.bf16.msra.mxu0 %v2671
  %2723 = vmatpush.bf16.msra.mxu0 %v2669
  %2724 = vmatpush.bf16.msra.mxu0 %v2667
  %2725 = vmatpush.bf16.msra.mxu0 %v2665
  %2726 = vmatpush.bf16.msra.mxu0 %v2663
  %2727 = vmatpush.bf16.msra.mxu0 %v2661
  %2728 = vmatpush.bf16.msra.mxu0 %v2659
  %2729 = vmatmul.bf16.gmra.mxu0 %v2679
  %v2730 = vpop.f32.mrf.mxu0
  %v2731 = vadd.f32 %v2718, %v2730
  %v2732 = vpop.f32.mrf.mxu0
  %2733 = vdwg.mxu0
  %v2734 = vrcp.pop %v2705
  %v2735 = vrcp.pop %v2731
  %v2736 = vperm.slane %v2734, 4
  %v2737 = vperm.slane %v2735, 4
  %v2738 = vmul.f32 %v2705, %v2736
  %v2739 = vmul.f32 %v2731, %v2737
  %2740 = vxpose.xlu0.b32.start [1/16] %v1958, 128
  %2741 = vxpose.xlu0.b32.cont [2/16] 0.0, 128
  %2742 = vxpose.xlu0.b32.cont [3/16] 0.0, 128
  %2743 = vxpose.xlu0.b32.cont [4/16] 0.0, 128
  %2744 = vxpose.xlu0.b32.cont [5/16] 0.0, 128
  %2745 = vxpose.xlu0.b32.cont [6/16] 0.0, 128
  %2746 = vxpose.xlu0.b32.cont [7/16] 0.0, 128
  %2747 = vxpose.xlu0.b32.cont [8/16] 0.0, 128
  %2748 = vxpose.xlu0.b32.cont [9/16] 0.0, 128
  %2749 = vxpose.xlu0.b32.cont [10/16] 0.0, 128
  %2750 = vxpose.xlu0.b32.cont [11/16] 0.0, 128
  %2751 = vxpose.xlu0.b32.cont [12/16] 0.0, 128
  %2752 = vxpose.xlu0.b32.cont [13/16] 0.0, 128
  %2753 = vxpose.xlu0.b32.cont [14/16] 0.0, 128
  %2754 = vxpose.xlu0.b32.cont [15/16] 0.0, 128
  %2755 = vxpose.xlu0.b32.end [16/16] 0.0, 128
  %v2756 = vpop.trf.xlu0
  %v2757 = vpop.trf.xlu0
  %v2758 = vpop.trf.xlu0
  %v2759 = vpop.trf.xlu0
  %v2760 = vpop.trf.xlu0
  %v2761 = vpop.trf.xlu0
  %v2762 = vpop.trf.xlu0
  %v2763 = vpop.trf.xlu0
  %v2764 = vpop.trf.xlu0
  %v2765 = vpop.trf.xlu0
  %v2766 = vpop.trf.xlu0
  %v2767 = vpop.trf.xlu0
  %v2768 = vpop.trf.xlu0
  %v2769 = vpop.trf.xlu0
  %v2770 = vpop.trf.xlu0
  %v2771 = vpop.trf.xlu0
  %2772 = vxpose.xlu0.b32.start [1/16] %v1978, 128
  %2773 = vxpose.xlu0.b32.cont [2/16] 0.0, 128
  %2774 = vxpose.xlu0.b32.cont [3/16] 0.0, 128
  %2775 = vxpose.xlu0.b32.cont [4/16] 0.0, 128
  %2776 = vxpose.xlu0.b32.cont [5/16] 0.0, 128
  %2777 = vxpose.xlu0.b32.cont [6/16] 0.0, 128
  %2778 = vxpose.xlu0.b32.cont [7/16] 0.0, 128
  %2779 = vxpose.xlu0.b32.cont [8/16] 0.0, 128
  %2780 = vxpose.xlu0.b32.cont [9/16] 0.0, 128
  %2781 = vxpose.xlu0.b32.cont [10/16] 0.0, 128
  %2782 = vxpose.xlu0.b32.cont [11/16] 0.0, 128
  %2783 = vxpose.xlu0.b32.cont [12/16] 0.0, 128
  %2784 = vxpose.xlu0.b32.cont [13/16] 0.0, 128
  %2785 = vxpose.xlu0.b32.cont [14/16] 0.0, 128
  %2786 = vxpose.xlu0.b32.cont [15/16] 0.0, 128
  %2787 = vxpose.xlu0.b32.end [16/16] 0.0, 128
  %v2788 = vpop.trf.xlu0
  %v2789 = vpop.trf.xlu0
  %v2790 = vpop.trf.xlu0
  %v2791 = vpop.trf.xlu0
  %v2792 = vpop.trf.xlu0
  %v2793 = vpop.trf.xlu0
  %v2794 = vpop.trf.xlu0
  %v2795 = vpop.trf.xlu0
  %v2796 = vpop.trf.xlu0
  %v2797 = vpop.trf.xlu0
  %v2798 = vpop.trf.xlu0
  %v2799 = vpop.trf.xlu0
  %v2800 = vpop.trf.xlu0
  %v2801 = vpop.trf.xlu0
  %v2802 = vpop.trf.xlu0
  %v2803 = vpop.trf.xlu0
  %v2805 = vsel %vm238, %v2756, 0
  %v2808 = vsel %vm238, %v2757, 0
  %v2811 = vsel %vm238, %v2758, 0
  %v2814 = vsel %vm238, %v2759, 0
  %v2817 = vsel %vm238, %v2760, 0
  %v2820 = vsel %vm238, %v2761, 0
  %v2823 = vsel %vm238, %v2762, 0
  %v2826 = vsel %vm238, %v2763, 0
  %v2829 = vsel %vm238, %v2764, 0
  %v2832 = vsel %vm238, %v2765, 0
  %v2835 = vsel %vm238, %v2766, 0
  %v2838 = vsel %vm238, %v2767, 0
  %v2841 = vsel %vm238, %v2768, 0
  %v2844 = vsel %vm238, %v2769, 0
  %v2847 = vsel %vm238, %v2770, 0
  %v2850 = vsel %vm238, %v2771, 0
  %v2853 = vsel %vm238, %v2788, 0
  %v2856 = vsel %vm238, %v2789, 0
  %v2859 = vsel %vm238, %v2790, 0
  %v2862 = vsel %vm238, %v2791, 0
  %v2865 = vsel %vm238, %v2792, 0
  %v2868 = vsel %vm238, %v2793, 0
  %v2871 = vsel %vm238, %v2794, 0
  %v2874 = vsel %vm238, %v2795, 0
  %v2877 = vsel %vm238, %v2796, 0
  %v2880 = vsel %vm238, %v2797, 0
  %v2883 = vsel %vm238, %v2798, 0
  %v2886 = vsel %vm238, %v2799, 0
  %v2889 = vsel %vm238, %v2800, 0
  %v2892 = vsel %vm238, %v2801, 0
  %v2895 = vsel %vm238, %v2802, 0
  %v2898 = vsel %vm238, %v2803, 0
  %2900 = vmatpush.msra.mxu0 0.0
  %2901 = vmatpush.msra.mxu0 0.0
  %2902 = vmatpush.msra.mxu0 0.0
  %2903 = vmatpush.msra.mxu0 0.0
  %2904 = vmatpush.msra.mxu0 0.0
  %2905 = vmatpush.msra.mxu0 0.0
  %2906 = vmatpush.msra.mxu0 0.0
  %2907 = vmatpush.msra.mxu0 0.0
  %2908 = vmatpush.msra.mxu0 0.0
  %2909 = vmatpush.msra.mxu0 0.0
  %2910 = vmatpush.msra.mxu0 0.0
  %2911 = vmatpush.msra.mxu0 0.0
  %2912 = vmatpush.msra.mxu0 0.0
  %2913 = vmatpush.msra.mxu0 0.0
  %2914 = vmatpush.msra.mxu0 0.0
  %2915 = vmatpush.msra.mxu0 %v2146
  %2916 = vmatmul.f32.gmra.mxu0 %v2805
  %v2917 = vpop.f32.mrf.mxu0
  %v2918 = vadd.f32 0.0, %v2917
  %2919 = vmatmul.f32.gmra.mxu0 %v2808
  %v2920 = vpop.f32.mrf.mxu0
  %v2921 = vadd.f32 0.0, %v2920
  %2922 = vmatmul.f32.gmra.mxu0 %v2811
  %v2923 = vpop.f32.mrf.mxu0
  %v2924 = vadd.f32 0.0, %v2923
  %2925 = vmatmul.f32.gmra.mxu0 %v2814
  %v2926 = vpop.f32.mrf.mxu0
  %v2927 = vadd.f32 0.0, %v2926
  %2928 = vmatmul.f32.gmra.mxu0 %v2817
  %v2929 = vpop.f32.mrf.mxu0
  %v2930 = vadd.f32 0.0, %v2929
  %2931 = vmatmul.f32.gmra.mxu0 %v2820
  %v2932 = vpop.f32.mrf.mxu0
  %v2933 = vadd.f32 0.0, %v2932
  %2934 = vmatmul.f32.gmra.mxu0 %v2823
  %v2935 = vpop.f32.mrf.mxu0
  %v2936 = vadd.f32 0.0, %v2935
  %2937 = vmatmul.f32.gmra.mxu0 %v2826
  %v2938 = vpop.f32.mrf.mxu0
  %v2939 = vadd.f32 0.0, %v2938
  %2940 = vmatmul.f32.gmra.mxu0 %v2829
  %v2941 = vpop.f32.mrf.mxu0
  %v2942 = vadd.f32 0.0, %v2941
  %2943 = vmatmul.f32.gmra.mxu0 %v2832
  %v2944 = vpop.f32.mrf.mxu0
  %v2945 = vadd.f32 0.0, %v2944
  %2946 = vmatmul.f32.gmra.mxu0 %v2835
  %v2947 = vpop.f32.mrf.mxu0
  %v2948 = vadd.f32 0.0, %v2947
  %2949 = vmatmul.f32.gmra.mxu0 %v2838
  %v2950 = vpop.f32.mrf.mxu0
  %v2951 = vadd.f32 0.0, %v2950
  %2952 = vmatmul.f32.gmra.mxu0 %v2841
  %v2953 = vpop.f32.mrf.mxu0
  %v2954 = vadd.f32 0.0, %v2953
  %2955 = vmatmul.f32.gmra.mxu0 %v2844
  %v2956 = vpop.f32.mrf.mxu0
  %v2957 = vadd.f32 0.0, %v2956
  %2958 = vmatmul.f32.gmra.mxu0 %v2847
  %v2959 = vpop.f32.mrf.mxu0
  %v2960 = vadd.f32 0.0, %v2959
  %2961 = vmatmul.f32.gmra.mxu0 %v2850
  %v2962 = vpop.f32.mrf.mxu0
  %v2963 = vadd.f32 0.0, %v2962
  %2964 = vmatmul.f32.gmra.mxu0 %v2853
  %v2965 = vpop.f32.mrf.mxu0
  %v2966 = vadd.f32 0.0, %v2965
  %2967 = vmatmul.f32.gmra.mxu0 %v2856
  %v2968 = vpop.f32.mrf.mxu0
  %v2969 = vadd.f32 0.0, %v2968
  %2970 = vmatmul.f32.gmra.mxu0 %v2859
  %v2971 = vpop.f32.mrf.mxu0
  %v2972 = vadd.f32 0.0, %v2971
  %2973 = vmatmul.f32.gmra.mxu0 %v2862
  %v2974 = vpop.f32.mrf.mxu0
  %v2975 = vadd.f32 0.0, %v2974
  %2976 = vmatmul.f32.gmra.mxu0 %v2865
  %v2977 = vpop.f32.mrf.mxu0
  %v2978 = vadd.f32 0.0, %v2977
  %2979 = vmatmul.f32.gmra.mxu0 %v2868
  %v2980 = vpop.f32.mrf.mxu0
  %v2981 = vadd.f32 0.0, %v2980
  %2982 = vmatmul.f32.gmra.mxu0 %v2871
  %v2983 = vpop.f32.mrf.mxu0
  %v2984 = vadd.f32 0.0, %v2983
  %2985 = vmatmul.f32.gmra.mxu0 %v2874
  %v2986 = vpop.f32.mrf.mxu0
  %v2987 = vadd.f32 0.0, %v2986
  %2988 = vmatmul.f32.gmra.mxu0 %v2877
  %v2989 = vpop.f32.mrf.mxu0
  %v2990 = vadd.f32 0.0, %v2989
  %2991 = vmatmul.f32.gmra.mxu0 %v2880
  %v2992 = vpop.f32.mrf.mxu0
  %v2993 = vadd.f32 0.0, %v2992
  %2994 = vmatmul.f32.gmra.mxu0 %v2883
  %v2995 = vpop.f32.mrf.mxu0
  %v2996 = vadd.f32 0.0, %v2995
  %2997 = vmatmul.f32.gmra.mxu0 %v2886
  %v2998 = vpop.f32.mrf.mxu0
  %v2999 = vadd.f32 0.0, %v2998
  %3000 = vmatmul.f32.gmra.mxu0 %v2889
  %v3001 = vpop.f32.mrf.mxu0
  %v3002 = vadd.f32 0.0, %v3001
  %3003 = vmatmul.f32.gmra.mxu0 %v2892
  %v3004 = vpop.f32.mrf.mxu0
  %v3005 = vadd.f32 0.0, %v3004
  %3006 = vmatmul.f32.gmra.mxu0 %v2895
  %v3007 = vpop.f32.mrf.mxu0
  %v3008 = vadd.f32 0.0, %v3007
  %3009 = vmatmul.f32.gmra.mxu0 %v2898
  %v3010 = vpop.f32.mrf.mxu0
  %v3011 = vadd.f32 0.0, %v3010
  %3012 = vdwg.mxu0
  %3013 = vmatpush.msra.mxu0 0.0
  %3014 = vmatpush.msra.mxu0 0.0
  %3015 = vmatpush.msra.mxu0 0.0
  %3016 = vmatpush.msra.mxu0 0.0
  %3017 = vmatpush.msra.mxu0 0.0
  %3018 = vmatpush.msra.mxu0 0.0
  %3019 = vmatpush.msra.mxu0 0.0
  %3020 = vmatpush.msra.mxu0 0.0
  %3021 = vmatpush.msra.mxu0 0.0
  %3022 = vmatpush.msra.mxu0 0.0
  %3023 = vmatpush.msra.mxu0 0.0
  %3024 = vmatpush.msra.mxu0 0.0
  %3025 = vmatpush.msra.mxu0 0.0
  %3026 = vmatpush.msra.mxu0 0.0
  %3027 = vmatpush.msra.mxu0 0.0
  %3028 = vmatpush.msra.mxu0 %v2148
  %3029 = vmatmul.f32.gmra.mxu0 %v2805
  %v3030 = vpop.f32.mrf.mxu0
  %v3031 = vadd.f32 0.0, %v3030
  %3032 = vmatmul.f32.gmra.mxu0 %v2808
  %v3033 = vpop.f32.mrf.mxu0
  %v3034 = vadd.f32 0.0, %v3033
  %3035 = vmatmul.f32.gmra.mxu0 %v2811
  %v3036 = vpop.f32.mrf.mxu0
  %v3037 = vadd.f32 0.0, %v3036
  %3038 = vmatmul.f32.gmra.mxu0 %v2814
  %v3039 = vpop.f32.mrf.mxu0
  %v3040 = vadd.f32 0.0, %v3039
  %3041 = vmatmul.f32.gmra.mxu0 %v2817
  %v3042 = vpop.f32.mrf.mxu0
  %v3043 = vadd.f32 0.0, %v3042
  %3044 = vmatmul.f32.gmra.mxu0 %v2820
  %v3045 = vpop.f32.mrf.mxu0
  %v3046 = vadd.f32 0.0, %v3045
  %3047 = vmatmul.f32.gmra.mxu0 %v2823
  %v3048 = vpop.f32.mrf.mxu0
  %v3049 = vadd.f32 0.0, %v3048
  %3050 = vmatmul.f32.gmra.mxu0 %v2826
  %v3051 = vpop.f32.mrf.mxu0
  %v3052 = vadd.f32 0.0, %v3051
  %3053 = vmatmul.f32.gmra.mxu0 %v2829
  %v3054 = vpop.f32.mrf.mxu0
  %v3055 = vadd.f32 0.0, %v3054
  %3056 = vmatmul.f32.gmra.mxu0 %v2832
  %v3057 = vpop.f32.mrf.mxu0
  %v3058 = vadd.f32 0.0, %v3057
  %3059 = vmatmul.f32.gmra.mxu0 %v2835
  %v3060 = vpop.f32.mrf.mxu0
  %v3061 = vadd.f32 0.0, %v3060
  %3062 = vmatmul.f32.gmra.mxu0 %v2838
  %v3063 = vpop.f32.mrf.mxu0
  %v3064 = vadd.f32 0.0, %v3063
  %3065 = vmatmul.f32.gmra.mxu0 %v2841
  %v3066 = vpop.f32.mrf.mxu0
  %v3067 = vadd.f32 0.0, %v3066
  %3068 = vmatmul.f32.gmra.mxu0 %v2844
  %v3069 = vpop.f32.mrf.mxu0
  %v3070 = vadd.f32 0.0, %v3069
  %3071 = vmatmul.f32.gmra.mxu0 %v2847
  %v3072 = vpop.f32.mrf.mxu0
  %v3073 = vadd.f32 0.0, %v3072
  %3074 = vmatmul.f32.gmra.mxu0 %v2850
  %v3075 = vpop.f32.mrf.mxu0
  %v3076 = vadd.f32 0.0, %v3075
  %3077 = vmatmul.f32.gmra.mxu0 %v2853
  %v3078 = vpop.f32.mrf.mxu0
  %v3079 = vadd.f32 0.0, %v3078
  %3080 = vmatmul.f32.gmra.mxu0 %v2856
  %v3081 = vpop.f32.mrf.mxu0
  %v3082 = vadd.f32 0.0, %v3081
  %3083 = vmatmul.f32.gmra.mxu0 %v2859
  %v3084 = vpop.f32.mrf.mxu0
  %v3085 = vadd.f32 0.0, %v3084
  %3086 = vmatmul.f32.gmra.mxu0 %v2862
  %v3087 = vpop.f32.mrf.mxu0
  %v3088 = vadd.f32 0.0, %v3087
  %3089 = vmatmul.f32.gmra.mxu0 %v2865
  %v3090 = vpop.f32.mrf.mxu0
  %v3091 = vadd.f32 0.0, %v3090
  %3092 = vmatmul.f32.gmra.mxu0 %v2868
  %v3093 = vpop.f32.mrf.mxu0
  %v3094 = vadd.f32 0.0, %v3093
  %3095 = vmatmul.f32.gmra.mxu0 %v2871
  %v3096 = vpop.f32.mrf.mxu0
  %v3097 = vadd.f32 0.0, %v3096
  %3098 = vmatmul.f32.gmra.mxu0 %v2874
  %v3099 = vpop.f32.mrf.mxu0
  %v3100 = vadd.f32 0.0, %v3099
  %3101 = vmatmul.f32.gmra.mxu0 %v2877
  %v3102 = vpop.f32.mrf.mxu0
  %v3103 = vadd.f32 0.0, %v3102
  %3104 = vmatmul.f32.gmra.mxu0 %v2880
  %v3105 = vpop.f32.mrf.mxu0
  %v3106 = vadd.f32 0.0, %v3105
  %3107 = vmatmul.f32.gmra.mxu0 %v2883
  %v3108 = vpop.f32.mrf.mxu0
  %v3109 = vadd.f32 0.0, %v3108
  %3110 = vmatmul.f32.gmra.mxu0 %v2886
  %v3111 = vpop.f32.mrf.mxu0
  %v3112 = vadd.f32 0.0, %v3111
  %3113 = vmatmul.f32.gmra.mxu0 %v2889
  %v3114 = vpop.f32.mrf.mxu0
  %v3115 = vadd.f32 0.0, %v3114
  %3116 = vmatmul.f32.gmra.mxu0 %v2892
  %v3117 = vpop.f32.mrf.mxu0
  %v3118 = vadd.f32 0.0, %v3117
  %3119 = vmatmul.f32.gmra.mxu0 %v2895
  %v3120 = vpop.f32.mrf.mxu0
  %v3121 = vadd.f32 0.0, %v3120
  %3122 = vmatmul.f32.gmra.mxu0 %v2898
  %v3123 = vpop.f32.mrf.mxu0
  %v3124 = vadd.f32 0.0, %v3123
  %3125 = vdwg.mxu0
  %v3126 = vmax.f32 %v2918, %v2924
  %v3127 = vmax.f32 %v2921, %v2927
  %v3128 = vmax.f32 %v3126, %v2930
  %v3129 = vmax.f32 %v3127, %v2933
  %v3130 = vmax.f32 %v3128, %v2936
  %v3131 = vmax.f32 %v3129, %v2939
  %v3132 = vmax.f32 %v3130, %v2942
  %v3133 = vmax.f32 %v3131, %v2945
  %v3134 = vmax.f32 %v3132, %v2948
  %v3135 = vmax.f32 %v3133, %v2951
  %v3136 = vmax.f32 %v3134, %v2954
  %v3137 = vmax.f32 %v3135, %v2957
  %v3138 = vmax.f32 %v3136, %v2960
  %v3139 = vmax.f32 %v3137, %v2963
  %v3140 = vmax.f32 %v3138, %v2966
  %v3141 = vmax.f32 %v3139, %v2969
  %v3142 = vmax.f32 %v3140, %v2972
  %v3143 = vmax.f32 %v3141, %v2975
  %v3144 = vmax.f32 %v3142, %v2978
  %v3145 = vmax.f32 %v3143, %v2981
  %v3146 = vmax.f32 %v3144, %v2984
  %v3147 = vmax.f32 %v3145, %v2987
  %v3148 = vmax.f32 %v3146, %v2990
  %v3149 = vmax.f32 %v3147, %v2993
  %v3150 = vmax.f32 %v3148, %v2996
  %v3151 = vmax.f32 %v3149, %v2999
  %v3152 = vmax.f32 %v3150, %v3002
  %v3153 = vmax.f32 %v3151, %v3005
  %v3154 = vmax.f32 %v3152, %v3008
  %v3155 = vmax.f32 %v3153, %v3011
  %v3156 = vmax.f32 %v3154, %v3155
  %v3157 = vrot.slane %v3156, 4
  %v3158 = vmax.f32 %v3156, %v3157
  %v3159 = vrot.slane %v3158, 2
  %v3160 = vmax.f32 %v3158, %v3159
  %v3161 = vrot.slane %v3160, 1
  %v3162 = vmax.f32 %v3160, %v3161
  %v3163 = vmax.f32 %v3031, %v3037
  %v3164 = vmax.f32 %v3034, %v3040
  %v3165 = vmax.f32 %v3163, %v3043
  %v3166 = vmax.f32 %v3164, %v3046
  %v3167 = vmax.f32 %v3165, %v3049
  %v3168 = vmax.f32 %v3166, %v3052
  %v3169 = vmax.f32 %v3167, %v3055
  %v3170 = vmax.f32 %v3168, %v3058
  %v3171 = vmax.f32 %v3169, %v3061
  %v3172 = vmax.f32 %v3170, %v3064
  %v3173 = vmax.f32 %v3171, %v3067
  %v3174 = vmax.f32 %v3172, %v3070
  %v3175 = vmax.f32 %v3173, %v3073
  %v3176 = vmax.f32 %v3174, %v3076
  %v3177 = vmax.f32 %v3175, %v3079
  %v3178 = vmax.f32 %v3176, %v3082
  %v3179 = vmax.f32 %v3177, %v3085
  %v3180 = vmax.f32 %v3178, %v3088
  %v3181 = vmax.f32 %v3179, %v3091
  %v3182 = vmax.f32 %v3180, %v3094
  %v3183 = vmax.f32 %v3181, %v3097
  %v3184 = vmax.f32 %v3182, %v3100
  %v3185 = vmax.f32 %v3183, %v3103
  %v3186 = vmax.f32 %v3184, %v3106
  %v3187 = vmax.f32 %v3185, %v3109
  %v3188 = vmax.f32 %v3186, %v3112
  %v3189 = vmax.f32 %v3187, %v3115
  %v3190 = vmax.f32 %v3188, %v3118
  %v3191 = vmax.f32 %v3189, %v3121
  %v3192 = vmax.f32 %v3190, %v3124
  %v3193 = vmax.f32 %v3191, %v3192
  %v3194 = vrot.slane %v3193, 4
  %v3195 = vmax.f32 %v3193, %v3194
  %v3196 = vrot.slane %v3195, 2
  %v3197 = vmax.f32 %v3195, %v3196
  %v3198 = vrot.slane %v3197, 1
  %v3199 = vmax.f32 %v3197, %v3198
  %v3200 = vsub.f32 %v2918, %v3162
  %v3201 = vsub.f32 %v3031, %v3199
  %v3202 = vsub.f32 %v2921, %v3162
  %v3203 = vsub.f32 %v3034, %v3199
  %v3204 = vsub.f32 %v2924, %v3162
  %v3205 = vsub.f32 %v3037, %v3199
  %v3206 = vsub.f32 %v2927, %v3162
  %v3207 = vsub.f32 %v3040, %v3199
  %v3208 = vsub.f32 %v2930, %v3162
  %v3209 = vsub.f32 %v3043, %v3199
  %v3210 = vsub.f32 %v2933, %v3162
  %v3211 = vsub.f32 %v3046, %v3199
  %v3212 = vsub.f32 %v2936, %v3162
  %v3213 = vsub.f32 %v3049, %v3199
  %v3214 = vsub.f32 %v2939, %v3162
  %v3215 = vsub.f32 %v3052, %v3199
  %v3216 = vsub.f32 %v2942, %v3162
  %v3217 = vsub.f32 %v3055, %v3199
  %v3218 = vsub.f32 %v2945, %v3162
  %v3219 = vsub.f32 %v3058, %v3199
  %v3220 = vsub.f32 %v2948, %v3162
  %v3221 = vsub.f32 %v3061, %v3199
  %v3222 = vsub.f32 %v2951, %v3162
  %v3223 = vsub.f32 %v3064, %v3199
  %v3224 = vsub.f32 %v2954, %v3162
  %v3225 = vsub.f32 %v3067, %v3199
  %v3226 = vsub.f32 %v2957, %v3162
  %v3227 = vsub.f32 %v3070, %v3199
  %v3228 = vsub.f32 %v2960, %v3162
  %v3229 = vsub.f32 %v3073, %v3199
  %v3230 = vsub.f32 %v2963, %v3162
  %v3231 = vsub.f32 %v3076, %v3199
  %v3232 = vsub.f32 %v2966, %v3162
  %v3233 = vsub.f32 %v3079, %v3199
  %v3234 = vsub.f32 %v2969, %v3162
  %v3235 = vsub.f32 %v3082, %v3199
  %v3236 = vsub.f32 %v2972, %v3162
  %v3237 = vsub.f32 %v3085, %v3199
  %v3238 = vsub.f32 %v2975, %v3162
  %v3239 = vsub.f32 %v3088, %v3199
  %v3240 = vsub.f32 %v2978, %v3162
  %v3241 = vsub.f32 %v3091, %v3199
  %v3242 = vsub.f32 %v2981, %v3162
  %v3243 = vsub.f32 %v3094, %v3199
  %v3244 = vsub.f32 %v2984, %v3162
  %v3245 = vsub.f32 %v3097, %v3199
  %v3246 = vsub.f32 %v2987, %v3162
  %v3247 = vsub.f32 %v3100, %v3199
  %v3248 = vsub.f32 %v2990, %v3162
  %v3249 = vsub.f32 %v3103, %v3199
  %v3250 = vsub.f32 %v2993, %v3162
  %v3251 = vsub.f32 %v3106, %v3199
  %v3252 = vsub.f32 %v2996, %v3162
  %v3253 = vsub.f32 %v3109, %v3199
  %v3254 = vsub.f32 %v2999, %v3162
  %v3255 = vsub.f32 %v3112, %v3199
  %v3256 = vsub.f32 %v3002, %v3162
  %v3257 = vsub.f32 %v3115, %v3199
  %v3258 = vsub.f32 %v3005, %v3162
  %v3259 = vsub.f32 %v3118, %v3199
  %v3260 = vsub.f32 %v3008, %v3162
  %v3261 = vsub.f32 %v3121, %v3199
  %v3262 = vsub.f32 %v3011, %v3162
  %v3263 = vsub.f32 %v3124, %v3199
  %v3264 = vmul.f32 %v3200, 1.442695
  %v3265 = vpow.pop %v3264
  %v3266 = vmul.f32 %v3201, 1.442695
  %v3267 = vpow.pop %v3266
  %v3268 = vmul.f32 %v3202, 1.442695
  %v3269 = vpow.pop %v3268
  %v3270 = vmul.f32 %v3203, 1.442695
  %v3271 = vpow.pop %v3270
  %v3272 = vmul.f32 %v3204, 1.442695
  %v3273 = vpow.pop %v3272
  %v3274 = vmul.f32 %v3205, 1.442695
  %v3275 = vpow.pop %v3274
  %v3276 = vmul.f32 %v3206, 1.442695
  %v3277 = vpow.pop %v3276
  %v3278 = vmul.f32 %v3207, 1.442695
  %v3279 = vpow.pop %v3278
  %v3280 = vmul.f32 %v3208, 1.442695
  %v3281 = vpow.pop %v3280
  %v3282 = vmul.f32 %v3209, 1.442695
  %v3283 = vpow.pop %v3282
  %v3284 = vmul.f32 %v3210, 1.442695
  %v3285 = vpow.pop %v3284
  %v3286 = vmul.f32 %v3211, 1.442695
  %v3287 = vpow.pop %v3286
  %v3288 = vmul.f32 %v3212, 1.442695
  %v3289 = vpow.pop %v3288
  %v3290 = vmul.f32 %v3213, 1.442695
  %v3291 = vpow.pop %v3290
  %v3292 = vmul.f32 %v3214, 1.442695
  %v3293 = vpow.pop %v3292
  %v3294 = vmul.f32 %v3215, 1.442695
  %v3295 = vpow.pop %v3294
  %v3296 = vmul.f32 %v3216, 1.442695
  %v3297 = vpow.pop %v3296
  %v3298 = vmul.f32 %v3217, 1.442695
  %v3299 = vpow.pop %v3298
  %v3300 = vmul.f32 %v3218, 1.442695
  %v3301 = vpow.pop %v3300
  %v3302 = vmul.f32 %v3219, 1.442695
  %v3303 = vpow.pop %v3302
  %v3304 = vmul.f32 %v3220, 1.442695
  %v3305 = vpow.pop %v3304
  %v3306 = vmul.f32 %v3221, 1.442695
  %v3307 = vpow.pop %v3306
  %v3308 = vmul.f32 %v3222, 1.442695
  %v3309 = vpow.pop %v3308
  %v3310 = vmul.f32 %v3223, 1.442695
  %v3311 = vpow.pop %v3310
  %v3312 = vmul.f32 %v3224, 1.442695
  %v3313 = vpow.pop %v3312
  %v3314 = vmul.f32 %v3225, 1.442695
  %v3315 = vpow.pop %v3314
  %v3316 = vmul.f32 %v3226, 1.442695
  %v3317 = vpow.pop %v3316
  %v3318 = vmul.f32 %v3227, 1.442695
  %v3319 = vpow.pop %v3318
  %v3320 = vmul.f32 %v3228, 1.442695
  %v3321 = vpow.pop %v3320
  %v3322 = vmul.f32 %v3229, 1.442695
  %v3323 = vpow.pop %v3322
  %v3324 = vmul.f32 %v3230, 1.442695
  %v3325 = vpow.pop %v3324
  %v3326 = vmul.f32 %v3231, 1.442695
  %v3327 = vpow.pop %v3326
  %v3328 = vmul.f32 %v3232, 1.442695
  %v3329 = vpow.pop %v3328
  %v3330 = vmul.f32 %v3233, 1.442695
  %v3331 = vpow.pop %v3330
  %v3332 = vmul.f32 %v3234, 1.442695
  %v3333 = vpow.pop %v3332
  %v3334 = vmul.f32 %v3235, 1.442695
  %v3335 = vpow.pop %v3334
  %v3336 = vmul.f32 %v3236, 1.442695
  %v3337 = vpow.pop %v3336
  %v3338 = vmul.f32 %v3237, 1.442695
  %v3339 = vpow.pop %v3338
  %v3340 = vmul.f32 %v3238, 1.442695
  %v3341 = vpow.pop %v3340
  %v3342 = vmul.f32 %v3239, 1.442695
  %v3343 = vpow.pop %v3342
  %v3344 = vmul.f32 %v3240, 1.442695
  %v3345 = vpow.pop %v3344
  %v3346 = vmul.f32 %v3241, 1.442695
  %v3347 = vpow.pop %v3346
  %v3348 = vmul.f32 %v3242, 1.442695
  %v3349 = vpow.pop %v3348
  %v3350 = vmul.f32 %v3243, 1.442695
  %v3351 = vpow.pop %v3350
  %v3352 = vmul.f32 %v3244, 1.442695
  %v3353 = vpow.pop %v3352
  %v3354 = vmul.f32 %v3245, 1.442695
  %v3355 = vpow.pop %v3354
  %v3356 = vmul.f32 %v3246, 1.442695
  %v3357 = vpow.pop %v3356
  %v3358 = vmul.f32 %v3247, 1.442695
  %v3359 = vpow.pop %v3358
  %v3360 = vmul.f32 %v3248, 1.442695
  %v3361 = vpow.pop %v3360
  %v3362 = vmul.f32 %v3249, 1.442695
  %v3363 = vpow.pop %v3362
  %v3364 = vmul.f32 %v3250, 1.442695
  %v3365 = vpow.pop %v3364
  %v3366 = vmul.f32 %v3251, 1.442695
  %v3367 = vpow.pop %v3366
  %v3368 = vmul.f32 %v3252, 1.442695
  %v3369 = vpow.pop %v3368
  %v3370 = vmul.f32 %v3253, 1.442695
  %v3371 = vpow.pop %v3370
  %v3372 = vmul.f32 %v3254, 1.442695
  %v3373 = vpow.pop %v3372
  %v3374 = vmul.f32 %v3255, 1.442695
  %v3375 = vpow.pop %v3374
  %v3376 = vmul.f32 %v3256, 1.442695
  %v3377 = vpow.pop %v3376
  %v3378 = vmul.f32 %v3257, 1.442695
  %v3379 = vpow.pop %v3378
  %v3380 = vmul.f32 %v3258, 1.442695
  %v3381 = vpow.pop %v3380
  %v3382 = vmul.f32 %v3259, 1.442695
  %v3383 = vpow.pop %v3382
  %v3384 = vmul.f32 %v3260, 1.442695
  %v3385 = vpow.pop %v3384
  %v3386 = vmul.f32 %v3261, 1.442695
  %v3387 = vpow.pop %v3386
  %v3388 = vmul.f32 %v3262, 1.442695
  %v3389 = vpow.pop %v3388
  %v3390 = vmul.f32 %v3263, 1.442695
  %v3391 = vpow.pop %v3390
  %v3392 = vpack.c.bf16 %v3269, %v3265
  %v3393 = vpack.c.bf16 %v3271, %v3267
  %v3394 = vpack.c.bf16 %v3277, %v3273
  %v3395 = vpack.c.bf16 %v3279, %v3275
  %v3396 = vpack.c.bf16 %v3285, %v3281
  %v3397 = vpack.c.bf16 %v3287, %v3283
  %v3398 = vpack.c.bf16 %v3293, %v3289
  %v3399 = vpack.c.bf16 %v3295, %v3291
  %v3400 = vpack.c.bf16 %v3301, %v3297
  %v3401 = vpack.c.bf16 %v3303, %v3299
  %v3402 = vpack.c.bf16 %v3309, %v3305
  %v3403 = vpack.c.bf16 %v3311, %v3307
  %v3404 = vpack.c.bf16 %v3317, %v3313
  %v3405 = vpack.c.bf16 %v3319, %v3315
  %v3406 = vpack.c.bf16 %v3325, %v3321
  %v3407 = vpack.c.bf16 %v3327, %v3323
  %v3408 = vpack.c.bf16 %v3333, %v3329
  %v3409 = vpack.c.bf16 %v3335, %v3331
  %v3410 = vpack.c.bf16 %v3341, %v3337
  %v3411 = vpack.c.bf16 %v3343, %v3339
  %v3412 = vpack.c.bf16 %v3349, %v3345
  %v3413 = vpack.c.bf16 %v3351, %v3347
  %v3414 = vpack.c.bf16 %v3357, %v3353
  %v3415 = vpack.c.bf16 %v3359, %v3355
  %v3416 = vpack.c.bf16 %v3365, %v3361
  %v3417 = vpack.c.bf16 %v3367, %v3363
  %v3418 = vpack.c.bf16 %v3373, %v3369
  %v3419 = vpack.c.bf16 %v3375, %v3371
  %v3420 = vpack.c.bf16 %v3381, %v3377
  %v3421 = vpack.c.bf16 %v3383, %v3379
  %v3422 = vpack.c.bf16 %v3389, %v3385
  %v3423 = vpack.c.bf16 %v3391, %v3387
  %v3424 = vpack.c.bf16 %v1958, %v1958
  %v3425 = vpack.c.bf16 %v1978, %v1978
  %v3428 = vrot.slane %v3424, 1
  %v3429 = vrot.slane %v3425, 1
  %3432 = vmatpush.bf16.msra.mxu0 %v3406
  %3433 = vmatpush.bf16.msra.mxu0 %v3404
  %3434 = vmatpush.bf16.msra.mxu0 %v3402
  %3435 = vmatpush.bf16.msra.mxu0 %v3400
  %3436 = vmatpush.bf16.msra.mxu0 %v3398
  %3437 = vmatpush.bf16.msra.mxu0 %v3396
  %3438 = vmatpush.bf16.msra.mxu0 %v3394
  %3439 = vmatpush.bf16.msra.mxu0 %v3392
  %3440 = vmatmul.bf16.gmra.mxu0 %v3428
  %v3441 = vpop.f32.mrf.mxu0
  %v3442 = vadd.f32 0.0, %v3441
  %v3443 = vpop.f32.mrf.mxu0
  %3444 = vdwg.mxu0
  %3445 = vmatpush.bf16.msra.mxu0 %v3422
  %3446 = vmatpush.bf16.msra.mxu0 %v3420
  %3447 = vmatpush.bf16.msra.mxu0 %v3418
  %3448 = vmatpush.bf16.msra.mxu0 %v3416
  %3449 = vmatpush.bf16.msra.mxu0 %v3414
  %3450 = vmatpush.bf16.msra.mxu0 %v3412
  %3451 = vmatpush.bf16.msra.mxu0 %v3410
  %3452 = vmatpush.bf16.msra.mxu0 %v3408
  %3453 = vmatmul.bf16.gmra.mxu0 %v3429
  %v3454 = vpop.f32.mrf.mxu0
  %v3455 = vadd.f32 %v3442, %v3454
  %v3456 = vpop.f32.mrf.mxu0
  %3457 = vdwg.mxu0
  %3458 = vmatpush.bf16.msra.mxu0 %v3407
  %3459 = vmatpush.bf16.msra.mxu0 %v3405
  %3460 = vmatpush.bf16.msra.mxu0 %v3403
  %3461 = vmatpush.bf16.msra.mxu0 %v3401
  %3462 = vmatpush.bf16.msra.mxu0 %v3399
  %3463 = vmatpush.bf16.msra.mxu0 %v3397
  %3464 = vmatpush.bf16.msra.mxu0 %v3395
  %3465 = vmatpush.bf16.msra.mxu0 %v3393
  %3466 = vmatmul.bf16.gmra.mxu0 %v3428
  %v3467 = vpop.f32.mrf.mxu0
  %v3468 = vadd.f32 0.0, %v3467
  %v3469 = vpop.f32.mrf.mxu0
  %3470 = vdwg.mxu0
  %3471 = vmatpush.bf16.msra.mxu0 %v3423
  %3472 = vmatpush.bf16.msra.mxu0 %v3421
  %3473 = vmatpush.bf16.msra.mxu0 %v3419
  %3474 = vmatpush.bf16.msra.mxu0 %v3417
  %3475 = vmatpush.bf16.msra.mxu0 %v3415
  %3476 = vmatpush.bf16.msra.mxu0 %v3413
  %3477 = vmatpush.bf16.msra.mxu0 %v3411
  %3478 = vmatpush.bf16.msra.mxu0 %v3409
  %3479 = vmatmul.bf16.gmra.mxu0 %v3429
  %v3480 = vpop.f32.mrf.mxu0
  %v3481 = vadd.f32 %v3468, %v3480
  %v3482 = vpop.f32.mrf.mxu0
  %3483 = vdwg.mxu0
  %v3484 = vrcp.pop %v3455
  %v3485 = vrcp.pop %v3481
  %v3486 = vperm.slane %v3484, 4
  %v3487 = vperm.slane %v3485, 4
  %v3488 = vmul.f32 %v3455, %v3486
  %v3489 = vmul.f32 %v3481, %v3487
  %v3490 = vadd.f32 %v2738, %v3488
  %v3491 = vadd.f32 %v2739, %v3489
  %v3496 = vrot.slane %v1901, 1
  %v3497 = vrot.slane %v1904, 1
  %v3498 = vsel %vm1690, %v3496, %v3497
  %v3499 = vrot.slane %v1927, 1
  %v3500 = vrot.slane %v1930, 1
  %v3501 = vsel %vm1690, %v3499, %v3500
  %v3507 = vsel %vm49, %v3490, 0
  %v3510 = vsel %vm49, %v3491, 0
  %3512 = vmatpush.msra.mxu0 0.0
  %3513 = vmatpush.msra.mxu0 0.0
  %3514 = vmatpush.msra.mxu0 0.0
  %3515 = vmatpush.msra.mxu0 0.0
  %3516 = vmatpush.msra.mxu0 0.0
  %3517 = vmatpush.msra.mxu0 0.0
  %3518 = vmatpush.msra.mxu0 0.0
  %3519 = vmatpush.msra.mxu0 0.0
  %3520 = vmatpush.msra.mxu0 0.0
  %3521 = vmatpush.msra.mxu0 0.0
  %3522 = vmatpush.msra.mxu0 0.0
  %3523 = vmatpush.msra.mxu0 0.0
  %3524 = vmatpush.msra.mxu0 0.0
  %3525 = vmatpush.msra.mxu0 0.0
  %3526 = vmatpush.msra.mxu0 0.0
  %3527 = vmatpush.msra.mxu0 %v3507
  %3528 = vmatmul.f32.gmra.mxu0 %v1701
  %v3529 = vpop.f32.mrf.mxu0
  %v3530 = vadd.f32 %v3498, %v3529
  %3531 = vmatmul.f32.gmra.mxu0 %v1703
  %v3532 = vpop.f32.mrf.mxu0
  %v3533 = vadd.f32 %v3497, %v3532
  %3534 = vdwg.mxu0
  %3535 = vmatpush.msra.mxu0 0.0
  %3536 = vmatpush.msra.mxu0 0.0
  %3537 = vmatpush.msra.mxu0 0.0
  %3538 = vmatpush.msra.mxu0 0.0
  %3539 = vmatpush.msra.mxu0 0.0
  %3540 = vmatpush.msra.mxu0 0.0
  %3541 = vmatpush.msra.mxu0 0.0
  %3542 = vmatpush.msra.mxu0 0.0
  %3543 = vmatpush.msra.mxu0 0.0
  %3544 = vmatpush.msra.mxu0 0.0
  %3545 = vmatpush.msra.mxu0 0.0
  %3546 = vmatpush.msra.mxu0 0.0
  %3547 = vmatpush.msra.mxu0 0.0
  %3548 = vmatpush.msra.mxu0 0.0
  %3549 = vmatpush.msra.mxu0 0.0
  %3550 = vmatpush.msra.mxu0 %v3510
  %3551 = vmatmul.f32.gmra.mxu0 %v1701
  %v3552 = vpop.f32.mrf.mxu0
  %v3553 = vadd.f32 %v3501, %v3552
  %3554 = vmatmul.f32.gmra.mxu0 %v1703
  %v3555 = vpop.f32.mrf.mxu0
  %v3556 = vadd.f32 %v3500, %v3555
  %3557 = vdwg.mxu0
  %v3558 = vxor.u32 %v3530, 2147483648
  %v3559 = vxor.u32 %v3553, 2147483648
  %v3560 = vmul.f32 %v3558, 1.442695
  %v3561 = vpow.pop %v3560
  %v3562 = vmul.f32 %v3559, 1.442695
  %v3563 = vpow.pop %v3562
  %v3564 = vadd.f32 %v3561, 1.0
  %v3565 = vadd.f32 %v3563, 1.0
  %v3566 = vrcp.pop %v3564
  %v3567 = vmul.f32 %v3564, %v3566
  %v3568 = vsub.f32 1.0, %v3567
  %v3569 = vmul.f32 %v3566, %v3568
  %v3570 = vadd.f32 %v3566, %v3569
  %vm3571 = vweird.f32 %v3564
  %vm3572 = vweird.f32 %v3566
  %vm3573 = vmor %vm3571, %vm3572
  %v3574 = vsel %vm3573, %v3566, %v3570
  %v3575 = vand.u32 2147483647, %v3564
  %vm3576 = vcmp.eq.f32.partialorder %v3575, 8.507059e+37
  %v3577 = vand.u32 %v3564, 2147483648
  %v3578 = vor.u32 1.1754944e-38, %v3577
  %v3579 = vsel %vm3576, %v3578, %v3574
  %v3580 = vmul.f32 1.0, %v3579
  %v3581 = vrcp.pop %v3565
  %v3582 = vmul.f32 %v3565, %v3581
  %v3583 = vsub.f32 1.0, %v3582
  %v3584 = vmul.f32 %v3581, %v3583
  %v3585 = vadd.f32 %v3581, %v3584
  %vm3586 = vweird.f32 %v3565
  %vm3587 = vweird.f32 %v3581
  %vm3588 = vmor %vm3586, %vm3587
  %v3589 = vsel %vm3588, %v3581, %v3585
  %v3590 = vand.u32 2147483647, %v3565
  %vm3591 = vcmp.eq.f32.partialorder %v3590, 8.507059e+37
  %v3592 = vand.u32 %v3565, 2147483648
  %v3593 = vor.u32 1.1754944e-38, %v3592
  %v3594 = vsel %vm3591, %v3593, %v3589
  %v3595 = vmul.f32 1.0, %v3594
  %v3596 = vtanh.pop %v3530
  %v3597 = vtanh.pop %v3553
  %v3598 = vxor.u32 %v3533, 2147483648
  %v3599 = vxor.u32 %v3556, 2147483648
  %v3600 = vmul.f32 %v3598, 1.442695
  %v3601 = vpow.pop %v3600
  %v3602 = vmul.f32 %v3599, 1.442695
  %v3603 = vpow.pop %v3602
  %v3604 = vadd.f32 %v3601, 1.0
  %v3605 = vadd.f32 %v3603, 1.0
  %v3606 = vrcp.pop %v3604
  %v3607 = vmul.f32 %v3604, %v3606
  %v3608 = vsub.f32 1.0, %v3607
  %v3609 = vmul.f32 %v3606, %v3608
  %v3610 = vadd.f32 %v3606, %v3609
  %vm3611 = vweird.f32 %v3604
  %vm3612 = vweird.f32 %v3606
  %vm3613 = vmor %vm3611, %vm3612
  %v3614 = vsel %vm3613, %v3606, %v3610
  %v3615 = vand.u32 2147483647, %v3604
  %vm3616 = vcmp.eq.f32.partialorder %v3615, 8.507059e+37
  %v3617 = vand.u32 %v3604, 2147483648
  %v3618 = vor.u32 1.1754944e-38, %v3617
  %v3619 = vsel %vm3616, %v3618, %v3614
  %v3620 = vmul.f32 1.0, %v3619
  %v3621 = vrcp.pop %v3605
  %v3622 = vmul.f32 %v3605, %v3621
  %v3623 = vsub.f32 1.0, %v3622
  %v3624 = vmul.f32 %v3621, %v3623
  %v3625 = vadd.f32 %v3621, %v3624
  %vm3626 = vweird.f32 %v3605
  %vm3627 = vweird.f32 %v3621
  %vm3628 = vmor %vm3626, %vm3627
  %v3629 = vsel %vm3628, %v3621, %v3625
  %v3630 = vand.u32 2147483647, %v3605
  %vm3631 = vcmp.eq.f32.partialorder %v3630, 8.507059e+37
  %v3632 = vand.u32 %v3605, 2147483648
  %v3633 = vor.u32 1.1754944e-38, %v3632
  %v3634 = vsel %vm3631, %v3633, %v3629
  %v3635 = vmul.f32 1.0, %v3634
  %v3636 = vsub.f32 1.0, %v3580
  %v3637 = vsub.f32 1.0, %v3595
  %3638 = vst [vmem:[#allocation1] ss:$2 sm:$0xff] %v1871
  %v3639 = vld.sshfl [vmem:[#allocation1] sm:$0xff pattern:$0x75316420]
  %v3640 = vld.sshfl [vmem:[#allocation1 + $0x8] sm:$0xff pattern:$0x75316420]
  %v3643 = vmul.f32 %v3636, %v3639
  %v3644 = vmul.f32 %v3637, %v3640
  %v3647 = vrot.slane %v3596, 4
  %v3648 = vrot.slane %v3597, 4
  %v3651 = vmul.f32 %v3580, %v3647
  %v3652 = vmul.f32 %v3595, %v3648
  %v3653 = vadd.f32 %v3643, %v3651
  %v3654 = vadd.f32 %v3644, %v3652
  %v3655 = vmul.f32 %v3620, %v3653
  %v3656 = vmul.f32 %v3635, %v3654
  %v3659 = vrot.slane %v3656, 4
  %v3660 = vsel %vm49, %v3655, %v3659
  %s3662 = scalar_lea.vmem %s3, 8
  %3663 = vst [vmem:[%s3662] sm:$0xff] %v3660
  %v3666 = vrot.slane %v3654, 4
  %v3667 = vsel %vm49, %v3653, %v3666
  %s3669 = scalar_lea.vmem %s4, 8
  %3670 = vst [vmem:[%s3669] sm:$0xff] %v3667
  // Predicated region
  $region14: #{self_attention_memory.1} parent=0 // pred_check
    _
  $region15: #{self_attention_memory.1} parent=0 // pred_check_branch
    %3672 = sbr.rel (0) target = $region17
  $region16: #{self_attention_memory.1} parent=0 // pred_region
    _
  $region17: #{self_attention_memory.1} parent=0 // pred_fallthru
    _
  // Predicated region
  $region18: #{self_attention_memory.1} parent=0 // pred_check
    _
  $region19: #{self_attention_memory.1} parent=0 // pred_check_branch
    %3674 = sbr.rel (0) target = $region21
  $region20: #{self_attention_memory.1} parent=0 // pred_region
    _
  $region21: #{self_attention_memory.1} parent=0 // pred_fallthru
    _
  // Predicated region
  $region22: #{self_attention_memory.1} parent=0 // pred_check
    _
  $region23: #{self_attention_memory.1} parent=0 // pred_check_branch
    %3676 = sbr.rel (0) target = $region25
  $region24: #{self_attention_memory.1} parent=0 // pred_region
    _
  $region25: #{self_attention_memory.1} parent=0 // pred_fallthru
    _
  // Predicated region
  $region26: #{self_attention_memory.1} parent=0 // pred_check
    _
  $region27: #{self_attention_memory.1} parent=0 // pred_check_branch
    %3678 = sbr.rel (0) target = $region29
  $region28: #{self_attention_memory.1} parent=0 // pred_region
    _
  $region29: #{self_attention_memory.1} parent=0 // pred_fallthru
    _

</llo_original>
